<compile_context>
chip_gen: v5e
topology: v5e:2x2
jax: 0.10.0
libtpu: 0.0.40
codegen_flags: <defaults>
</compile_context>

<pallas_src>
import functools
import math

import jax
import jax.numpy as jnp
from jax.experimental import pallas as pl
from jax.experimental.pallas import tpu as pltpu

LN_EPS = 1e-6
LN_ALPHA = 1.0   # LayerNormalization.alpha (scalar param, init = 1)
LN_BIAS = 0.0    # LayerNormalization.bias  (scalar param, init = 0)
BF16 = jnp.bfloat16
F32 = jnp.float32


def _layernorm(x):
    # tutorial-style LN: unbiased std, eps added to std (not variance); f32 math
    d = x.shape[-1]
    mean = jnp.mean(x, axis=-1, keepdims=True)
    var = jnp.sum((x - mean) ** 2, axis=-1, keepdims=True) / (d - 1)
    return LN_ALPHA * (x - mean) / (jnp.sqrt(var) + LN_EPS) + LN_BIAS


# ---------------------------------------------------------------------------
# Fused DecoderBlock kernel: one grid step per batch element
# ---------------------------------------------------------------------------
def _decoder_block_kernel(
    x_ref, enc_ref, tgt_mask_ref, src_mask_ref,
    s_wq, s_bq, s_wk, s_bk, s_wv, s_bv, s_wo, s_bo,
    c_wq, c_bq, c_wk, c_bk, c_wv, c_bv, c_wo, c_bo,
    f_w1, f_b1, f_w2, f_b2,
    out_ref, *, h, d_k):
    x = x_ref[0].astype(F32)                    # (S_tgt, D) residual, VMEM-resident
    enc = enc_ref[0].astype(F32)                # (S_src, D)
    # additive mask bias, computed once (hoisted out of all head math)
    tgt_bias = jnp.where(tgt_mask_ref[0] == 0, -1e9, 0.0).astype(F32)   # (S_tgt, S_tgt)
    src_bias = jnp.where(src_mask_ref[0] == 0, -1e9, 0.0).astype(F32)   # (S_tgt, S_src)
    scale = 1.0 / math.sqrt(d_k)

    def mha(q_in, kv_in, bias, wq, bq, wk, bk, wv, bv, wo, bo):
        # q_in: (S_q, D) f32, kv_in: (S_kv, D) f32, bias: (S_q, S_kv) f32
        # weights pre-split per head on host: wq/wk/wv (h, D, d_k) bf16,
        # biases (h, 1, d_k) f32, wo (h, d_k, D) bf16, bo (1, D) f32.
        qb = jnp.broadcast_to(q_in.astype(BF16)[None], (h,) + q_in.shape)
        kb = jnp.broadcast_to(kv_in.astype(BF16)[None], (h,) + kv_in.shape)
        q = jnp.einsum("hsd,hdk->hsk", qb, wq[...], preferred_element_type=F32) + bq[...]
        k = jnp.einsum("hsd,hdk->hsk", kb, wk[...], preferred_element_type=F32) + bk[...]
        v = jnp.einsum("hsd,hdk->hsk", kb, wv[...], preferred_element_type=F32) + bv[...]
        # scores + softmax (stats in f32)
        s = jnp.einsum("hqd,hkd->hqk", q.astype(BF16), k.astype(BF16),
                       preferred_element_type=F32) * scale + bias[None]
        s = s - jnp.max(s, axis=-1, keepdims=True)
        e = jnp.exp(s)
        p = e * pl.reciprocal(jnp.sum(e, axis=-1, keepdims=True), approx=True)
        ctx = jnp.einsum("hqk,hkd->hqd", p.astype(BF16), v.astype(BF16),
                         preferred_element_type=F32)
        # output projection folded per head, then summed (== concat @ W_o), no concat
        o = jnp.einsum("hqd,hdo->hqo", ctx.astype(BF16), wo[...],
                       preferred_element_type=F32)
        return jnp.sum(o, axis=0) + bo[...]

    # sublayer 1: residual + self-attention (q = k = v = LN(x))
    xn = _layernorm(x)
    x = x + mha(xn, xn, tgt_bias, s_wq, s_bq, s_wk, s_bk, s_wv, s_bv, s_wo, s_bo)

    # sublayer 2: residual + cross-attention (k = v = raw encoder output)
    xn = _layernorm(x)
    x = x + mha(xn, enc, src_bias, c_wq, c_bq, c_wk, c_bk, c_wv, c_bv, c_wo, c_bo)

    # sublayer 3: residual + FFN (Linear -> ReLU -> Linear), dropout = identity
    xn = _layernorm(x)
    h1 = jnp.dot(xn.astype(BF16), f_w1[...], preferred_element_type=F32) + f_b1[...]
    h1 = jnp.maximum(h1, 0.0)
    x = x + jnp.dot(h1.astype(BF16), f_w2[...], preferred_element_type=F32) + f_b2[...]

    out_ref[0] = x.astype(out_ref.dtype)


# ---------------------------------------------------------------------------
# Host-side parameter preparation: per-head split + bf16 weights
# ---------------------------------------------------------------------------
def _prepare_kernel_params(params, h):
    def attn(p):
        D = p["wq"].shape[0]
        d_k = D // h

        def w_qkv(w):   # (D, h*d_k) -> (h, D, d_k), bf16
            return jnp.transpose(w.reshape(D, h, d_k), (1, 0, 2)).astype(BF16)

        def b_qkv(b):   # (1, h*d_k) -> (h, 1, d_k), f32
            return jnp.transpose(b.reshape(1, h, d_k), (1, 0, 2)).astype(F32)

        return dict(
            wq=w_qkv(p["wq"]), bq=b_qkv(p["bq"]),
            wk=w_qkv(p["wk"]), bk=b_qkv(p["bk"]),
            wv=w_qkv(p["wv"]), bv=b_qkv(p["bv"]),
            wo=p["wo"].reshape(h, d_k, D).astype(BF16),   # rows grouped per head
            bo=p["bo"].astype(F32),
        )

    f = params["ffn"]
    return dict(
        self_attn=attn(params["self_attn"]),
        cross_attn=attn(params["cross_attn"]),
        ffn=dict(w1=f["w1"].astype(BF16), b1=f["b1"].astype(F32),
                 w2=f["w2"].astype(BF16), b2=f["b2"].astype(F32)),
    )


# ---------------------------------------------------------------------------
# DecoderBlock forward (single fused pallas_call)
# ---------------------------------------------------------------------------
def decoder_block(x, encoder_output, src_mask, tgt_mask, params, *, h):
    B, S_tgt, D = x.shape
    S_src = encoder_output.shape[1]
    d_k = D // h
    kp = _prepare_kernel_params(params, h)
    sa, ca, ff = kp["self_attn"], kp["cross_attn"], kp["ffn"]

    kernel = functools.partial(_decoder_block_kernel, h=h, d_k=d_k)

    def per_b(shape):
        return pl.BlockSpec(shape, lambda b: (b, 0, 0))

    def const(shape):
        n = len(shape)
        return pl.BlockSpec(shape, lambda b, _n=n: (0,) * _n)

    weights = [sa["wq"], sa["bq"], sa["wk"], sa["bk"], sa["wv"], sa["bv"], sa["wo"], sa["bo"],
               ca["wq"], ca["bq"], ca["wk"], ca["bk"], ca["wv"], ca["bv"], ca["wo"], ca["bo"],
               ff["w1"], ff["b1"], ff["w2"], ff["b2"]]

    in_specs = ([per_b((1, S_tgt, D)),            # x
                 per_b((1, S_src, D)),            # encoder output
                 per_b((1, S_tgt, S_tgt)),        # tgt mask
                 per_b((1, S_tgt, S_src))]        # src mask
                + [const(w.shape) for w in weights])

    return pl.pallas_call(
        kernel,
        out_shape=jax.ShapeDtypeStruct((B, S_tgt, D), x.dtype),
        grid=(B,),
        in_specs=in_specs,
        out_specs=per_b((1, S_tgt, D)),
        compiler_params=pltpu.CompilerParams(dimension_semantics=("parallel",)),
    )(x, encoder_output, tgt_mask, src_mask, *weights)


# ---------------------------------------------------------------------------
# Pure-JAX reference (mirrors the kernel's bf16-matmul / f32-stats math)
# ---------------------------------------------------------------------------
def _mm(a, w):
    return jnp.einsum("...d,de->...e", a.astype(BF16), w.astype(BF16),
                      preferred_element_type=F32)


def _mha_ref(xq, kv, mask, p, h):
    B, Sq, D = xq.shape
    d_k = D // h
    q = _mm(xq, p["wq"]) + p["bq"]
    k = _mm(kv, p["wk"]) + p["bk"]
    v = _mm(kv, p["wv"]) + p["bv"]

    def split(t):
        return t.reshape(B, -1, h, d_k).transpose(0, 2, 1, 3)

    q, k, v = split(q), split(k), split(v)
    s = jnp.einsum("bhqd,bhkd->bhqk", q.astype(BF16), k.astype(BF16),
                   preferred_element_type=F32) / math.sqrt(d_k)
    s = jnp.where(mask[:, None, :, :] == 0, -1e9, s)
    p_attn = jax.nn.softmax(s, axis=-1)
    ctx = jnp.einsum("bhqk,bhkd->bhqd", p_attn.astype(BF16), v.astype(BF16),
                     preferred_element_type=F32)
    ctx = ctx.transpose(0, 2, 1, 3).reshape(B, Sq, D)
    return _mm(ctx, p["wo"]) + p["bo"]


def decoder_block_ref(x, enc, src_mask, tgt_mask, params, *, h):
    x = x + _mha_ref(_layernorm(x), _layernorm(x), tgt_mask, params["self_attn"], h)
    x = x + _mha_ref(_layernorm(x), enc, src_mask, params["cross_attn"], h)
    xn = _layernorm(x)
    f = params["ffn"]
    hid = jnp.maximum(_mm(xn, f["w1"]) + f["b1"], 0.0)
    return x + _mm(hid, f["w2"]) + f["b2"]


# ---------------------------------------------------------------------------
# Deterministic parameter init (master params in f32, PyTorch-Linear-like)
# ---------------------------------------------------------------------------
def init_params(key, d_model, d_ff):
    ks = jax.random.split(key, 20)

    def lin(kw, kb, din, dout):
        # stored as (in, out) so kernels do x @ W (PyTorch Linear uses x @ W.T)
        w = jax.random.normal(kw, (din, dout), F32) / math.sqrt(din)
        b = 0.1 * jax.random.normal(kb, (1, dout), F32)
        return w, b

    def mha(keys):
        wq, bq = lin(keys[0], keys[1], d_model, d_model)
        wk, bk = lin(keys[2], keys[3], d_model, d_model)
        wv, bv = lin(keys[4], keys[5], d_model, d_model)
        wo, bo = lin(keys[6], keys[7], d_model, d_model)
        return dict(wq=wq, bq=bq, wk=wk, bk=bk, wv=wv, bv=bv, wo=wo, bo=bo)

    w1, b1 = lin(ks[16], ks[17], d_model, d_ff)
    w2, b2 = lin(ks[18], ks[19], d_ff, d_model)
    return dict(self_attn=mha(ks[0:8]), cross_attn=mha(ks[8:16]),
                ffn=dict(w1=w1, b1=b1, w2=w2, b2=b2))


if __name__ == "__main__":
    # lane-dense small config: d_model / d_ff multiples of 128, seq multiple of 8
    B, S_TGT, S_SRC = 2, 8, 8
    D_MODEL, H, D_FF = 128, 4, 256

    key = jax.random.PRNGKey(0)
    kx, ke, kp = jax.random.split(key, 3)
    x = jax.random.normal(kx, (B, S_TGT, D_MODEL), F32)
    enc = jax.random.normal(ke, (B, S_SRC, D_MODEL), F32)
    tgt_mask = jnp.tril(jnp.ones((S_TGT, S_TGT), jnp.int32))[None].repeat(B, 0)  # causal
    src_mask = jnp.ones((B, S_TGT, S_SRC), jnp.int32)                            # no masking

    params = init_params(kp, D_MODEL, D_FF)

    out = decoder_block(x, enc, src_mask, tgt_mask, params, h=H)
    out = jax.block_until_ready(out)

    ref = decoder_block_ref(x, enc, src_mask, tgt_mask, params, h=H)
    assert out.shape == (B, S_TGT, D_MODEL)
    # tolerance covers bf16 matmuls + approx EUP reciprocal in the kernel softmax
    assert jnp.allclose(out, ref, atol=3e-2, rtol=3e-2), "mismatch vs pure-JAX reference"

    print("KERNEL_OK")
</pallas_src>

<mosaic_0001>
module attributes {stable_mosaic.version = 11 : i64} {
  func.func @_decoder_block_kernel(%arg0: i32, %arg1: memref<1x8x128xf32, #tpu.memory_space<vmem>>, %arg2: memref<1x8x128xf32, #tpu.memory_space<vmem>>, %arg3: memref<1x8x8xi32, #tpu.memory_space<vmem>>, %arg4: memref<1x8x8xi32, #tpu.memory_space<vmem>>, %arg5: memref<4x128x32xbf16, #tpu.memory_space<vmem>>, %arg6: memref<4x1x32xf32, #tpu.memory_space<vmem>>, %arg7: memref<4x128x32xbf16, #tpu.memory_space<vmem>>, %arg8: memref<4x1x32xf32, #tpu.memory_space<vmem>>, %arg9: memref<4x128x32xbf16, #tpu.memory_space<vmem>>, %arg10: memref<4x1x32xf32, #tpu.memory_space<vmem>>, %arg11: memref<4x32x128xbf16, #tpu.memory_space<vmem>>, %arg12: memref<1x128xf32, #tpu.memory_space<vmem>>, %arg13: memref<4x128x32xbf16, #tpu.memory_space<vmem>>, %arg14: memref<4x1x32xf32, #tpu.memory_space<vmem>>, %arg15: memref<4x128x32xbf16, #tpu.memory_space<vmem>>, %arg16: memref<4x1x32xf32, #tpu.memory_space<vmem>>, %arg17: memref<4x128x32xbf16, #tpu.memory_space<vmem>>, %arg18: memref<4x1x32xf32, #tpu.memory_space<vmem>>, %arg19: memref<4x32x128xbf16, #tpu.memory_space<vmem>>, %arg20: memref<1x128xf32, #tpu.memory_space<vmem>>, %arg21: memref<128x256xbf16, #tpu.memory_space<vmem>>, %arg22: memref<1x256xf32, #tpu.memory_space<vmem>>, %arg23: memref<256x128xbf16, #tpu.memory_space<vmem>>, %arg24: memref<1x128xf32, #tpu.memory_space<vmem>>, %arg25: memref<1x8x128xf32, #tpu.memory_space<vmem>>) attributes {dimension_semantics = [#tpu.dimension_semantics<parallel>], iteration_bounds = array<i64: 2>, scalar_prefetch = 0 : i64, scratch_operands = 0 : i64, tpu.core_type = #tpu.core_type<tc>, window_params = [{transform_indices = @transform_0, window_bounds = array<i64: 1, 8, 128>}, {transform_indices = @transform_1, window_bounds = array<i64: 1, 8, 128>}, {transform_indices = @transform_2, window_bounds = array<i64: 1, 8, 8>}, {transform_indices = @transform_3, window_bounds = array<i64: 1, 8, 8>}, {pipeline_mode = #tpu.pipeline_mode<synchronous>, transform_indices = @transform_4, window_bounds = array<i64: 4, 128, 32>}, {pipeline_mode = #tpu.pipeline_mode<synchronous>, transform_indices = @transform_5, window_bounds = array<i64: 4, 1, 32>}, {pipeline_mode = #tpu.pipeline_mode<synchronous>, transform_indices = @transform_6, window_bounds = array<i64: 4, 128, 32>}, {pipeline_mode = #tpu.pipeline_mode<synchronous>, transform_indices = @transform_7, window_bounds = array<i64: 4, 1, 32>}, {pipeline_mode = #tpu.pipeline_mode<synchronous>, transform_indices = @transform_8, window_bounds = array<i64: 4, 128, 32>}, {pipeline_mode = #tpu.pipeline_mode<synchronous>, transform_indices = @transform_9, window_bounds = array<i64: 4, 1, 32>}, {pipeline_mode = #tpu.pipeline_mode<synchronous>, transform_indices = @transform_10, window_bounds = array<i64: 4, 32, 128>}, {pipeline_mode = #tpu.pipeline_mode<synchronous>, transform_indices = @transform_11, window_bounds = array<i64: 1, 128>}, {pipeline_mode = #tpu.pipeline_mode<synchronous>, transform_indices = @transform_12, window_bounds = array<i64: 4, 128, 32>}, {pipeline_mode = #tpu.pipeline_mode<synchronous>, transform_indices = @transform_13, window_bounds = array<i64: 4, 1, 32>}, {pipeline_mode = #tpu.pipeline_mode<synchronous>, transform_indices = @transform_14, window_bounds = array<i64: 4, 128, 32>}, {pipeline_mode = #tpu.pipeline_mode<synchronous>, transform_indices = @transform_15, window_bounds = array<i64: 4, 1, 32>}, {pipeline_mode = #tpu.pipeline_mode<synchronous>, transform_indices = @transform_16, window_bounds = array<i64: 4, 128, 32>}, {pipeline_mode = #tpu.pipeline_mode<synchronous>, transform_indices = @transform_17, window_bounds = array<i64: 4, 1, 32>}, {pipeline_mode = #tpu.pipeline_mode<synchronous>, transform_indices = @transform_18, window_bounds = array<i64: 4, 32, 128>}, {pipeline_mode = #tpu.pipeline_mode<synchronous>, transform_indices = @transform_19, window_bounds = array<i64: 1, 128>}, {pipeline_mode = #tpu.pipeline_mode<synchronous>, transform_indices = @transform_20, window_bounds = array<i64: 128, 256>}, {pipeline_mode = #tpu.pipeline_mode<synchronous>, transform_indices = @transform_21, window_bounds = array<i64: 1, 256>}, {pipeline_mode = #tpu.pipeline_mode<synchronous>, transform_indices = @transform_22, window_bounds = array<i64: 256, 128>}, {pipeline_mode = #tpu.pipeline_mode<synchronous>, transform_indices = @transform_23, window_bounds = array<i64: 1, 128>}, {transform_indices = @transform_24, window_bounds = array<i64: 1, 8, 128>}]} {
    %c0 = arith.constant 0 : index
    %c0_0 = arith.constant 0 : index
    %c0_1 = arith.constant 0 : index
    %0 = vector.load %arg1[%c0, %c0_0, %c0_1] : memref<1x8x128xf32, #tpu.memory_space<vmem>>, vector<1x8x128xf32>
    %1 = vector.shape_cast %0 : vector<1x8x128xf32> to vector<8x128xf32>
    %c0_2 = arith.constant 0 : index
    %c0_3 = arith.constant 0 : index
    %c0_4 = arith.constant 0 : index
    %2 = vector.load %arg2[%c0_2, %c0_3, %c0_4] : memref<1x8x128xf32, #tpu.memory_space<vmem>>, vector<1x8x128xf32>
    %3 = vector.shape_cast %2 : vector<1x8x128xf32> to vector<8x128xf32>
    %c0_5 = arith.constant 0 : index
    %c0_6 = arith.constant 0 : index
    %c0_7 = arith.constant 0 : index
    %4 = vector.load %arg3[%c0_5, %c0_6, %c0_7] : memref<1x8x8xi32, #tpu.memory_space<vmem>>, vector<1x8x8xi32>
    %5 = vector.shape_cast %4 : vector<1x8x8xi32> to vector<8x8xi32>
    %c0_i32 = arith.constant 0 : i32
    %6 = vector.broadcast %c0_i32 : i32 to vector<8x8xi32>
    %7 = arith.cmpi eq, %5, %6 : vector<8x8xi32>
    %cst = arith.constant -1.000000e+09 : f32
    %cst_8 = arith.constant 0.000000e+00 : f32
    %8 = vector.broadcast %cst : f32 to vector<8x8xf32>
    %9 = vector.broadcast %cst_8 : f32 to vector<8x8xf32>
    %10 = arith.select %7, %8, %9 : vector<8x8xi1>, vector<8x8xf32>
    %c0_9 = arith.constant 0 : index
    %c0_10 = arith.constant 0 : index
    %c0_11 = arith.constant 0 : index
    %11 = vector.load %arg4[%c0_9, %c0_10, %c0_11] : memref<1x8x8xi32, #tpu.memory_space<vmem>>, vector<1x8x8xi32>
    %12 = vector.shape_cast %11 : vector<1x8x8xi32> to vector<8x8xi32>
    %c0_i32_12 = arith.constant 0 : i32
    %13 = vector.broadcast %c0_i32_12 : i32 to vector<8x8xi32>
    %14 = arith.cmpi eq, %12, %13 : vector<8x8xi32>
    %cst_13 = arith.constant -1.000000e+09 : f32
    %cst_14 = arith.constant 0.000000e+00 : f32
    %15 = vector.broadcast %cst_13 : f32 to vector<8x8xf32>
    %16 = vector.broadcast %cst_14 : f32 to vector<8x8xf32>
    %17 = arith.select %14, %15, %16 : vector<8x8xi1>, vector<8x8xf32>
    %cst_15 = arith.constant dense<0.000000e+00> : vector<8xf32>
    %18 = vector.multi_reduction <add>, %1, %cst_15 [1] : vector<8x128xf32> to vector<8xf32>
    %19 = vector.shape_cast %18 : vector<8xf32> to vector<8x1xf32>
    %cst_16 = arith.constant 1.280000e+02 : f32
    %20 = vector.broadcast %cst_16 : f32 to vector<8x1xf32>
    %21 = arith.divf %19, %20 : vector<8x1xf32>
    %22 = vector.broadcast %21 : vector<8x1xf32> to vector<8x128xf32>
    %23 = arith.subf %1, %22 : vector<8x128xf32>
    %24 = arith.mulf %23, %23 : vector<8x128xf32>
    %cst_17 = arith.constant dense<0.000000e+00> : vector<8xf32>
    %25 = vector.multi_reduction <add>, %24, %cst_17 [1] : vector<8x128xf32> to vector<8xf32>
    %26 = vector.shape_cast %25 : vector<8xf32> to vector<8x1xf32>
    %cst_18 = arith.constant 1.270000e+02 : f32
    %27 = vector.broadcast %cst_18 : f32 to vector<8x1xf32>
    %28 = arith.divf %26, %27 : vector<8x1xf32>
    %29 = vector.broadcast %21 : vector<8x1xf32> to vector<8x128xf32>
    %30 = arith.subf %1, %29 : vector<8x128xf32>
    %cst_19 = arith.constant 1.000000e+00 : f32
    %31 = vector.broadcast %cst_19 : f32 to vector<8x128xf32>
    %32 = arith.mulf %31, %30 : vector<8x128xf32>
    %33 = math.sqrt %28 : vector<8x1xf32>
    %cst_20 = arith.constant 9.99999997E-7 : f32
    %34 = vector.broadcast %cst_20 : f32 to vector<8x1xf32>
    %35 = arith.addf %33, %34 : vector<8x1xf32>
    %36 = vector.broadcast %35 : vector<8x1xf32> to vector<8x128xf32>
    %37 = arith.divf %32, %36 : vector<8x128xf32>
    %cst_21 = arith.constant 0.000000e+00 : f32
    %38 = vector.broadcast %cst_21 : f32 to vector<8x128xf32>
    %39 = arith.addf %37, %38 : vector<8x128xf32>
    %40 = arith.truncf %39 : vector<8x128xf32> to vector<8x128xbf16>
    %41 = vector.shape_cast %40 : vector<8x128xbf16> to vector<1x8x128xbf16>
    %42 = vector.shape_cast %41 : vector<1x8x128xbf16> to vector<1x8x128xbf16>
    %43 = vector.broadcast %42 : vector<1x8x128xbf16> to vector<4x8x128xbf16>
    %44 = arith.truncf %39 : vector<8x128xf32> to vector<8x128xbf16>
    %45 = vector.shape_cast %44 : vector<8x128xbf16> to vector<1x8x128xbf16>
    %46 = vector.shape_cast %45 : vector<1x8x128xbf16> to vector<1x8x128xbf16>
    %47 = vector.broadcast %46 : vector<1x8x128xbf16> to vector<4x8x128xbf16>
    %c0_22 = arith.constant 0 : index
    %c0_23 = arith.constant 0 : index
    %c0_24 = arith.constant 0 : index
    %48 = vector.load %arg5[%c0_22, %c0_23, %c0_24] : memref<4x128x32xbf16, #tpu.memory_space<vmem>>, vector<4x128x32xbf16>
    "tpu.trace_start"() <{level = 10 : i32, message = "hsd,hdk->hsk"}> : () -> ()
    %cst_25 = arith.constant dense<0.000000e+00> : vector<4x8x32xf32>
    %49 = tpu.matmul %43, %48, %cst_25 {dimension_numbers = #tpu.dot_dimension_numbers<[2], [1], [1], [2], [0, 0, 0, 1, 1, 2], [0], [0]>} : vector<4x8x128xbf16>, vector<4x128x32xbf16>, vector<4x8x32xf32> -> vector<4x8x32xf32>
    "tpu.trace_stop"() : () -> ()
    %c0_26 = arith.constant 0 : index
    %c0_27 = arith.constant 0 : index
    %c0_28 = arith.constant 0 : index
    %50 = vector.load %arg6[%c0_26, %c0_27, %c0_28] : memref<4x1x32xf32, #tpu.memory_space<vmem>>, vector<4x1x32xf32>
    %51 = vector.broadcast %50 : vector<4x1x32xf32> to vector<4x8x32xf32>
    %52 = arith.addf %49, %51 : vector<4x8x32xf32>
    %c0_29 = arith.constant 0 : index
    %c0_30 = arith.constant 0 : index
    %c0_31 = arith.constant 0 : index
    %53 = vector.load %arg7[%c0_29, %c0_30, %c0_31] : memref<4x128x32xbf16, #tpu.memory_space<vmem>>, vector<4x128x32xbf16>
    "tpu.trace_start"() <{level = 10 : i32, message = "hsd,hdk->hsk"}> : () -> ()
    %cst_32 = arith.constant dense<0.000000e+00> : vector<4x8x32xf32>
    %54 = tpu.matmul %47, %53, %cst_32 {dimension_numbers = #tpu.dot_dimension_numbers<[2], [1], [1], [2], [0, 0, 0, 1, 1, 2], [0], [0]>} : vector<4x8x128xbf16>, vector<4x128x32xbf16>, vector<4x8x32xf32> -> vector<4x8x32xf32>
    "tpu.trace_stop"() : () -> ()
    %c0_33 = arith.constant 0 : index
    %c0_34 = arith.constant 0 : index
    %c0_35 = arith.constant 0 : index
    %55 = vector.load %arg8[%c0_33, %c0_34, %c0_35] : memref<4x1x32xf32, #tpu.memory_space<vmem>>, vector<4x1x32xf32>
    %56 = vector.broadcast %55 : vector<4x1x32xf32> to vector<4x8x32xf32>
    %57 = arith.addf %54, %56 : vector<4x8x32xf32>
    %c0_36 = arith.constant 0 : index
    %c0_37 = arith.constant 0 : index
    %c0_38 = arith.constant 0 : index
    %58 = vector.load %arg9[%c0_36, %c0_37, %c0_38] : memref<4x128x32xbf16, #tpu.memory_space<vmem>>, vector<4x128x32xbf16>
    "tpu.trace_start"() <{level = 10 : i32, message = "hsd,hdk->hsk"}> : () -> ()
    %cst_39 = arith.constant dense<0.000000e+00> : vector<4x8x32xf32>
    %59 = tpu.matmul %47, %58, %cst_39 {dimension_numbers = #tpu.dot_dimension_numbers<[2], [1], [1], [2], [0, 0, 0, 1, 1, 2], [0], [0]>} : vector<4x8x128xbf16>, vector<4x128x32xbf16>, vector<4x8x32xf32> -> vector<4x8x32xf32>
    "tpu.trace_stop"() : () -> ()
    %c0_40 = arith.constant 0 : index
    %c0_41 = arith.constant 0 : index
    %c0_42 = arith.constant 0 : index
    %60 = vector.load %arg10[%c0_40, %c0_41, %c0_42] : memref<4x1x32xf32, #tpu.memory_space<vmem>>, vector<4x1x32xf32>
    %61 = vector.broadcast %60 : vector<4x1x32xf32> to vector<4x8x32xf32>
    %62 = arith.addf %59, %61 : vector<4x8x32xf32>
    %63 = arith.truncf %52 : vector<4x8x32xf32> to vector<4x8x32xbf16>
    %64 = arith.truncf %57 : vector<4x8x32xf32> to vector<4x8x32xbf16>
    "tpu.trace_start"() <{level = 10 : i32, message = "hqd,hkd->hqk"}> : () -> ()
    %cst_43 = arith.constant dense<0.000000e+00> : vector<4x8x8xf32>
    %65 = tpu.matmul %63, %64, %cst_43 {dimension_numbers = #tpu.dot_dimension_numbers<[2], [2], [1], [1], [0, 0, 0, 1, 1, 1], [0], [0]>} : vector<4x8x32xbf16>, vector<4x8x32xbf16>, vector<4x8x8xf32> -> vector<4x8x8xf32>
    "tpu.trace_stop"() : () -> ()
    %cst_44 = arith.constant 0.176776692 : f32
    %66 = vector.broadcast %cst_44 : f32 to vector<4x8x8xf32>
    %67 = arith.mulf %65, %66 : vector<4x8x8xf32>
    %68 = vector.shape_cast %10 : vector<8x8xf32> to vector<1x8x8xf32>
    %69 = vector.broadcast %68 : vector<1x8x8xf32> to vector<4x8x8xf32>
    %70 = arith.addf %67, %69 : vector<4x8x8xf32>
    %cst_45 = arith.constant dense<0xFF800000> : vector<4x8xf32>
    %71 = vector.multi_reduction <maximumf>, %70, %cst_45 [2] : vector<4x8x8xf32> to vector<4x8xf32>
    %72 = vector.shape_cast %71 : vector<4x8xf32> to vector<4x8x1xf32>
    %73 = vector.broadcast %72 : vector<4x8x1xf32> to vector<4x8x8xf32>
    %74 = arith.subf %70, %73 : vector<4x8x8xf32>
    %75 = math.exp %74 : vector<4x8x8xf32>
    %cst_46 = arith.constant dense<0.000000e+00> : vector<4x8xf32>
    %76 = vector.multi_reduction <add>, %75, %cst_46 [2] : vector<4x8x8xf32> to vector<4x8xf32>
    %77 = vector.shape_cast %76 : vector<4x8xf32> to vector<4x8x1xf32>
    %78 = tpu.reciprocal %77 {approx = true} : vector<4x8x1xf32> -> vector<4x8x1xf32>
    %79 = vector.broadcast %78 : vector<4x8x1xf32> to vector<4x8x8xf32>
    %80 = arith.mulf %75, %79 : vector<4x8x8xf32>
    %81 = arith.truncf %80 : vector<4x8x8xf32> to vector<4x8x8xbf16>
    %82 = arith.truncf %62 : vector<4x8x32xf32> to vector<4x8x32xbf16>
    "tpu.trace_start"() <{level = 10 : i32, message = "hqk,hkd->hqd"}> : () -> ()
    %cst_47 = arith.constant dense<0.000000e+00> : vector<4x8x32xf32>
    %83 = tpu.matmul %81, %82, %cst_47 {dimension_numbers = #tpu.dot_dimension_numbers<[2], [1], [1], [2], [0, 0, 0, 1, 1, 2], [0], [0]>} : vector<4x8x8xbf16>, vector<4x8x32xbf16>, vector<4x8x32xf32> -> vector<4x8x32xf32>
    "tpu.trace_stop"() : () -> ()
    %84 = arith.truncf %83 : vector<4x8x32xf32> to vector<4x8x32xbf16>
    %c0_48 = arith.constant 0 : index
    %c0_49 = arith.constant 0 : index
    %c0_50 = arith.constant 0 : index
    %85 = vector.load %arg11[%c0_48, %c0_49, %c0_50] : memref<4x32x128xbf16, #tpu.memory_space<vmem>>, vector<4x32x128xbf16>
    "tpu.trace_start"() <{level = 10 : i32, message = "hqd,hdo->hqo"}> : () -> ()
    %cst_51 = arith.constant dense<0.000000e+00> : vector<4x8x128xf32>
    %86 = tpu.matmul %84, %85, %cst_51 {dimension_numbers = #tpu.dot_dimension_numbers<[2], [1], [1], [2], [0, 0, 0, 1, 1, 2], [0], [0]>} : vector<4x8x32xbf16>, vector<4x32x128xbf16>, vector<4x8x128xf32> -> vector<4x8x128xf32>
    "tpu.trace_stop"() : () -> ()
    %cst_52 = arith.constant dense<0.000000e+00> : vector<8x128xf32>
    %87 = vector.multi_reduction <add>, %86, %cst_52 [0] : vector<4x8x128xf32> to vector<8x128xf32>
    %c0_53 = arith.constant 0 : index
    %c0_54 = arith.constant 0 : index
    %88 = vector.load %arg12[%c0_53, %c0_54] : memref<1x128xf32, #tpu.memory_space<vmem>>, vector<1x128xf32>
    %89 = vector.broadcast %88 : vector<1x128xf32> to vector<8x128xf32>
    %90 = arith.addf %87, %89 : vector<8x128xf32>
    %91 = arith.addf %1, %90 : vector<8x128xf32>
    %cst_55 = arith.constant dense<0.000000e+00> : vector<8xf32>
    %92 = vector.multi_reduction <add>, %91, %cst_55 [1] : vector<8x128xf32> to vector<8xf32>
    %93 = vector.shape_cast %92 : vector<8xf32> to vector<8x1xf32>
    %cst_56 = arith.constant 1.280000e+02 : f32
    %94 = vector.broadcast %cst_56 : f32 to vector<8x1xf32>
    %95 = arith.divf %93, %94 : vector<8x1xf32>
    %96 = vector.broadcast %95 : vector<8x1xf32> to vector<8x128xf32>
    %97 = arith.subf %91, %96 : vector<8x128xf32>
    %98 = arith.mulf %97, %97 : vector<8x128xf32>
    %cst_57 = arith.constant dense<0.000000e+00> : vector<8xf32>
    %99 = vector.multi_reduction <add>, %98, %cst_57 [1] : vector<8x128xf32> to vector<8xf32>
    %100 = vector.shape_cast %99 : vector<8xf32> to vector<8x1xf32>
    %cst_58 = arith.constant 1.270000e+02 : f32
    %101 = vector.broadcast %cst_58 : f32 to vector<8x1xf32>
    %102 = arith.divf %100, %101 : vector<8x1xf32>
    %103 = vector.broadcast %95 : vector<8x1xf32> to vector<8x128xf32>
    %104 = arith.subf %91, %103 : vector<8x128xf32>
    %cst_59 = arith.constant 1.000000e+00 : f32
    %105 = vector.broadcast %cst_59 : f32 to vector<8x128xf32>
    %106 = arith.mulf %105, %104 : vector<8x128xf32>
    %107 = math.sqrt %102 : vector<8x1xf32>
    %cst_60 = arith.constant 9.99999997E-7 : f32
    %108 = vector.broadcast %cst_60 : f32 to vector<8x1xf32>
    %109 = arith.addf %107, %108 : vector<8x1xf32>
    %110 = vector.broadcast %109 : vector<8x1xf32> to vector<8x128xf32>
    %111 = arith.divf %106, %110 : vector<8x128xf32>
    %cst_61 = arith.constant 0.000000e+00 : f32
    %112 = vector.broadcast %cst_61 : f32 to vector<8x128xf32>
    %113 = arith.addf %111, %112 : vector<8x128xf32>
    %114 = arith.truncf %113 : vector<8x128xf32> to vector<8x128xbf16>
    %115 = vector.shape_cast %114 : vector<8x128xbf16> to vector<1x8x128xbf16>
    %116 = vector.shape_cast %115 : vector<1x8x128xbf16> to vector<1x8x128xbf16>
    %117 = vector.broadcast %116 : vector<1x8x128xbf16> to vector<4x8x128xbf16>
    %118 = arith.truncf %3 : vector<8x128xf32> to vector<8x128xbf16>
    %119 = vector.shape_cast %118 : vector<8x128xbf16> to vector<1x8x128xbf16>
    %120 = vector.shape_cast %119 : vector<1x8x128xbf16> to vector<1x8x128xbf16>
    %121 = vector.broadcast %120 : vector<1x8x128xbf16> to vector<4x8x128xbf16>
    %c0_62 = arith.constant 0 : index
    %c0_63 = arith.constant 0 : index
    %c0_64 = arith.constant 0 : index
    %122 = vector.load %arg13[%c0_62, %c0_63, %c0_64] : memref<4x128x32xbf16, #tpu.memory_space<vmem>>, vector<4x128x32xbf16>
    "tpu.trace_start"() <{level = 10 : i32, message = "hsd,hdk->hsk"}> : () -> ()
    %cst_65 = arith.constant dense<0.000000e+00> : vector<4x8x32xf32>
    %123 = tpu.matmul %117, %122, %cst_65 {dimension_numbers = #tpu.dot_dimension_numbers<[2], [1], [1], [2], [0, 0, 0, 1, 1, 2], [0], [0]>} : vector<4x8x128xbf16>, vector<4x128x32xbf16>, vector<4x8x32xf32> -> vector<4x8x32xf32>
    "tpu.trace_stop"() : () -> ()
    %c0_66 = arith.constant 0 : index
    %c0_67 = arith.constant 0 : index
    %c0_68 = arith.constant 0 : index
    %124 = vector.load %arg14[%c0_66, %c0_67, %c0_68] : memref<4x1x32xf32, #tpu.memory_space<vmem>>, vector<4x1x32xf32>
    %125 = vector.broadcast %124 : vector<4x1x32xf32> to vector<4x8x32xf32>
    %126 = arith.addf %123, %125 : vector<4x8x32xf32>
    %c0_69 = arith.constant 0 : index
    %c0_70 = arith.constant 0 : index
    %c0_71 = arith.constant 0 : index
    %127 = vector.load %arg15[%c0_69, %c0_70, %c0_71] : memref<4x128x32xbf16, #tpu.memory_space<vmem>>, vector<4x128x32xbf16>
    "tpu.trace_start"() <{level = 10 : i32, message = "hsd,hdk->hsk"}> : () -> ()
    %cst_72 = arith.constant dense<0.000000e+00> : vector<4x8x32xf32>
    %128 = tpu.matmul %121, %127, %cst_72 {dimension_numbers = #tpu.dot_dimension_numbers<[2], [1], [1], [2], [0, 0, 0, 1, 1, 2], [0], [0]>} : vector<4x8x128xbf16>, vector<4x128x32xbf16>, vector<4x8x32xf32> -> vector<4x8x32xf32>
    "tpu.trace_stop"() : () -> ()
    %c0_73 = arith.constant 0 : index
    %c0_74 = arith.constant 0 : index
    %c0_75 = arith.constant 0 : index
    %129 = vector.load %arg16[%c0_73, %c0_74, %c0_75] : memref<4x1x32xf32, #tpu.memory_space<vmem>>, vector<4x1x32xf32>
    %130 = vector.broadcast %129 : vector<4x1x32xf32> to vector<4x8x32xf32>
    %131 = arith.addf %128, %130 : vector<4x8x32xf32>
    %c0_76 = arith.constant 0 : index
    %c0_77 = arith.constant 0 : index
    %c0_78 = arith.constant 0 : index
    %132 = vector.load %arg17[%c0_76, %c0_77, %c0_78] : memref<4x128x32xbf16, #tpu.memory_space<vmem>>, vector<4x128x32xbf16>
    "tpu.trace_start"() <{level = 10 : i32, message = "hsd,hdk->hsk"}> : () -> ()
    %cst_79 = arith.constant dense<0.000000e+00> : vector<4x8x32xf32>
    %133 = tpu.matmul %121, %132, %cst_79 {dimension_numbers = #tpu.dot_dimension_numbers<[2], [1], [1], [2], [0, 0, 0, 1, 1, 2], [0], [0]>} : vector<4x8x128xbf16>, vector<4x128x32xbf16>, vector<4x8x32xf32> -> vector<4x8x32xf32>
    "tpu.trace_stop"() : () -> ()
    %c0_80 = arith.constant 0 : index
    %c0_81 = arith.constant 0 : index
    %c0_82 = arith.constant 0 : index
    %134 = vector.load %arg18[%c0_80, %c0_81, %c0_82] : memref<4x1x32xf32, #tpu.memory_space<vmem>>, vector<4x1x32xf32>
    %135 = vector.broadcast %134 : vector<4x1x32xf32> to vector<4x8x32xf32>
    %136 = arith.addf %133, %135 : vector<4x8x32xf32>
    %137 = arith.truncf %126 : vector<4x8x32xf32> to vector<4x8x32xbf16>
    %138 = arith.truncf %131 : vector<4x8x32xf32> to vector<4x8x32xbf16>
    "tpu.trace_start"() <{level = 10 : i32, message = "hqd,hkd->hqk"}> : () -> ()
    %cst_83 = arith.constant dense<0.000000e+00> : vector<4x8x8xf32>
    %139 = tpu.matmul %137, %138, %cst_83 {dimension_numbers = #tpu.dot_dimension_numbers<[2], [2], [1], [1], [0, 0, 0, 1, 1, 1], [0], [0]>} : vector<4x8x32xbf16>, vector<4x8x32xbf16>, vector<4x8x8xf32> -> vector<4x8x8xf32>
    "tpu.trace_stop"() : () -> ()
    %cst_84 = arith.constant 0.176776692 : f32
    %140 = vector.broadcast %cst_84 : f32 to vector<4x8x8xf32>
    %141 = arith.mulf %139, %140 : vector<4x8x8xf32>
    %142 = vector.shape_cast %17 : vector<8x8xf32> to vector<1x8x8xf32>
    %143 = vector.broadcast %142 : vector<1x8x8xf32> to vector<4x8x8xf32>
    %144 = arith.addf %141, %143 : vector<4x8x8xf32>
    %cst_85 = arith.constant dense<0xFF800000> : vector<4x8xf32>
    %145 = vector.multi_reduction <maximumf>, %144, %cst_85 [2] : vector<4x8x8xf32> to vector<4x8xf32>
    %146 = vector.shape_cast %145 : vector<4x8xf32> to vector<4x8x1xf32>
    %147 = vector.broadcast %146 : vector<4x8x1xf32> to vector<4x8x8xf32>
    %148 = arith.subf %144, %147 : vector<4x8x8xf32>
    %149 = math.exp %148 : vector<4x8x8xf32>
    %cst_86 = arith.constant dense<0.000000e+00> : vector<4x8xf32>
    %150 = vector.multi_reduction <add>, %149, %cst_86 [2] : vector<4x8x8xf32> to vector<4x8xf32>
    %151 = vector.shape_cast %150 : vector<4x8xf32> to vector<4x8x1xf32>
    %152 = tpu.reciprocal %151 {approx = true} : vector<4x8x1xf32> -> vector<4x8x1xf32>
    %153 = vector.broadcast %152 : vector<4x8x1xf32> to vector<4x8x8xf32>
    %154 = arith.mulf %149, %153 : vector<4x8x8xf32>
    %155 = arith.truncf %154 : vector<4x8x8xf32> to vector<4x8x8xbf16>
    %156 = arith.truncf %136 : vector<4x8x32xf32> to vector<4x8x32xbf16>
    "tpu.trace_start"() <{level = 10 : i32, message = "hqk,hkd->hqd"}> : () -> ()
    %cst_87 = arith.constant dense<0.000000e+00> : vector<4x8x32xf32>
    %157 = tpu.matmul %155, %156, %cst_87 {dimension_numbers = #tpu.dot_dimension_numbers<[2], [1], [1], [2], [0, 0, 0, 1, 1, 2], [0], [0]>} : vector<4x8x8xbf16>, vector<4x8x32xbf16>, vector<4x8x32xf32> -> vector<4x8x32xf32>
    "tpu.trace_stop"() : () -> ()
    %158 = arith.truncf %157 : vector<4x8x32xf32> to vector<4x8x32xbf16>
    %c0_88 = arith.constant 0 : index
    %c0_89 = arith.constant 0 : index
    %c0_90 = arith.constant 0 : index
    %159 = vector.load %arg19[%c0_88, %c0_89, %c0_90] : memref<4x32x128xbf16, #tpu.memory_space<vmem>>, vector<4x32x128xbf16>
    "tpu.trace_start"() <{level = 10 : i32, message = "hqd,hdo->hqo"}> : () -> ()
    %cst_91 = arith.constant dense<0.000000e+00> : vector<4x8x128xf32>
    %160 = tpu.matmul %158, %159, %cst_91 {dimension_numbers = #tpu.dot_dimension_numbers<[2], [1], [1], [2], [0, 0, 0, 1, 1, 2], [0], [0]>} : vector<4x8x32xbf16>, vector<4x32x128xbf16>, vector<4x8x128xf32> -> vector<4x8x128xf32>
    "tpu.trace_stop"() : () -> ()
    %cst_92 = arith.constant dense<0.000000e+00> : vector<8x128xf32>
    %161 = vector.multi_reduction <add>, %160, %cst_92 [0] : vector<4x8x128xf32> to vector<8x128xf32>
    %c0_93 = arith.constant 0 : index
    %c0_94 = arith.constant 0 : index
    %162 = vector.load %arg20[%c0_93, %c0_94] : memref<1x128xf32, #tpu.memory_space<vmem>>, vector<1x128xf32>
    %163 = vector.broadcast %162 : vector<1x128xf32> to vector<8x128xf32>
    %164 = arith.addf %161, %163 : vector<8x128xf32>
    %165 = arith.addf %91, %164 : vector<8x128xf32>
    %cst_95 = arith.constant dense<0.000000e+00> : vector<8xf32>
    %166 = vector.multi_reduction <add>, %165, %cst_95 [1] : vector<8x128xf32> to vector<8xf32>
    %167 = vector.shape_cast %166 : vector<8xf32> to vector<8x1xf32>
    %cst_96 = arith.constant 1.280000e+02 : f32
    %168 = vector.broadcast %cst_96 : f32 to vector<8x1xf32>
    %169 = arith.divf %167, %168 : vector<8x1xf32>
    %170 = vector.broadcast %169 : vector<8x1xf32> to vector<8x128xf32>
    %171 = arith.subf %165, %170 : vector<8x128xf32>
    %172 = arith.mulf %171, %171 : vector<8x128xf32>
    %cst_97 = arith.constant dense<0.000000e+00> : vector<8xf32>
    %173 = vector.multi_reduction <add>, %172, %cst_97 [1] : vector<8x128xf32> to vector<8xf32>
    %174 = vector.shape_cast %173 : vector<8xf32> to vector<8x1xf32>
    %cst_98 = arith.constant 1.270000e+02 : f32
    %175 = vector.broadcast %cst_98 : f32 to vector<8x1xf32>
    %176 = arith.divf %174, %175 : vector<8x1xf32>
    %177 = vector.broadcast %169 : vector<8x1xf32> to vector<8x128xf32>
    %178 = arith.subf %165, %177 : vector<8x128xf32>
    %cst_99 = arith.constant 1.000000e+00 : f32
    %179 = vector.broadcast %cst_99 : f32 to vector<8x128xf32>
    %180 = arith.mulf %179, %178 : vector<8x128xf32>
    %181 = math.sqrt %176 : vector<8x1xf32>
    %cst_100 = arith.constant 9.99999997E-7 : f32
    %182 = vector.broadcast %cst_100 : f32 to vector<8x1xf32>
    %183 = arith.addf %181, %182 : vector<8x1xf32>
    %184 = vector.broadcast %183 : vector<8x1xf32> to vector<8x128xf32>
    %185 = arith.divf %180, %184 : vector<8x128xf32>
    %cst_101 = arith.constant 0.000000e+00 : f32
    %186 = vector.broadcast %cst_101 : f32 to vector<8x128xf32>
    %187 = arith.addf %185, %186 : vector<8x128xf32>
    %188 = arith.truncf %187 : vector<8x128xf32> to vector<8x128xbf16>
    %c0_102 = arith.constant 0 : index
    %c0_103 = arith.constant 0 : index
    %189 = vector.load %arg21[%c0_102, %c0_103] : memref<128x256xbf16, #tpu.memory_space<vmem>>, vector<128x256xbf16>
    %cst_104 = arith.constant dense<0.000000e+00> : vector<8x256xf32>
    %190 = tpu.matmul %188, %189, %cst_104 {dimension_numbers = #tpu.dot_dimension_numbers<[1], [0], [0], [1], [0, 0, 1, 1], [], []>} : vector<8x128xbf16>, vector<128x256xbf16>, vector<8x256xf32> -> vector<8x256xf32>
    %c0_105 = arith.constant 0 : index
    %c0_106 = arith.constant 0 : index
    %191 = vector.load %arg22[%c0_105, %c0_106] : memref<1x256xf32, #tpu.memory_space<vmem>>, vector<1x256xf32>
    %192 = vector.broadcast %191 : vector<1x256xf32> to vector<8x256xf32>
    %193 = arith.addf %190, %192 : vector<8x256xf32>
    %cst_107 = arith.constant 0.000000e+00 : f32
    %194 = vector.broadcast %cst_107 : f32 to vector<8x256xf32>
    %195 = arith.maximumf %193, %194 : vector<8x256xf32>
    %196 = arith.truncf %195 : vector<8x256xf32> to vector<8x256xbf16>
    %c0_108 = arith.constant 0 : index
    %c0_109 = arith.constant 0 : index
    %197 = vector.load %arg23[%c0_108, %c0_109] : memref<256x128xbf16, #tpu.memory_space<vmem>>, vector<256x128xbf16>
    %cst_110 = arith.constant dense<0.000000e+00> : vector<8x128xf32>
    %198 = tpu.matmul %196, %197, %cst_110 {dimension_numbers = #tpu.dot_dimension_numbers<[1], [0], [0], [1], [0, 0, 1, 1], [], []>} : vector<8x256xbf16>, vector<256x128xbf16>, vector<8x128xf32> -> vector<8x128xf32>
    %199 = arith.addf %165, %198 : vector<8x128xf32>
    %c0_111 = arith.constant 0 : index
    %c0_112 = arith.constant 0 : index
    %200 = vector.load %arg24[%c0_111, %c0_112] : memref<1x128xf32, #tpu.memory_space<vmem>>, vector<1x128xf32>
    %201 = vector.broadcast %200 : vector<1x128xf32> to vector<8x128xf32>
    %202 = arith.addf %199, %201 : vector<8x128xf32>
    %c0_113 = arith.constant 0 : index
    %c0_114 = arith.constant 0 : index
    %c0_115 = arith.constant 0 : index
    %203 = vector.load %arg25[%c0_113, %c0_114, %c0_115] : memref<1x8x128xf32, #tpu.memory_space<vmem>>, vector<1x8x128xf32>
    %204 = vector.shape_cast %203 : vector<1x8x128xf32> to vector<8x128xf32>
    %205 = vector.shape_cast %202 : vector<8x128xf32> to vector<1x8x128xf32>
    tpu.vector_store %arg25[%c0_113, %c0_114, %c0_115], %205 {strides = array<i32>} : memref<1x8x128xf32, #tpu.memory_space<vmem>>, vector<1x8x128xf32>,
    return
  }
  func.func @transform_0(%arg0: i32) -> (i32, i32, i32) {
    %c0_i32 = arith.constant 0 : i32
    %c0_i32_0 = arith.constant 0 : i32
    %c0_i32_1 = arith.constant 0 : i32
    return %arg0, %c0_i32, %c0_i32_0 : i32, i32, i32
  }
  func.func @transform_1(%arg0: i32) -> (i32, i32, i32) {
    %c0_i32 = arith.constant 0 : i32
    %c0_i32_0 = arith.constant 0 : i32
    %c0_i32_1 = arith.constant 0 : i32
    return %arg0, %c0_i32, %c0_i32_0 : i32, i32, i32
  }
  func.func @transform_2(%arg0: i32) -> (i32, i32, i32) {
    %c0_i32 = arith.constant 0 : i32
    %c0_i32_0 = arith.constant 0 : i32
    %c0_i32_1 = arith.constant 0 : i32
    return %arg0, %c0_i32, %c0_i32_0 : i32, i32, i32
  }
  func.func @transform_3(%arg0: i32) -> (i32, i32, i32) {
    %c0_i32 = arith.constant 0 : i32
    %c0_i32_0 = arith.constant 0 : i32
    %c0_i32_1 = arith.constant 0 : i32
    return %arg0, %c0_i32, %c0_i32_0 : i32, i32, i32
  }
  func.func @transform_4(%arg0: i32) -> (i32, i32, i32) {
    %c0_i32 = arith.constant 0 : i32
    %c0_i32_0 = arith.constant 0 : i32
    %c0_i32_1 = arith.constant 0 : i32
    %c0_i32_2 = arith.constant 0 : i32
    return %c0_i32, %c0_i32_0, %c0_i32_1 : i32, i32, i32
  }
  func.func @transform_5(%arg0: i32) -> (i32, i32, i32) {
    %c0_i32 = arith.constant 0 : i32
    %c0_i32_0 = arith.constant 0 : i32
    %c0_i32_1 = arith.constant 0 : i32
    %c0_i32_2 = arith.constant 0 : i32
    return %c0_i32, %c0_i32_0, %c0_i32_1 : i32, i32, i32
  }
  func.func @transform_6(%arg0: i32) -> (i32, i32, i32) {
    %c0_i32 = arith.constant 0 : i32
    %c0_i32_0 = arith.constant 0 : i32
    %c0_i32_1 = arith.constant 0 : i32
    %c0_i32_2 = arith.constant 0 : i32
    return %c0_i32, %c0_i32_0, %c0_i32_1 : i32, i32, i32
  }
  func.func @transform_7(%arg0: i32) -> (i32, i32, i32) {
    %c0_i32 = arith.constant 0 : i32
    %c0_i32_0 = arith.constant 0 : i32
    %c0_i32_1 = arith.constant 0 : i32
    %c0_i32_2 = arith.constant 0 : i32
    return %c0_i32, %c0_i32_0, %c0_i32_1 : i32, i32, i32
  }
  func.func @transform_8(%arg0: i32) -> (i32, i32, i32) {
    %c0_i32 = arith.constant 0 : i32
    %c0_i32_0 = arith.constant 0 : i32
    %c0_i32_1 = arith.constant 0 : i32
    %c0_i32_2 = arith.constant 0 : i32
    return %c0_i32, %c0_i32_0, %c0_i32_1 : i32, i32, i32
  }
  func.func @transform_9(%arg0: i32) -> (i32, i32, i32) {
    %c0_i32 = arith.constant 0 : i32
    %c0_i32_0 = arith.constant 0 : i32
    %c0_i32_1 = arith.constant 0 : i32
    %c0_i32_2 = arith.constant 0 : i32
    return %c0_i32, %c0_i32_0, %c0_i32_1 : i32, i32, i32
  }
  func.func @transform_10(%arg0: i32) -> (i32, i32, i32) {
    %c0_i32 = arith.constant 0 : i32
    %c0_i32_0 = arith.constant 0 : i32
    %c0_i32_1 = arith.constant 0 : i32
    %c0_i32_2 = arith.constant 0 : i32
    return %c0_i32, %c0_i32_0, %c0_i32_1 : i32, i32, i32
  }
  func.func @transform_11(%arg0: i32) -> (i32, i32) {
    %c0_i32 = arith.constant 0 : i32
    %c0_i32_0 = arith.constant 0 : i32
    %c0_i32_1 = arith.constant 0 : i32
    return %c0_i32, %c0_i32_0 : i32, i32
  }
  func.func @transform_12(%arg0: i32) -> (i32, i32, i32) {
    %c0_i32 = arith.constant 0 : i32
    %c0_i32_0 = arith.constant 0 : i32
    %c0_i32_1 = arith.constant 0 : i32
    %c0_i32_2 = arith.constant 0 : i32
    return %c0_i32, %c0_i32_0, %c0_i32_1 : i32, i32, i32
  }
  func.func @transform_13(%arg0: i32) -> (i32, i32, i32) {
    %c0_i32 = arith.constant 0 : i32
    %c0_i32_0 = arith.constant 0 : i32
    %c0_i32_1 = arith.constant 0 : i32
    %c0_i32_2 = arith.constant 0 : i32
    return %c0_i32, %c0_i32_0, %c0_i32_1 : i32, i32, i32
  }
  func.func @transform_14(%arg0: i32) -> (i32, i32, i32) {
    %c0_i32 = arith.constant 0 : i32
    %c0_i32_0 = arith.constant 0 : i32
    %c0_i32_1 = arith.constant 0 : i32
    %c0_i32_2 = arith.constant 0 : i32
    return %c0_i32, %c0_i32_0, %c0_i32_1 : i32, i32, i32
  }
  func.func @transform_15(%arg0: i32) -> (i32, i32, i32) {
    %c0_i32 = arith.constant 0 : i32
    %c0_i32_0 = arith.constant 0 : i32
    %c0_i32_1 = arith.constant 0 : i32
    %c0_i32_2 = arith.constant 0 : i32
    return %c0_i32, %c0_i32_0, %c0_i32_1 : i32, i32, i32
  }
  func.func @transform_16(%arg0: i32) -> (i32, i32, i32) {
    %c0_i32 = arith.constant 0 : i32
    %c0_i32_0 = arith.constant 0 : i32
    %c0_i32_1 = arith.constant 0 : i32
    %c0_i32_2 = arith.constant 0 : i32
    return %c0_i32, %c0_i32_0, %c0_i32_1 : i32, i32, i32
  }
  func.func @transform_17(%arg0: i32) -> (i32, i32, i32) {
    %c0_i32 = arith.constant 0 : i32
    %c0_i32_0 = arith.constant 0 : i32
    %c0_i32_1 = arith.constant 0 : i32
    %c0_i32_2 = arith.constant 0 : i32
    return %c0_i32, %c0_i32_0, %c0_i32_1 : i32, i32, i32
  }
  func.func @transform_18(%arg0: i32) -> (i32, i32, i32) {
    %c0_i32 = arith.constant 0 : i32
    %c0_i32_0 = arith.constant 0 : i32
    %c0_i32_1 = arith.constant 0 : i32
    %c0_i32_2 = arith.constant 0 : i32
    return %c0_i32, %c0_i32_0, %c0_i32_1 : i32, i32, i32
  }
  func.func @transform_19(%arg0: i32) -> (i32, i32) {
    %c0_i32 = arith.constant 0 : i32
    %c0_i32_0 = arith.constant 0 : i32
    %c0_i32_1 = arith.constant 0 : i32
    return %c0_i32, %c0_i32_0 : i32, i32
  }
  func.func @transform_20(%arg0: i32) -> (i32, i32) {
    %c0_i32 = arith.constant 0 : i32
    %c0_i32_0 = arith.constant 0 : i32
    %c0_i32_1 = arith.constant 0 : i32
    return %c0_i32, %c0_i32_0 : i32, i32
  }
  func.func @transform_21(%arg0: i32) -> (i32, i32) {
    %c0_i32 = arith.constant 0 : i32
    %c0_i32_0 = arith.constant 0 : i32
    %c0_i32_1 = arith.constant 0 : i32
    return %c0_i32, %c0_i32_0 : i32, i32
  }
  func.func @transform_22(%arg0: i32) -> (i32, i32) {
    %c0_i32 = arith.constant 0 : i32
    %c0_i32_0 = arith.constant 0 : i32
    %c0_i32_1 = arith.constant 0 : i32
    return %c0_i32, %c0_i32_0 : i32, i32
  }
  func.func @transform_23(%arg0: i32) -> (i32, i32) {
    %c0_i32 = arith.constant 0 : i32
    %c0_i32_0 = arith.constant 0 : i32
    %c0_i32_1 = arith.constant 0 : i32
    return %c0_i32, %c0_i32_0 : i32, i32
  }
  func.func @transform_24(%arg0: i32) -> (i32, i32, i32) {
    %c0_i32 = arith.constant 0 : i32
    %c0_i32_0 = arith.constant 0 : i32
    %c0_i32_1 = arith.constant 0 : i32
    return %arg0, %c0_i32, %c0_i32_0 : i32, i32, i32
  }
}

</mosaic_0001>

<llo_original>
// kernel: tpu_custom_call.1
$region0: #{tpu_custom_call.1}
  #allocation0 [shape = 'u32[]', space=smem, size = 0x4, offset = 0x4, fixed_abs, tag = 'smem constant byte address 0x4 - core index']
  #allocation1 [shape = 'u32[72,128]{1,0:T(1,128)}', space=vmem, size = 0x9000, scoped, tag = 'internal scratch']
  %s0 = inlined_call_operand.vmem [shape: f32[2,8,128], index: 0, kind: input, shape index: {}]
  %s1 = inlined_call_operand.vmem [shape: f32[2,8,128], index: 1, kind: input, shape index: {}]
  %s2 = inlined_call_operand.vmem [shape: s32[2,8,8], index: 2, kind: input, shape index: {}]
  %s3 = inlined_call_operand.vmem [shape: s32[2,8,8], index: 3, kind: input, shape index: {}]
  %s4 = inlined_call_operand.vmem [shape: bf16[4,128,32], index: 4, kind: input, shape index: {}]
  %s5 = inlined_call_operand.vmem [shape: f32[4,1,32], index: 5, kind: input, shape index: {}]
  %s6 = inlined_call_operand.vmem [shape: bf16[4,128,32], index: 6, kind: input, shape index: {}]
  %s7 = inlined_call_operand.vmem [shape: f32[4,1,32], index: 7, kind: input, shape index: {}]
  %s8 = inlined_call_operand.vmem [shape: bf16[4,128,32], index: 8, kind: input, shape index: {}]
  %s9 = inlined_call_operand.vmem [shape: f32[4,1,32], index: 9, kind: input, shape index: {}]
  %s10 = inlined_call_operand.vmem [shape: bf16[4,32,128], index: 10, kind: input, shape index: {}]
  %s11 = inlined_call_operand.vmem [shape: f32[1,128], index: 11, kind: input, shape index: {}]
  %s12 = inlined_call_operand.vmem [shape: bf16[4,128,32], index: 12, kind: input, shape index: {}]
  %s13 = inlined_call_operand.vmem [shape: f32[4,1,32], index: 13, kind: input, shape index: {}]
  %s14 = inlined_call_operand.vmem [shape: bf16[4,128,32], index: 14, kind: input, shape index: {}]
  %s15 = inlined_call_operand.vmem [shape: f32[4,1,32], index: 15, kind: input, shape index: {}]
  %s16 = inlined_call_operand.vmem [shape: bf16[4,128,32], index: 16, kind: input, shape index: {}]
  %s17 = inlined_call_operand.vmem [shape: f32[4,1,32], index: 17, kind: input, shape index: {}]
  %s18 = inlined_call_operand.vmem [shape: bf16[4,32,128], index: 18, kind: input, shape index: {}]
  %s19 = inlined_call_operand.vmem [shape: f32[1,128], index: 19, kind: input, shape index: {}]
  %s20 = inlined_call_operand.vmem [shape: bf16[128,256], index: 20, kind: input, shape index: {}]
  %s21 = inlined_call_operand.vmem [shape: f32[1,256], index: 21, kind: input, shape index: {}]
  %s22 = inlined_call_operand.vmem [shape: bf16[256,128], index: 22, kind: input, shape index: {}]
  %s23 = inlined_call_operand.vmem [shape: f32[1,128], index: 23, kind: input, shape index: {}]
  %s24 = inlined_call_operand.hbm [shape: f32[2,8,128], index: 24, kind: output, shape index: {}]
  %s25 = sld [smem:[#allocation0]]
  $region129: #{tpu_custom_call.1} parent=0
    _
  %s27 = ssub.s32 1, %s25
  %s28 = scalar_select 0, %s27, %s25
  $region1: #{tpu_custom_call.1} parent=0
    #allocation2 [shape = 'u8[8192]{0}', space=vmem, size = 0x2000, scoped, tag = 'output window, operand 0']
    #allocation3 [shape = 's32[2]{0}', space=sflag, size = 0x8, scoped, tag = 'scoped memory for tpu_custom_call.1']
    %29 = vsyncpa [#allocation3], 0
    %s30 = scalar_lea.sflag [#allocation3], 1
    %31 = vsyncpa %s30, 0
    loop: start=0, step=1, limit=4
    $region2: #{tpu_custom_call.1} parent=1 // loop_pre_header
      _
    $region3: #{tpu_custom_call.1} parent=1 // loop_header
      %s33 = sphi 0, %s37
      %p34 = scmp.ge.s32.totalorder %s33, 4
      %s43 = sphi 0, %s45
      %s46 = sphi 0, %s43
      %s47 = sphi 0, %s46
      %s63 = sphi 0, %s47
      %s69 = sphi 0, %s71
      %s72 = sphi 0, %s69
      %s73 = sphi 0, %s72
      %s89 = sphi 0, %s73
      %s95 = sphi 0, %s97
      %s98 = sphi 0, %s95
      %s99 = sphi 0, %s98
      %s115 = sphi 0, %s99
      %s121 = sphi 0, %s123
      %s124 = sphi 0, %s121
      %s125 = sphi 0, %s124
      %s141 = sphi 0, %s125
      %s145 = sphi 0, %s145
      %s147 = sphi 0, %s145
      %s148 = sphi 0, %s147
      %s162 = sphi 0, %s148
      %s166 = sphi 0, %s166
      %s168 = sphi 0, %s166
      %s169 = sphi 0, %s168
      %s183 = sphi 0, %s169
      %s187 = sphi 0, %s187
      %s189 = sphi 0, %s187
      %s190 = sphi 0, %s189
      %s204 = sphi 0, %s190
      %s208 = sphi 0, %s208
      %s210 = sphi 0, %s208
      %s211 = sphi 0, %s210
      %s225 = sphi 0, %s211
      %s229 = sphi 0, %s229
      %s231 = sphi 0, %s229
      %s232 = sphi 0, %s231
      %s246 = sphi 0, %s232
      %s250 = sphi 0, %s250
      %s252 = sphi 0, %s250
      %s253 = sphi 0, %s252
      %s267 = sphi 0, %s253
      %s271 = sphi 0, %s271
      %s273 = sphi 0, %s271
      %s274 = sphi 0, %s273
      %s288 = sphi 0, %s274
      %s292 = sphi 0, %s292
      %s294 = sphi 0, %s292
      %s295 = sphi 0, %s294
      %s309 = sphi 0, %s295
      %s313 = sphi 0, %s313
      %s315 = sphi 0, %s313
      %s316 = sphi 0, %s315
      %s330 = sphi 0, %s316
      %s334 = sphi 0, %s334
      %s336 = sphi 0, %s334
      %s337 = sphi 0, %s336
      %s351 = sphi 0, %s337
      %s355 = sphi 0, %s355
      %s357 = sphi 0, %s355
      %s358 = sphi 0, %s357
      %s372 = sphi 0, %s358
      %s376 = sphi 0, %s376
      %s378 = sphi 0, %s376
      %s379 = sphi 0, %s378
      %s393 = sphi 0, %s379
      %s397 = sphi 0, %s397
      %s399 = sphi 0, %s397
      %s400 = sphi 0, %s399
      %s414 = sphi 0, %s400
      %s418 = sphi 0, %s418
      %s420 = sphi 0, %s418
      %s421 = sphi 0, %s420
      %s435 = sphi 0, %s421
      %s439 = sphi 0, %s439
      %s441 = sphi 0, %s439
      %s442 = sphi 0, %s441
      %s456 = sphi 0, %s442
      %s460 = sphi 0, %s460
      %s462 = sphi 0, %s460
      %s463 = sphi 0, %s462
      %s477 = sphi 0, %s463
      %s481 = sphi 0, %s481
      %s483 = sphi 0, %s481
      %s484 = sphi 0, %s483
      %s498 = sphi 0, %s484
      %s502 = sphi 0, %s502
      %s504 = sphi 0, %s502
      %s505 = sphi 0, %s504
      %s519 = sphi 0, %s505
      %s523 = sphi 0, %s523
      %s525 = sphi 0, %s523
      %s526 = sphi 0, %s525
      %s540 = sphi 0, %s526
      %s544 = sphi 0, %s544
      %s546 = sphi 0, %s544
      %s547 = sphi 0, %s546
      %s561 = sphi 0, %s547
      %s567 = sphi 0, %s569
      %s570 = sphi 0, %s567
      %s571 = sphi 0, %s570
      %s587 = sphi 0, %s571
    $region4: #{tpu_custom_call.1} parent=1 // loop_header_branch
      %36 = sbr.rel (%p34) target = $region8
    $region5: #{tpu_custom_call.1} parent=1 // loop_body
      %s38 = ssub.s32 %s33, 1
      %s39 = ssub.s32 %s33, 2
      %s40 = sadd.s32 %s33, 1
      %s41 = ssub.s32 %s33, %s40
      %p42 = scmp.eq.s32.totalorder %s41, 0
      %s44 = sadd.s32 %s43, 1
      %s45 = scalar_select %p42, %s43, %s44
      %p48 = pneg %p42
      %p49 = scmp.eq.s32.totalorder %s33, 1
      %p50 = por %p48, %p49
      %p51 = scmp.ne.s32.totalorder %s43, %s46
      %p52 = scmp.eq.s32.totalorder %s33, 0
      %p53 = por %p51, %p52
      %p54 = scmp.ne.s32.totalorder %s43, %s46
      %p55 = scmp.eq.s32.totalorder %s38, 1
      %p56 = por %p54, %p55
      %p57 = scmp.ne.s32.totalorder %s46, %s47
      %p58 = scmp.eq.s32.totalorder %s38, 0
      %p59 = por %p57, %p58
      %p60 = scmp.ne.s32.totalorder %s46, %s47
      %p61 = scmp.eq.s32.totalorder %s39, 1
      %p62 = por %p60, %p61
      %p64 = scmp.ne.s32.totalorder %s47, %s63
      %p65 = scmp.eq.s32.totalorder %s39, 0
      %p66 = por %p64, %p65
      %s67 = ssub.s32 %s33, %s40
      %p68 = scmp.eq.s32.totalorder %s67, 0
      %s70 = sadd.s32 %s69, 1
      %s71 = scalar_select %p68, %s69, %s70
      %p74 = pneg %p68
      %p75 = scmp.eq.s32.totalorder %s33, 1
      %p76 = por %p74, %p75
      %p77 = scmp.ne.s32.totalorder %s69, %s72
      %p78 = scmp.eq.s32.totalorder %s33, 0
      %p79 = por %p77, %p78
      %p80 = scmp.ne.s32.totalorder %s69, %s72
      %p81 = scmp.eq.s32.totalorder %s38, 1
      %p82 = por %p80, %p81
      %p83 = scmp.ne.s32.totalorder %s72, %s73
      %p84 = scmp.eq.s32.totalorder %s38, 0
      %p85 = por %p83, %p84
      %p86 = scmp.ne.s32.totalorder %s72, %s73
      %p87 = scmp.eq.s32.totalorder %s39, 1
      %p88 = por %p86, %p87
      %p90 = scmp.ne.s32.totalorder %s73, %s89
      %p91 = scmp.eq.s32.totalorder %s39, 0
      %p92 = por %p90, %p91
      %s93 = ssub.s32 %s33, %s40
      %p94 = scmp.eq.s32.totalorder %s93, 0
      %s96 = sadd.s32 %s95, 1
      %s97 = scalar_select %p94, %s95, %s96
      %p100 = pneg %p94
      %p101 = scmp.eq.s32.totalorder %s33, 1
      %p102 = por %p100, %p101
      %p103 = scmp.ne.s32.totalorder %s95, %s98
      %p104 = scmp.eq.s32.totalorder %s33, 0
      %p105 = por %p103, %p104
      %p106 = scmp.ne.s32.totalorder %s95, %s98
      %p107 = scmp.eq.s32.totalorder %s38, 1
      %p108 = por %p106, %p107
      %p109 = scmp.ne.s32.totalorder %s98, %s99
      %p110 = scmp.eq.s32.totalorder %s38, 0
      %p111 = por %p109, %p110
      %p112 = scmp.ne.s32.totalorder %s98, %s99
      %p113 = scmp.eq.s32.totalorder %s39, 1
      %p114 = por %p112, %p113
      %p116 = scmp.ne.s32.totalorder %s99, %s115
      %p117 = scmp.eq.s32.totalorder %s39, 0
      %p118 = por %p116, %p117
      %s119 = ssub.s32 %s33, %s40
      %p120 = scmp.eq.s32.totalorder %s119, 0
      %s122 = sadd.s32 %s121, 1
      %s123 = scalar_select %p120, %s121, %s122
      %p126 = pneg %p120
      %p127 = scmp.eq.s32.totalorder %s33, 1
      %p128 = por %p126, %p127
      %p129 = scmp.ne.s32.totalorder %s121, %s124
      %p130 = scmp.eq.s32.totalorder %s33, 0
      %p131 = por %p129, %p130
      %p132 = scmp.ne.s32.totalorder %s121, %s124
      %p133 = scmp.eq.s32.totalorder %s38, 1
      %p134 = por %p132, %p133
      %p135 = scmp.ne.s32.totalorder %s124, %s125
      %p136 = scmp.eq.s32.totalorder %s38, 0
      %p137 = por %p135, %p136
      %p138 = scmp.ne.s32.totalorder %s124, %s125
      %p139 = scmp.eq.s32.totalorder %s39, 1
      %p140 = por %p138, %p139
      %p142 = scmp.ne.s32.totalorder %s125, %s141
      %p143 = scmp.eq.s32.totalorder %s39, 0
      %p144 = por %p142, %p143
      %s146 = sadd.s32 %s145, 1
      %p149 = scmp.eq.s32.totalorder %s33, 1
      %p150 = scmp.ne.s32.totalorder %s145, %s147
      %p151 = scmp.eq.s32.totalorder %s33, 0
      %p152 = por %p150, %p151
      %p153 = scmp.ne.s32.totalorder %s145, %s147
      %p154 = scmp.eq.s32.totalorder %s38, 1
      %p155 = por %p153, %p154
      %p156 = scmp.ne.s32.totalorder %s147, %s148
      %p157 = scmp.eq.s32.totalorder %s38, 0
      %p158 = por %p156, %p157
      %p159 = scmp.ne.s32.totalorder %s147, %s148
      %p160 = scmp.eq.s32.totalorder %s39, 1
      %p161 = por %p159, %p160
      %p163 = scmp.ne.s32.totalorder %s148, %s162
      %p164 = scmp.eq.s32.totalorder %s39, 0
      %p165 = por %p163, %p164
      %s167 = sadd.s32 %s166, 1
      %p170 = scmp.eq.s32.totalorder %s33, 1
      %p171 = scmp.ne.s32.totalorder %s166, %s168
      %p172 = scmp.eq.s32.totalorder %s33, 0
      %p173 = por %p171, %p172
      %p174 = scmp.ne.s32.totalorder %s166, %s168
      %p175 = scmp.eq.s32.totalorder %s38, 1
      %p176 = por %p174, %p175
      %p177 = scmp.ne.s32.totalorder %s168, %s169
      %p178 = scmp.eq.s32.totalorder %s38, 0
      %p179 = por %p177, %p178
      %p180 = scmp.ne.s32.totalorder %s168, %s169
      %p181 = scmp.eq.s32.totalorder %s39, 1
      %p182 = por %p180, %p181
      %p184 = scmp.ne.s32.totalorder %s169, %s183
      %p185 = scmp.eq.s32.totalorder %s39, 0
      %p186 = por %p184, %p185
      %s188 = sadd.s32 %s187, 1
      %p191 = scmp.eq.s32.totalorder %s33, 1
      %p192 = scmp.ne.s32.totalorder %s187, %s189
      %p193 = scmp.eq.s32.totalorder %s33, 0
      %p194 = por %p192, %p193
      %p195 = scmp.ne.s32.totalorder %s187, %s189
      %p196 = scmp.eq.s32.totalorder %s38, 1
      %p197 = por %p195, %p196
      %p198 = scmp.ne.s32.totalorder %s189, %s190
      %p199 = scmp.eq.s32.totalorder %s38, 0
      %p200 = por %p198, %p199
      %p201 = scmp.ne.s32.totalorder %s189, %s190
      %p202 = scmp.eq.s32.totalorder %s39, 1
      %p203 = por %p201, %p202
      %p205 = scmp.ne.s32.totalorder %s190, %s204
      %p206 = scmp.eq.s32.totalorder %s39, 0
      %p207 = por %p205, %p206
      %s209 = sadd.s32 %s208, 1
      %p212 = scmp.eq.s32.totalorder %s33, 1
      %p213 = scmp.ne.s32.totalorder %s208, %s210
      %p214 = scmp.eq.s32.totalorder %s33, 0
      %p215 = por %p213, %p214
      %p216 = scmp.ne.s32.totalorder %s208, %s210
      %p217 = scmp.eq.s32.totalorder %s38, 1
      %p218 = por %p216, %p217
      %p219 = scmp.ne.s32.totalorder %s210, %s211
      %p220 = scmp.eq.s32.totalorder %s38, 0
      %p221 = por %p219, %p220
      %p222 = scmp.ne.s32.totalorder %s210, %s211
      %p223 = scmp.eq.s32.totalorder %s39, 1
      %p224 = por %p222, %p223
      %p226 = scmp.ne.s32.totalorder %s211, %s225
      %p227 = scmp.eq.s32.totalorder %s39, 0
      %p228 = por %p226, %p227
      %s230 = sadd.s32 %s229, 1
      %p233 = scmp.eq.s32.totalorder %s33, 1
      %p234 = scmp.ne.s32.totalorder %s229, %s231
      %p235 = scmp.eq.s32.totalorder %s33, 0
      %p236 = por %p234, %p235
      %p237 = scmp.ne.s32.totalorder %s229, %s231
      %p238 = scmp.eq.s32.totalorder %s38, 1
      %p239 = por %p237, %p238
      %p240 = scmp.ne.s32.totalorder %s231, %s232
      %p241 = scmp.eq.s32.totalorder %s38, 0
      %p242 = por %p240, %p241
      %p243 = scmp.ne.s32.totalorder %s231, %s232
      %p244 = scmp.eq.s32.totalorder %s39, 1
      %p245 = por %p243, %p244
      %p247 = scmp.ne.s32.totalorder %s232, %s246
      %p248 = scmp.eq.s32.totalorder %s39, 0
      %p249 = por %p247, %p248
      %s251 = sadd.s32 %s250, 1
      %p254 = scmp.eq.s32.totalorder %s33, 1
      %p255 = scmp.ne.s32.totalorder %s250, %s252
      %p256 = scmp.eq.s32.totalorder %s33, 0
      %p257 = por %p255, %p256
      %p258 = scmp.ne.s32.totalorder %s250, %s252
      %p259 = scmp.eq.s32.totalorder %s38, 1
      %p260 = por %p258, %p259
      %p261 = scmp.ne.s32.totalorder %s252, %s253
      %p262 = scmp.eq.s32.totalorder %s38, 0
      %p263 = por %p261, %p262
      %p264 = scmp.ne.s32.totalorder %s252, %s253
      %p265 = scmp.eq.s32.totalorder %s39, 1
      %p266 = por %p264, %p265
      %p268 = scmp.ne.s32.totalorder %s253, %s267
      %p269 = scmp.eq.s32.totalorder %s39, 0
      %p270 = por %p268, %p269
      %s272 = sadd.s32 %s271, 1
      %p275 = scmp.eq.s32.totalorder %s33, 1
      %p276 = scmp.ne.s32.totalorder %s271, %s273
      %p277 = scmp.eq.s32.totalorder %s33, 0
      %p278 = por %p276, %p277
      %p279 = scmp.ne.s32.totalorder %s271, %s273
      %p280 = scmp.eq.s32.totalorder %s38, 1
      %p281 = por %p279, %p280
      %p282 = scmp.ne.s32.totalorder %s273, %s274
      %p283 = scmp.eq.s32.totalorder %s38, 0
      %p284 = por %p282, %p283
      %p285 = scmp.ne.s32.totalorder %s273, %s274
      %p286 = scmp.eq.s32.totalorder %s39, 1
      %p287 = por %p285, %p286
      %p289 = scmp.ne.s32.totalorder %s274, %s288
      %p290 = scmp.eq.s32.totalorder %s39, 0
      %p291 = por %p289, %p290
      %s293 = sadd.s32 %s292, 1
      %p296 = scmp.eq.s32.totalorder %s33, 1
      %p297 = scmp.ne.s32.totalorder %s292, %s294
      %p298 = scmp.eq.s32.totalorder %s33, 0
      %p299 = por %p297, %p298
      %p300 = scmp.ne.s32.totalorder %s292, %s294
      %p301 = scmp.eq.s32.totalorder %s38, 1
      %p302 = por %p300, %p301
      %p303 = scmp.ne.s32.totalorder %s294, %s295
      %p304 = scmp.eq.s32.totalorder %s38, 0
      %p305 = por %p303, %p304
      %p306 = scmp.ne.s32.totalorder %s294, %s295
      %p307 = scmp.eq.s32.totalorder %s39, 1
      %p308 = por %p306, %p307
      %p310 = scmp.ne.s32.totalorder %s295, %s309
      %p311 = scmp.eq.s32.totalorder %s39, 0
      %p312 = por %p310, %p311
      %s314 = sadd.s32 %s313, 1
      %p317 = scmp.eq.s32.totalorder %s33, 1
      %p318 = scmp.ne.s32.totalorder %s313, %s315
      %p319 = scmp.eq.s32.totalorder %s33, 0
      %p320 = por %p318, %p319
      %p321 = scmp.ne.s32.totalorder %s313, %s315
      %p322 = scmp.eq.s32.totalorder %s38, 1
      %p323 = por %p321, %p322
      %p324 = scmp.ne.s32.totalorder %s315, %s316
      %p325 = scmp.eq.s32.totalorder %s38, 0
      %p326 = por %p324, %p325
      %p327 = scmp.ne.s32.totalorder %s315, %s316
      %p328 = scmp.eq.s32.totalorder %s39, 1
      %p329 = por %p327, %p328
      %p331 = scmp.ne.s32.totalorder %s316, %s330
      %p332 = scmp.eq.s32.totalorder %s39, 0
      %p333 = por %p331, %p332
      %s335 = sadd.s32 %s334, 1
      %p338 = scmp.eq.s32.totalorder %s33, 1
      %p339 = scmp.ne.s32.totalorder %s334, %s336
      %p340 = scmp.eq.s32.totalorder %s33, 0
      %p341 = por %p339, %p340
      %p342 = scmp.ne.s32.totalorder %s334, %s336
      %p343 = scmp.eq.s32.totalorder %s38, 1
      %p344 = por %p342, %p343
      %p345 = scmp.ne.s32.totalorder %s336, %s337
      %p346 = scmp.eq.s32.totalorder %s38, 0
      %p347 = por %p345, %p346
      %p348 = scmp.ne.s32.totalorder %s336, %s337
      %p349 = scmp.eq.s32.totalorder %s39, 1
      %p350 = por %p348, %p349
      %p352 = scmp.ne.s32.totalorder %s337, %s351
      %p353 = scmp.eq.s32.totalorder %s39, 0
      %p354 = por %p352, %p353
      %s356 = sadd.s32 %s355, 1
      %p359 = scmp.eq.s32.totalorder %s33, 1
      %p360 = scmp.ne.s32.totalorder %s355, %s357
      %p361 = scmp.eq.s32.totalorder %s33, 0
      %p362 = por %p360, %p361
      %p363 = scmp.ne.s32.totalorder %s355, %s357
      %p364 = scmp.eq.s32.totalorder %s38, 1
      %p365 = por %p363, %p364
      %p366 = scmp.ne.s32.totalorder %s357, %s358
      %p367 = scmp.eq.s32.totalorder %s38, 0
      %p368 = por %p366, %p367
      %p369 = scmp.ne.s32.totalorder %s357, %s358
      %p370 = scmp.eq.s32.totalorder %s39, 1
      %p371 = por %p369, %p370
      %p373 = scmp.ne.s32.totalorder %s358, %s372
      %p374 = scmp.eq.s32.totalorder %s39, 0
      %p375 = por %p373, %p374
      %s377 = sadd.s32 %s376, 1
      %p380 = scmp.eq.s32.totalorder %s33, 1
      %p381 = scmp.ne.s32.totalorder %s376, %s378
      %p382 = scmp.eq.s32.totalorder %s33, 0
      %p383 = por %p381, %p382
      %p384 = scmp.ne.s32.totalorder %s376, %s378
      %p385 = scmp.eq.s32.totalorder %s38, 1
      %p386 = por %p384, %p385
      %p387 = scmp.ne.s32.totalorder %s378, %s379
      %p388 = scmp.eq.s32.totalorder %s38, 0
      %p389 = por %p387, %p388
      %p390 = scmp.ne.s32.totalorder %s378, %s379
      %p391 = scmp.eq.s32.totalorder %s39, 1
      %p392 = por %p390, %p391
      %p394 = scmp.ne.s32.totalorder %s379, %s393
      %p395 = scmp.eq.s32.totalorder %s39, 0
      %p396 = por %p394, %p395
      %s398 = sadd.s32 %s397, 1
      %p401 = scmp.eq.s32.totalorder %s33, 1
      %p402 = scmp.ne.s32.totalorder %s397, %s399
      %p403 = scmp.eq.s32.totalorder %s33, 0
      %p404 = por %p402, %p403
      %p405 = scmp.ne.s32.totalorder %s397, %s399
      %p406 = scmp.eq.s32.totalorder %s38, 1
      %p407 = por %p405, %p406
      %p408 = scmp.ne.s32.totalorder %s399, %s400
      %p409 = scmp.eq.s32.totalorder %s38, 0
      %p410 = por %p408, %p409
      %p411 = scmp.ne.s32.totalorder %s399, %s400
      %p412 = scmp.eq.s32.totalorder %s39, 1
      %p413 = por %p411, %p412
      %p415 = scmp.ne.s32.totalorder %s400, %s414
      %p416 = scmp.eq.s32.totalorder %s39, 0
      %p417 = por %p415, %p416
      %s419 = sadd.s32 %s418, 1
      %p422 = scmp.eq.s32.totalorder %s33, 1
      %p423 = scmp.ne.s32.totalorder %s418, %s420
      %p424 = scmp.eq.s32.totalorder %s33, 0
      %p425 = por %p423, %p424
      %p426 = scmp.ne.s32.totalorder %s418, %s420
      %p427 = scmp.eq.s32.totalorder %s38, 1
      %p428 = por %p426, %p427
      %p429 = scmp.ne.s32.totalorder %s420, %s421
      %p430 = scmp.eq.s32.totalorder %s38, 0
      %p431 = por %p429, %p430
      %p432 = scmp.ne.s32.totalorder %s420, %s421
      %p433 = scmp.eq.s32.totalorder %s39, 1
      %p434 = por %p432, %p433
      %p436 = scmp.ne.s32.totalorder %s421, %s435
      %p437 = scmp.eq.s32.totalorder %s39, 0
      %p438 = por %p436, %p437
      %s440 = sadd.s32 %s439, 1
      %p443 = scmp.eq.s32.totalorder %s33, 1
      %p444 = scmp.ne.s32.totalorder %s439, %s441
      %p445 = scmp.eq.s32.totalorder %s33, 0
      %p446 = por %p444, %p445
      %p447 = scmp.ne.s32.totalorder %s439, %s441
      %p448 = scmp.eq.s32.totalorder %s38, 1
      %p449 = por %p447, %p448
      %p450 = scmp.ne.s32.totalorder %s441, %s442
      %p451 = scmp.eq.s32.totalorder %s38, 0
      %p452 = por %p450, %p451
      %p453 = scmp.ne.s32.totalorder %s441, %s442
      %p454 = scmp.eq.s32.totalorder %s39, 1
      %p455 = por %p453, %p454
      %p457 = scmp.ne.s32.totalorder %s442, %s456
      %p458 = scmp.eq.s32.totalorder %s39, 0
      %p459 = por %p457, %p458
      %s461 = sadd.s32 %s460, 1
      %p464 = scmp.eq.s32.totalorder %s33, 1
      %p465 = scmp.ne.s32.totalorder %s460, %s462
      %p466 = scmp.eq.s32.totalorder %s33, 0
      %p467 = por %p465, %p466
      %p468 = scmp.ne.s32.totalorder %s460, %s462
      %p469 = scmp.eq.s32.totalorder %s38, 1
      %p470 = por %p468, %p469
      %p471 = scmp.ne.s32.totalorder %s462, %s463
      %p472 = scmp.eq.s32.totalorder %s38, 0
      %p473 = por %p471, %p472
      %p474 = scmp.ne.s32.totalorder %s462, %s463
      %p475 = scmp.eq.s32.totalorder %s39, 1
      %p476 = por %p474, %p475
      %p478 = scmp.ne.s32.totalorder %s463, %s477
      %p479 = scmp.eq.s32.totalorder %s39, 0
      %p480 = por %p478, %p479
      %s482 = sadd.s32 %s481, 1
      %p485 = scmp.eq.s32.totalorder %s33, 1
      %p486 = scmp.ne.s32.totalorder %s481, %s483
      %p487 = scmp.eq.s32.totalorder %s33, 0
      %p488 = por %p486, %p487
      %p489 = scmp.ne.s32.totalorder %s481, %s483
      %p490 = scmp.eq.s32.totalorder %s38, 1
      %p491 = por %p489, %p490
      %p492 = scmp.ne.s32.totalorder %s483, %s484
      %p493 = scmp.eq.s32.totalorder %s38, 0
      %p494 = por %p492, %p493
      %p495 = scmp.ne.s32.totalorder %s483, %s484
      %p496 = scmp.eq.s32.totalorder %s39, 1
      %p497 = por %p495, %p496
      %p499 = scmp.ne.s32.totalorder %s484, %s498
      %p500 = scmp.eq.s32.totalorder %s39, 0
      %p501 = por %p499, %p500
      %s503 = sadd.s32 %s502, 1
      %p506 = scmp.eq.s32.totalorder %s33, 1
      %p507 = scmp.ne.s32.totalorder %s502, %s504
      %p508 = scmp.eq.s32.totalorder %s33, 0
      %p509 = por %p507, %p508
      %p510 = scmp.ne.s32.totalorder %s502, %s504
      %p511 = scmp.eq.s32.totalorder %s38, 1
      %p512 = por %p510, %p511
      %p513 = scmp.ne.s32.totalorder %s504, %s505
      %p514 = scmp.eq.s32.totalorder %s38, 0
      %p515 = por %p513, %p514
      %p516 = scmp.ne.s32.totalorder %s504, %s505
      %p517 = scmp.eq.s32.totalorder %s39, 1
      %p518 = por %p516, %p517
      %p520 = scmp.ne.s32.totalorder %s505, %s519
      %p521 = scmp.eq.s32.totalorder %s39, 0
      %p522 = por %p520, %p521
      %s524 = sadd.s32 %s523, 1
      %p527 = scmp.eq.s32.totalorder %s33, 1
      %p528 = scmp.ne.s32.totalorder %s523, %s525
      %p529 = scmp.eq.s32.totalorder %s33, 0
      %p530 = por %p528, %p529
      %p531 = scmp.ne.s32.totalorder %s523, %s525
      %p532 = scmp.eq.s32.totalorder %s38, 1
      %p533 = por %p531, %p532
      %p534 = scmp.ne.s32.totalorder %s525, %s526
      %p535 = scmp.eq.s32.totalorder %s38, 0
      %p536 = por %p534, %p535
      %p537 = scmp.ne.s32.totalorder %s525, %s526
      %p538 = scmp.eq.s32.totalorder %s39, 1
      %p539 = por %p537, %p538
      %p541 = scmp.ne.s32.totalorder %s526, %s540
      %p542 = scmp.eq.s32.totalorder %s39, 0
      %p543 = por %p541, %p542
      %s545 = sadd.s32 %s544, 1
      %p548 = scmp.eq.s32.totalorder %s33, 1
      %p549 = scmp.ne.s32.totalorder %s544, %s546
      %p550 = scmp.eq.s32.totalorder %s33, 0
      %p551 = por %p549, %p550
      %p552 = scmp.ne.s32.totalorder %s544, %s546
      %p553 = scmp.eq.s32.totalorder %s38, 1
      %p554 = por %p552, %p553
      %p555 = scmp.ne.s32.totalorder %s546, %s547
      %p556 = scmp.eq.s32.totalorder %s38, 0
      %p557 = por %p555, %p556
      %p558 = scmp.ne.s32.totalorder %s546, %s547
      %p559 = scmp.eq.s32.totalorder %s39, 1
      %p560 = por %p558, %p559
      %p562 = scmp.ne.s32.totalorder %s547, %s561
      %p563 = scmp.eq.s32.totalorder %s39, 0
      %p564 = por %p562, %p563
      %s565 = ssub.s32 %s33, %s40
      %p566 = scmp.eq.s32.totalorder %s565, 0
      %s568 = sadd.s32 %s567, 1
      %s569 = scalar_select %p566, %s567, %s568
      %p572 = pneg %p566
      %p573 = scmp.eq.s32.totalorder %s33, 1
      %p574 = por %p572, %p573
      %p575 = scmp.ne.s32.totalorder %s567, %s570
      %p576 = scmp.eq.s32.totalorder %s33, 0
      %p577 = por %p575, %p576
      %p578 = scmp.ne.s32.totalorder %s567, %s570
      %p579 = scmp.eq.s32.totalorder %s38, 1
      %p580 = por %p578, %p579
      %p581 = scmp.ne.s32.totalorder %s570, %s571
      %p582 = scmp.eq.s32.totalorder %s38, 0
      %p583 = por %p581, %p582
      %p584 = scmp.ne.s32.totalorder %s570, %s571
      %p585 = scmp.eq.s32.totalorder %s39, 1
      %p586 = por %p584, %p585
      %p588 = scmp.ne.s32.totalorder %s571, %s587
      %p589 = scmp.eq.s32.totalorder %s39, 0
      %p590 = por %p588, %p589
      %p591 = scmp.le.s32.totalorder 1, %s33
      %p592 = scmp.lt.s32.totalorder %s33, 3
      %p593 = pnand %p591, %p592
      %p594 = pneg %p593
      // Predicated region
      $region9: #{tpu_custom_call.1} parent=5 // pred_check
        _
      $region10: #{tpu_custom_call.1} parent=5 // pred_check_branch
        %596 = sbr.rel (%p593) target = $region12
      $region11: #{tpu_custom_call.1} parent=5 // pred_region
        %s597 = ssub.s32 %s33, 1
        // Predicated region
        $region13: #{tpu_custom_call.1} parent=11 // pred_check
          %p598 = pneg %p158
        $region14: #{tpu_custom_call.1} parent=11 // pred_check_branch
          %600 = sbr.rel (%p598) target = $region16
        $region15: #{tpu_custom_call.1} parent=11 // pred_region
          _
        $region16: #{tpu_custom_call.1} parent=11 // pred_fallthru
          _
        // Predicated region
        $region17: #{tpu_custom_call.1} parent=11 // pred_check
          %p601 = pneg %p179
        $region18: #{tpu_custom_call.1} parent=11 // pred_check_branch
          %603 = sbr.rel (%p601) target = $region20
        $region19: #{tpu_custom_call.1} parent=11 // pred_region
          _
        $region20: #{tpu_custom_call.1} parent=11 // pred_fallthru
          _
        // Predicated region
        $region21: #{tpu_custom_call.1} parent=11 // pred_check
          %p604 = pneg %p200
        $region22: #{tpu_custom_call.1} parent=11 // pred_check_branch
          %606 = sbr.rel (%p604) target = $region24
        $region23: #{tpu_custom_call.1} parent=11 // pred_region
          _
        $region24: #{tpu_custom_call.1} parent=11 // pred_fallthru
          _
        // Predicated region
        $region25: #{tpu_custom_call.1} parent=11 // pred_check
          %p607 = pneg %p221
        $region26: #{tpu_custom_call.1} parent=11 // pred_check_branch
          %609 = sbr.rel (%p607) target = $region28
        $region27: #{tpu_custom_call.1} parent=11 // pred_region
          _
        $region28: #{tpu_custom_call.1} parent=11 // pred_fallthru
          _
        // Predicated region
        $region29: #{tpu_custom_call.1} parent=11 // pred_check
          %p610 = pneg %p242
        $region30: #{tpu_custom_call.1} parent=11 // pred_check_branch
          %612 = sbr.rel (%p610) target = $region32
        $region31: #{tpu_custom_call.1} parent=11 // pred_region
          _
        $region32: #{tpu_custom_call.1} parent=11 // pred_fallthru
          _
        // Predicated region
        $region33: #{tpu_custom_call.1} parent=11 // pred_check
          %p613 = pneg %p263
        $region34: #{tpu_custom_call.1} parent=11 // pred_check_branch
          %615 = sbr.rel (%p613) target = $region36
        $region35: #{tpu_custom_call.1} parent=11 // pred_region
          _
        $region36: #{tpu_custom_call.1} parent=11 // pred_fallthru
          _
        // Predicated region
        $region37: #{tpu_custom_call.1} parent=11 // pred_check
          %p616 = pneg %p284
        $region38: #{tpu_custom_call.1} parent=11 // pred_check_branch
          %618 = sbr.rel (%p616) target = $region40
        $region39: #{tpu_custom_call.1} parent=11 // pred_region
          _
        $region40: #{tpu_custom_call.1} parent=11 // pred_fallthru
          _
        // Predicated region
        $region41: #{tpu_custom_call.1} parent=11 // pred_check
          %p619 = pneg %p305
        $region42: #{tpu_custom_call.1} parent=11 // pred_check_branch
          %621 = sbr.rel (%p619) target = $region44
        $region43: #{tpu_custom_call.1} parent=11 // pred_region
          _
        $region44: #{tpu_custom_call.1} parent=11 // pred_fallthru
          _
        // Predicated region
        $region45: #{tpu_custom_call.1} parent=11 // pred_check
          %p622 = pneg %p326
        $region46: #{tpu_custom_call.1} parent=11 // pred_check_branch
          %624 = sbr.rel (%p622) target = $region48
        $region47: #{tpu_custom_call.1} parent=11 // pred_region
          _
        $region48: #{tpu_custom_call.1} parent=11 // pred_fallthru
          _
        // Predicated region
        $region49: #{tpu_custom_call.1} parent=11 // pred_check
          %p625 = pneg %p347
        $region50: #{tpu_custom_call.1} parent=11 // pred_check_branch
          %627 = sbr.rel (%p625) target = $region52
        $region51: #{tpu_custom_call.1} parent=11 // pred_region
          _
        $region52: #{tpu_custom_call.1} parent=11 // pred_fallthru
          _
        // Predicated region
        $region53: #{tpu_custom_call.1} parent=11 // pred_check
          %p628 = pneg %p368
        $region54: #{tpu_custom_call.1} parent=11 // pred_check_branch
          %630 = sbr.rel (%p628) target = $region56
        $region55: #{tpu_custom_call.1} parent=11 // pred_region
          _
        $region56: #{tpu_custom_call.1} parent=11 // pred_fallthru
          _
        // Predicated region
        $region57: #{tpu_custom_call.1} parent=11 // pred_check
          %p631 = pneg %p389
        $region58: #{tpu_custom_call.1} parent=11 // pred_check_branch
          %633 = sbr.rel (%p631) target = $region60
        $region59: #{tpu_custom_call.1} parent=11 // pred_region
          _
        $region60: #{tpu_custom_call.1} parent=11 // pred_fallthru
          _
        // Predicated region
        $region61: #{tpu_custom_call.1} parent=11 // pred_check
          %p634 = pneg %p410
        $region62: #{tpu_custom_call.1} parent=11 // pred_check_branch
          %636 = sbr.rel (%p634) target = $region64
        $region63: #{tpu_custom_call.1} parent=11 // pred_region
          _
        $region64: #{tpu_custom_call.1} parent=11 // pred_fallthru
          _
        // Predicated region
        $region65: #{tpu_custom_call.1} parent=11 // pred_check
          %p637 = pneg %p431
        $region66: #{tpu_custom_call.1} parent=11 // pred_check_branch
          %639 = sbr.rel (%p637) target = $region68
        $region67: #{tpu_custom_call.1} parent=11 // pred_region
          _
        $region68: #{tpu_custom_call.1} parent=11 // pred_fallthru
          _
        // Predicated region
        $region69: #{tpu_custom_call.1} parent=11 // pred_check
          %p640 = pneg %p452
        $region70: #{tpu_custom_call.1} parent=11 // pred_check_branch
          %642 = sbr.rel (%p640) target = $region72
        $region71: #{tpu_custom_call.1} parent=11 // pred_region
          _
        $region72: #{tpu_custom_call.1} parent=11 // pred_fallthru
          _
        // Predicated region
        $region73: #{tpu_custom_call.1} parent=11 // pred_check
          %p643 = pneg %p473
        $region74: #{tpu_custom_call.1} parent=11 // pred_check_branch
          %645 = sbr.rel (%p643) target = $region76
        $region75: #{tpu_custom_call.1} parent=11 // pred_region
          _
        $region76: #{tpu_custom_call.1} parent=11 // pred_fallthru
          _
        // Predicated region
        $region77: #{tpu_custom_call.1} parent=11 // pred_check
          %p646 = pneg %p494
        $region78: #{tpu_custom_call.1} parent=11 // pred_check_branch
          %648 = sbr.rel (%p646) target = $region80
        $region79: #{tpu_custom_call.1} parent=11 // pred_region
          _
        $region80: #{tpu_custom_call.1} parent=11 // pred_fallthru
          _
        // Predicated region
        $region81: #{tpu_custom_call.1} parent=11 // pred_check
          %p649 = pneg %p515
        $region82: #{tpu_custom_call.1} parent=11 // pred_check_branch
          %651 = sbr.rel (%p649) target = $region84
        $region83: #{tpu_custom_call.1} parent=11 // pred_region
          _
        $region84: #{tpu_custom_call.1} parent=11 // pred_fallthru
          _
        // Predicated region
        $region85: #{tpu_custom_call.1} parent=11 // pred_check
          %p652 = pneg %p536
        $region86: #{tpu_custom_call.1} parent=11 // pred_check_branch
          %654 = sbr.rel (%p652) target = $region88
        $region87: #{tpu_custom_call.1} parent=11 // pred_region
          _
        $region88: #{tpu_custom_call.1} parent=11 // pred_fallthru
          _
        // Predicated region
        $region89: #{tpu_custom_call.1} parent=11 // pred_check
          %p655 = pneg %p557
        $region90: #{tpu_custom_call.1} parent=11 // pred_check_branch
          %657 = sbr.rel (%p655) target = $region92
        $region91: #{tpu_custom_call.1} parent=11 // pred_region
          _
        $region92: #{tpu_custom_call.1} parent=11 // pred_fallthru
          _
      $region12: #{tpu_custom_call.1} parent=5 // pred_fallthru
        _
      %p658 = scmp.lt.s32.totalorder %s33, 2
      // Predicated region
      $region93: #{tpu_custom_call.1} parent=5 // pred_check
        %p659 = pneg %p658
      $region94: #{tpu_custom_call.1} parent=5 // pred_check_branch
        %661 = sbr.rel (%p659) target = $region96
      $region95: #{tpu_custom_call.1} parent=5 // pred_region
        // Predicated region
        $region97: #{tpu_custom_call.1} parent=95 // pred_check
          %p662 = pneg %p53
        $region98: #{tpu_custom_call.1} parent=95 // pred_check_branch
          %664 = sbr.rel (%p662) target = $region100
        $region99: #{tpu_custom_call.1} parent=95 // pred_region
          %p665 = scmp.lt.s32.totalorder %s33, 1
          %s666 = scalar_select %p665, %s33, 1
          %s667 = smul.addr %s666, 8
          %s668 = scalar_lea.vmem %s0, %s667
        $region100: #{tpu_custom_call.1} parent=95 // pred_fallthru
          _
        // Predicated region
        $region101: #{tpu_custom_call.1} parent=95 // pred_check
          %p669 = pneg %p79
        $region102: #{tpu_custom_call.1} parent=95 // pred_check_branch
          %671 = sbr.rel (%p669) target = $region104
        $region103: #{tpu_custom_call.1} parent=95 // pred_region
          %p672 = scmp.lt.s32.totalorder %s33, 1
          %s673 = scalar_select %p672, %s33, 1
          %s674 = smul.addr %s673, 8
          %s675 = scalar_lea.vmem %s1, %s674
        $region104: #{tpu_custom_call.1} parent=95 // pred_fallthru
          _
        // Predicated region
        $region105: #{tpu_custom_call.1} parent=95 // pred_check
          %p676 = pneg %p105
        $region106: #{tpu_custom_call.1} parent=95 // pred_check_branch
          %678 = sbr.rel (%p676) target = $region108
        $region107: #{tpu_custom_call.1} parent=95 // pred_region
          %p679 = scmp.lt.s32.totalorder %s33, 1
          %s680 = scalar_select %p679, %s33, 1
          %s681 = smul.addr %s680, 8
          %s682 = scalar_lea.vmem %s2, %s681
        $region108: #{tpu_custom_call.1} parent=95 // pred_fallthru
          _
        // Predicated region
        $region109: #{tpu_custom_call.1} parent=95 // pred_check
          %p683 = pneg %p131
        $region110: #{tpu_custom_call.1} parent=95 // pred_check_branch
          %685 = sbr.rel (%p683) target = $region112
        $region111: #{tpu_custom_call.1} parent=95 // pred_region
          %p686 = scmp.lt.s32.totalorder %s33, 1
          %s687 = scalar_select %p686, %s33, 1
          %s688 = smul.addr %s687, 8
          %s689 = scalar_lea.vmem %s3, %s688
        $region112: #{tpu_custom_call.1} parent=95 // pred_fallthru
          _
      $region96: #{tpu_custom_call.1} parent=5 // pred_fallthru
        _
      %p690 = scmp.le.s32.totalorder 1, %s33
      %p691 = scmp.lt.s32.totalorder %s33, 3
      %p692 = pnand %p690, %p691
      %p693 = pneg %p692
      // Predicated region
      $region113: #{tpu_custom_call.1} parent=5 // pred_check
        _
      $region114: #{tpu_custom_call.1} parent=5 // pred_check_branch
        %695 = sbr.rel (%p692) target = $region116
      $region115: #{tpu_custom_call.1} parent=5 // pred_region
        %s696 = ssub.s32 %s33, 1
        %p697 = scmp.lt.s32.totalorder %s38, 1
        %s698 = scalar_select %p697, %s38, 1
        %s699 = smul.addr %s698, 8
        %s700 = scalar_lea.vmem %s0, %s699
        %p701 = pneg %p59
        %p702 = pneg %p56
        %p703 = scmp.lt.s32.totalorder %s38, 1
        %s704 = scalar_select %p703, %s38, 1
        %s705 = smul.addr %s704, 8
        %s706 = scalar_lea.vmem %s1, %s705
        %p707 = pneg %p85
        %p708 = pneg %p82
        %p709 = scmp.lt.s32.totalorder %s38, 1
        %s710 = scalar_select %p709, %s38, 1
        %s711 = smul.addr %s710, 8
        %s712 = scalar_lea.vmem %s2, %s711
        %p713 = pneg %p111
        %p714 = pneg %p108
        %p715 = scmp.lt.s32.totalorder %s38, 1
        %s716 = scalar_select %p715, %s38, 1
        %s717 = smul.addr %s716, 8
        %s718 = scalar_lea.vmem %s3, %s717
        %p719 = pneg %p137
        %p720 = pneg %p134
        %p721 = pneg %p158
        %p722 = pneg %p155
        %p723 = pneg %p179
        %p724 = pneg %p176
        %p725 = pneg %p200
        %p726 = pneg %p197
        %p727 = pneg %p221
        %p728 = pneg %p218
        %p729 = pneg %p242
        %p730 = pneg %p239
        %p731 = pneg %p263
        %p732 = pneg %p260
        %p733 = pneg %p284
        %p734 = pneg %p281
        %p735 = pneg %p305
        %p736 = pneg %p302
        %p737 = pneg %p326
        %p738 = pneg %p323
        %p739 = pneg %p347
        %p740 = pneg %p344
        %p741 = pneg %p368
        %p742 = pneg %p365
        %p743 = pneg %p389
        %p744 = pneg %p386
        %p745 = pneg %p410
        %p746 = pneg %p407
        %p747 = pneg %p431
        %p748 = pneg %p428
        %p749 = pneg %p452
        %p750 = pneg %p449
        %p751 = pneg %p473
        %p752 = pneg %p470
        %p753 = pneg %p494
        %p754 = pneg %p491
        %p755 = pneg %p515
        %p756 = pneg %p512
        %p757 = pneg %p536
        %p758 = pneg %p533
        %p759 = pneg %p557
        %p760 = pneg %p554
        %p761 = pneg %p583
        %p762 = pneg %p580
        %s763 = sand.u32 %s570, 1
        %s764 = scalar_lea.sflag [#allocation3], %s763
        %s765 = sand.u32 %s570, 1
        %s766 = smul.addr %s765, 8
        %s767 = scalar_lea.vmem [#allocation2], %s766
        %p768 = scmp.lt.s32.totalorder %s38, 1
        %s769 = scalar_select %p768, %s38, 1
        %s770 = smul.addr %s769, 8
        %s771 = scalar_lea.vmem %s0, %s770
        %p772 = scmp.lt.s32.totalorder %s38, 1
        %s773 = scalar_select %p772, %s38, 1
        %s774 = smul.addr %s773, 8
        %s775 = scalar_lea.vmem %s1, %s774
        %p776 = scmp.lt.s32.totalorder %s38, 1
        %s777 = scalar_select %p776, %s38, 1
        %s778 = smul.addr %s777, 8
        %s779 = scalar_lea.vmem %s2, %s778
        %p780 = scmp.lt.s32.totalorder %s38, 1
        %s781 = scalar_select %p780, %s38, 1
        %s782 = smul.addr %s781, 8
        %s783 = scalar_lea.vmem %s3, %s782
        %v785 = vld [vmem:[%s771] sm:$0xff]
        %v786 = vld [vmem:[%s775] sm:$0xff]
        %v787 = vld [vmem:[%s779] sm:$0xff]
        %vm788 = vcmp.eq.s32.totalorder %v787, 0
        %v789 = vsel %vm788, -1e+09, 0.0
        %v790 = vld [vmem:[%s783] sm:$0xff]
        %vm791 = vcmp.eq.s32.totalorder %v790, 0
        %v792 = vsel %vm791, -1e+09, 0.0
        %793 = vadd.xlane.f32.xlu0 %v785
        %v794 = vpop.xlane.xlu0 %793
        %v795 = vrcp.pop 128.0
        %v796 = vmul.f32 128.0, %v795
        %v797 = vsub.f32 1.0, %v796
        %v798 = vmul.f32 %v795, %v797
        %v799 = vadd.f32 %v795, %v798
        %vm800 = vweird.f32 %v795
        %v801 = vsel %vm800, %v795, %v799
        %v802 = vmul.f32 %v794, %v801
        %v803 = vsub.f32 %v785, %v802
        %v804 = vmul.f32 %v803, %v803
        %805 = vadd.xlane.f32.xlu0 %v804
        %v806 = vpop.xlane.xlu0 %805
        %v807 = vrcp.pop 127.0
        %v808 = vmul.f32 127.0, %v807
        %v809 = vsub.f32 1.0, %v808
        %v810 = vmul.f32 %v807, %v809
        %v811 = vadd.f32 %v807, %v810
        %vm812 = vweird.f32 %v807
        %v813 = vsel %vm812, %v807, %v811
        %v814 = vmul.f32 %v806, %v813
        %v815 = vrsqrt.pop %v814
        %v816 = vmul.f32 %v815, %v814
        %v817 = vmul.f32 %v816, %v815
        %v818 = vmul.f32 0.5, %v817
        %v819 = vsub.f32 1.5, %v818
        %v820 = vmul.f32 %v815, %v819
        %v821 = vmul.f32 %v814, %v820
        %vm822 = vcmp.eq.f32.partialorder %v814, inf
        %v823 = vsel %vm822, %v814, %v821
        %vm824 = vcmp.eq.f32.partialorder %v814, 0.0
        %v825 = vand.u32 %v814, 2147483648
        %v826 = vsel %vm824, %v825, %v823
        %v827 = vadd.f32 %v826, 1e-06
        %v828 = vrcp.pop %v827
        %v829 = vmul.f32 %v827, %v828
        %v830 = vsub.f32 1.0, %v829
        %v831 = vmul.f32 %v828, %v830
        %v832 = vadd.f32 %v828, %v831
        %vm833 = vweird.f32 %v827
        %vm834 = vweird.f32 %v828
        %vm835 = vmor %vm833, %vm834
        %v836 = vsel %vm835, %v828, %v832
        %v837 = vand.u32 2147483647, %v827
        %vm838 = vcmp.eq.f32.partialorder %v837, 8.507059e+37
        %v839 = vand.u32 %v827, 2147483648
        %v840 = vor.u32 1.1754944e-38, %v839
        %v841 = vsel %vm838, %v840, %v836
        %v842 = vmul.f32 %v803, %v841
        %v843 = vadd.f32 %v842, 0.0
        %v844 = vpack.c.bf16 %v843, %v843
        %v845 = vld [vmem:[%s4] sm:$0xf]
        %v846 = vld [vmem:[%s4 + $0x4] sm:$0xf]
        %v847 = vld [vmem:[%s4 + $0x8] sm:$0xf]
        %v848 = vld [vmem:[%s4 + $0xc] sm:$0xf]
        %v849 = vld [vmem:[%s4 + $0x10] sm:$0xf]
        %v850 = vld [vmem:[%s4 + $0x14] sm:$0xf]
        %v851 = vld [vmem:[%s4 + $0x18] sm:$0xf]
        %v852 = vld [vmem:[%s4 + $0x1c] sm:$0xf]
        %v853 = vld [vmem:[%s4 + $0x20] sm:$0xf]
        %v854 = vld [vmem:[%s4 + $0x24] sm:$0xf]
        %v855 = vld [vmem:[%s4 + $0x28] sm:$0xf]
        %v856 = vld [vmem:[%s4 + $0x2c] sm:$0xf]
        %v857 = vld [vmem:[%s4 + $0x30] sm:$0xf]
        %v858 = vld [vmem:[%s4 + $0x34] sm:$0xf]
        %v859 = vld [vmem:[%s4 + $0x38] sm:$0xf]
        %v860 = vld [vmem:[%s4 + $0x3c] sm:$0xf]
        %v861 = vld [vmem:[%s4 + $0x40] sm:$0xf]
        %v862 = vld [vmem:[%s4 + $0x44] sm:$0xf]
        %v863 = vld [vmem:[%s4 + $0x48] sm:$0xf]
        %v864 = vld [vmem:[%s4 + $0x4c] sm:$0xf]
        %v865 = vld [vmem:[%s4 + $0x50] sm:$0xf]
        %v866 = vld [vmem:[%s4 + $0x54] sm:$0xf]
        %v867 = vld [vmem:[%s4 + $0x58] sm:$0xf]
        %v868 = vld [vmem:[%s4 + $0x5c] sm:$0xf]
        %v869 = vld [vmem:[%s4 + $0x60] sm:$0xf]
        %v870 = vld [vmem:[%s4 + $0x64] sm:$0xf]
        %v871 = vld [vmem:[%s4 + $0x68] sm:$0xf]
        %v872 = vld [vmem:[%s4 + $0x6c] sm:$0xf]
        %v873 = vld [vmem:[%s4 + $0x70] sm:$0xf]
        %v874 = vld [vmem:[%s4 + $0x74] sm:$0xf]
        %v875 = vld [vmem:[%s4 + $0x78] sm:$0xf]
        %v876 = vld [vmem:[%s4 + $0x7c] sm:$0xf]
        %v877 = vld [vmem:[%s4 + $0x80] sm:$0xf]
        %v878 = vld [vmem:[%s4 + $0x84] sm:$0xf]
        %v879 = vld [vmem:[%s4 + $0x88] sm:$0xf]
        %v880 = vld [vmem:[%s4 + $0x8c] sm:$0xf]
        %v881 = vld [vmem:[%s4 + $0x90] sm:$0xf]
        %v882 = vld [vmem:[%s4 + $0x94] sm:$0xf]
        %v883 = vld [vmem:[%s4 + $0x98] sm:$0xf]
        %v884 = vld [vmem:[%s4 + $0x9c] sm:$0xf]
        %v885 = vld [vmem:[%s4 + $0xa0] sm:$0xf]
        %v886 = vld [vmem:[%s4 + $0xa4] sm:$0xf]
        %v887 = vld [vmem:[%s4 + $0xa8] sm:$0xf]
        %v888 = vld [vmem:[%s4 + $0xac] sm:$0xf]
        %v889 = vld [vmem:[%s4 + $0xb0] sm:$0xf]
        %v890 = vld [vmem:[%s4 + $0xb4] sm:$0xf]
        %v891 = vld [vmem:[%s4 + $0xb8] sm:$0xf]
        %v892 = vld [vmem:[%s4 + $0xbc] sm:$0xf]
        %v893 = vld [vmem:[%s4 + $0xc0] sm:$0xf]
        %v894 = vld [vmem:[%s4 + $0xc4] sm:$0xf]
        %v895 = vld [vmem:[%s4 + $0xc8] sm:$0xf]
        %v896 = vld [vmem:[%s4 + $0xcc] sm:$0xf]
        %v897 = vld [vmem:[%s4 + $0xd0] sm:$0xf]
        %v898 = vld [vmem:[%s4 + $0xd4] sm:$0xf]
        %v899 = vld [vmem:[%s4 + $0xd8] sm:$0xf]
        %v900 = vld [vmem:[%s4 + $0xdc] sm:$0xf]
        %v901 = vld [vmem:[%s4 + $0xe0] sm:$0xf]
        %v902 = vld [vmem:[%s4 + $0xe4] sm:$0xf]
        %v903 = vld [vmem:[%s4 + $0xe8] sm:$0xf]
        %v904 = vld [vmem:[%s4 + $0xec] sm:$0xf]
        %v905 = vld [vmem:[%s4 + $0xf0] sm:$0xf]
        %v906 = vld [vmem:[%s4 + $0xf4] sm:$0xf]
        %v907 = vld [vmem:[%s4 + $0xf8] sm:$0xf]
        %v908 = vld [vmem:[%s4 + $0xfc] sm:$0xf]
        %v909 = vld [vmem:[%s5] sm:$0x1]
        %v910 = vld [vmem:[%s5 + $0x1] sm:$0x1]
        %v911 = vld [vmem:[%s5 + $0x2] sm:$0x1]
        %v912 = vld [vmem:[%s5 + $0x3] sm:$0x1]
        %v917 = vperm.slane %v909, 0
        %v918 = vperm.slane %v910, 0
        %v919 = vperm.slane %v911, 0
        %v920 = vperm.slane %v912, 0
        %v941 = vunpack.c.l.b16 %v845
        %v942 = vunpack.c.l.b16 %v846
        %v943 = vunpack.c.l.b16 %v847
        %v944 = vunpack.c.l.b16 %v848
        %v945 = vunpack.c.l.b16 %v849
        %v946 = vunpack.c.l.b16 %v850
        %v947 = vunpack.c.l.b16 %v851
        %v948 = vunpack.c.l.b16 %v852
        %v949 = vunpack.c.l.b16 %v853
        %v950 = vunpack.c.l.b16 %v854
        %v951 = vunpack.c.l.b16 %v855
        %v952 = vunpack.c.l.b16 %v856
        %v953 = vunpack.c.l.b16 %v857
        %v954 = vunpack.c.l.b16 %v858
        %v955 = vunpack.c.l.b16 %v859
        %v956 = vunpack.c.l.b16 %v860
        %v957 = vpack.c.b16 %v942, %v941
        %v958 = vpack.c.b16 %v944, %v943
        %v959 = vpack.c.b16 %v946, %v945
        %v960 = vpack.c.b16 %v948, %v947
        %v961 = vpack.c.b16 %v950, %v949
        %v962 = vpack.c.b16 %v952, %v951
        %v963 = vpack.c.b16 %v954, %v953
        %v964 = vpack.c.b16 %v956, %v955
        %973 = vmatpush.bf16.msra.mxu0 %v964
        %974 = vmatpush.bf16.msra.mxu0 %v963
        %975 = vmatpush.bf16.msra.mxu0 %v962
        %976 = vmatpush.bf16.msra.mxu0 %v961
        %977 = vmatpush.bf16.msra.mxu0 %v960
        %978 = vmatpush.bf16.msra.mxu0 %v959
        %979 = vmatpush.bf16.msra.mxu0 %v958
        %980 = vmatpush.bf16.msra.mxu0 %v957
        %981 = vmatmul.bf16.gmra.mxu0 %v844
        %v982 = vpop.f32.mrf.mxu0
        %v983 = vadd.f32 %v917, %v982
        %v984 = vpop.f32.mrf.mxu0
        %985 = vdwg.mxu0
        %v1002 = vunpack.c.l.b16 %v861
        %v1003 = vunpack.c.l.b16 %v862
        %v1004 = vunpack.c.l.b16 %v863
        %v1005 = vunpack.c.l.b16 %v864
        %v1006 = vunpack.c.l.b16 %v865
        %v1007 = vunpack.c.l.b16 %v866
        %v1008 = vunpack.c.l.b16 %v867
        %v1009 = vunpack.c.l.b16 %v868
        %v1010 = vunpack.c.l.b16 %v869
        %v1011 = vunpack.c.l.b16 %v870
        %v1012 = vunpack.c.l.b16 %v871
        %v1013 = vunpack.c.l.b16 %v872
        %v1014 = vunpack.c.l.b16 %v873
        %v1015 = vunpack.c.l.b16 %v874
        %v1016 = vunpack.c.l.b16 %v875
        %v1017 = vunpack.c.l.b16 %v876
        %v1018 = vpack.c.b16 %v1003, %v1002
        %v1019 = vpack.c.b16 %v1005, %v1004
        %v1020 = vpack.c.b16 %v1007, %v1006
        %v1021 = vpack.c.b16 %v1009, %v1008
        %v1022 = vpack.c.b16 %v1011, %v1010
        %v1023 = vpack.c.b16 %v1013, %v1012
        %v1024 = vpack.c.b16 %v1015, %v1014
        %v1025 = vpack.c.b16 %v1017, %v1016
        %1034 = vmatpush.bf16.msra.mxu0 %v1025
        %1035 = vmatpush.bf16.msra.mxu0 %v1024
        %1036 = vmatpush.bf16.msra.mxu0 %v1023
        %1037 = vmatpush.bf16.msra.mxu0 %v1022
        %1038 = vmatpush.bf16.msra.mxu0 %v1021
        %1039 = vmatpush.bf16.msra.mxu0 %v1020
        %1040 = vmatpush.bf16.msra.mxu0 %v1019
        %1041 = vmatpush.bf16.msra.mxu0 %v1018
        %1042 = vmatmul.bf16.gmra.mxu0 %v844
        %v1043 = vpop.f32.mrf.mxu0
        %v1044 = vadd.f32 %v918, %v1043
        %v1045 = vpop.f32.mrf.mxu0
        %1046 = vdwg.mxu0
        %v1063 = vunpack.c.l.b16 %v877
        %v1064 = vunpack.c.l.b16 %v878
        %v1065 = vunpack.c.l.b16 %v879
        %v1066 = vunpack.c.l.b16 %v880
        %v1067 = vunpack.c.l.b16 %v881
        %v1068 = vunpack.c.l.b16 %v882
        %v1069 = vunpack.c.l.b16 %v883
        %v1070 = vunpack.c.l.b16 %v884
        %v1071 = vunpack.c.l.b16 %v885
        %v1072 = vunpack.c.l.b16 %v886
        %v1073 = vunpack.c.l.b16 %v887
        %v1074 = vunpack.c.l.b16 %v888
        %v1075 = vunpack.c.l.b16 %v889
        %v1076 = vunpack.c.l.b16 %v890
        %v1077 = vunpack.c.l.b16 %v891
        %v1078 = vunpack.c.l.b16 %v892
        %v1079 = vpack.c.b16 %v1064, %v1063
        %v1080 = vpack.c.b16 %v1066, %v1065
        %v1081 = vpack.c.b16 %v1068, %v1067
        %v1082 = vpack.c.b16 %v1070, %v1069
        %v1083 = vpack.c.b16 %v1072, %v1071
        %v1084 = vpack.c.b16 %v1074, %v1073
        %v1085 = vpack.c.b16 %v1076, %v1075
        %v1086 = vpack.c.b16 %v1078, %v1077
        %1095 = vmatpush.bf16.msra.mxu0 %v1086
        %1096 = vmatpush.bf16.msra.mxu0 %v1085
        %1097 = vmatpush.bf16.msra.mxu0 %v1084
        %1098 = vmatpush.bf16.msra.mxu0 %v1083
        %1099 = vmatpush.bf16.msra.mxu0 %v1082
        %1100 = vmatpush.bf16.msra.mxu0 %v1081
        %1101 = vmatpush.bf16.msra.mxu0 %v1080
        %1102 = vmatpush.bf16.msra.mxu0 %v1079
        %1103 = vmatmul.bf16.gmra.mxu0 %v844
        %v1104 = vpop.f32.mrf.mxu0
        %v1105 = vadd.f32 %v919, %v1104
        %v1106 = vpop.f32.mrf.mxu0
        %1107 = vdwg.mxu0
        %v1124 = vunpack.c.l.b16 %v893
        %v1125 = vunpack.c.l.b16 %v894
        %v1126 = vunpack.c.l.b16 %v895
        %v1127 = vunpack.c.l.b16 %v896
        %v1128 = vunpack.c.l.b16 %v897
        %v1129 = vunpack.c.l.b16 %v898
        %v1130 = vunpack.c.l.b16 %v899
        %v1131 = vunpack.c.l.b16 %v900
        %v1132 = vunpack.c.l.b16 %v901
        %v1133 = vunpack.c.l.b16 %v902
        %v1134 = vunpack.c.l.b16 %v903
        %v1135 = vunpack.c.l.b16 %v904
        %v1136 = vunpack.c.l.b16 %v905
        %v1137 = vunpack.c.l.b16 %v906
        %v1138 = vunpack.c.l.b16 %v907
        %v1139 = vunpack.c.l.b16 %v908
        %v1140 = vpack.c.b16 %v1125, %v1124
        %v1141 = vpack.c.b16 %v1127, %v1126
        %v1142 = vpack.c.b16 %v1129, %v1128
        %v1143 = vpack.c.b16 %v1131, %v1130
        %v1144 = vpack.c.b16 %v1133, %v1132
        %v1145 = vpack.c.b16 %v1135, %v1134
        %v1146 = vpack.c.b16 %v1137, %v1136
        %v1147 = vpack.c.b16 %v1139, %v1138
        %1156 = vmatpush.bf16.msra.mxu0 %v1147
        %1157 = vmatpush.bf16.msra.mxu0 %v1146
        %1158 = vmatpush.bf16.msra.mxu0 %v1145
        %1159 = vmatpush.bf16.msra.mxu0 %v1144
        %1160 = vmatpush.bf16.msra.mxu0 %v1143
        %1161 = vmatpush.bf16.msra.mxu0 %v1142
        %1162 = vmatpush.bf16.msra.mxu0 %v1141
        %1163 = vmatpush.bf16.msra.mxu0 %v1140
        %1164 = vmatmul.bf16.gmra.mxu0 %v844
        %v1165 = vpop.f32.mrf.mxu0
        %v1166 = vadd.f32 %v920, %v1165
        %v1167 = vpop.f32.mrf.mxu0
        %1168 = vdwg.mxu0
        %v1169 = vld [vmem:[%s6] sm:$0xf]
        %v1170 = vld [vmem:[%s6 + $0x4] sm:$0xf]
        %v1171 = vld [vmem:[%s6 + $0x8] sm:$0xf]
        %v1172 = vld [vmem:[%s6 + $0xc] sm:$0xf]
        %v1173 = vld [vmem:[%s6 + $0x10] sm:$0xf]
        %v1174 = vld [vmem:[%s6 + $0x14] sm:$0xf]
        %v1175 = vld [vmem:[%s6 + $0x18] sm:$0xf]
        %v1176 = vld [vmem:[%s6 + $0x1c] sm:$0xf]
        %v1177 = vld [vmem:[%s6 + $0x20] sm:$0xf]
        %v1178 = vld [vmem:[%s6 + $0x24] sm:$0xf]
        %v1179 = vld [vmem:[%s6 + $0x28] sm:$0xf]
        %v1180 = vld [vmem:[%s6 + $0x2c] sm:$0xf]
        %v1181 = vld [vmem:[%s6 + $0x30] sm:$0xf]
        %v1182 = vld [vmem:[%s6 + $0x34] sm:$0xf]
        %v1183 = vld [vmem:[%s6 + $0x38] sm:$0xf]
        %v1184 = vld [vmem:[%s6 + $0x3c] sm:$0xf]
        %v1185 = vld [vmem:[%s6 + $0x40] sm:$0xf]
        %v1186 = vld [vmem:[%s6 + $0x44] sm:$0xf]
        %v1187 = vld [vmem:[%s6 + $0x48] sm:$0xf]
        %v1188 = vld [vmem:[%s6 + $0x4c] sm:$0xf]
        %v1189 = vld [vmem:[%s6 + $0x50] sm:$0xf]
        %v1190 = vld [vmem:[%s6 + $0x54] sm:$0xf]
        %v1191 = vld [vmem:[%s6 + $0x58] sm:$0xf]
        %v1192 = vld [vmem:[%s6 + $0x5c] sm:$0xf]
        %v1193 = vld [vmem:[%s6 + $0x60] sm:$0xf]
        %v1194 = vld [vmem:[%s6 + $0x64] sm:$0xf]
        %v1195 = vld [vmem:[%s6 + $0x68] sm:$0xf]
        %v1196 = vld [vmem:[%s6 + $0x6c] sm:$0xf]
        %v1197 = vld [vmem:[%s6 + $0x70] sm:$0xf]
        %v1198 = vld [vmem:[%s6 + $0x74] sm:$0xf]
        %v1199 = vld [vmem:[%s6 + $0x78] sm:$0xf]
        %v1200 = vld [vmem:[%s6 + $0x7c] sm:$0xf]
        %v1201 = vld [vmem:[%s6 + $0x80] sm:$0xf]
        %v1202 = vld [vmem:[%s6 + $0x84] sm:$0xf]
        %v1203 = vld [vmem:[%s6 + $0x88] sm:$0xf]
        %v1204 = vld [vmem:[%s6 + $0x8c] sm:$0xf]
        %v1205 = vld [vmem:[%s6 + $0x90] sm:$0xf]
        %v1206 = vld [vmem:[%s6 + $0x94] sm:$0xf]
        %v1207 = vld [vmem:[%s6 + $0x98] sm:$0xf]
        %v1208 = vld [vmem:[%s6 + $0x9c] sm:$0xf]
        %v1209 = vld [vmem:[%s6 + $0xa0] sm:$0xf]
        %v1210 = vld [vmem:[%s6 + $0xa4] sm:$0xf]
        %v1211 = vld [vmem:[%s6 + $0xa8] sm:$0xf]
        %v1212 = vld [vmem:[%s6 + $0xac] sm:$0xf]
        %v1213 = vld [vmem:[%s6 + $0xb0] sm:$0xf]
        %v1214 = vld [vmem:[%s6 + $0xb4] sm:$0xf]
        %v1215 = vld [vmem:[%s6 + $0xb8] sm:$0xf]
        %v1216 = vld [vmem:[%s6 + $0xbc] sm:$0xf]
        %v1217 = vld [vmem:[%s6 + $0xc0] sm:$0xf]
        %v1218 = vld [vmem:[%s6 + $0xc4] sm:$0xf]
        %v1219 = vld [vmem:[%s6 + $0xc8] sm:$0xf]
        %v1220 = vld [vmem:[%s6 + $0xcc] sm:$0xf]
        %v1221 = vld [vmem:[%s6 + $0xd0] sm:$0xf]
        %v1222 = vld [vmem:[%s6 + $0xd4] sm:$0xf]
        %v1223 = vld [vmem:[%s6 + $0xd8] sm:$0xf]
        %v1224 = vld [vmem:[%s6 + $0xdc] sm:$0xf]
        %v1225 = vld [vmem:[%s6 + $0xe0] sm:$0xf]
        %v1226 = vld [vmem:[%s6 + $0xe4] sm:$0xf]
        %v1227 = vld [vmem:[%s6 + $0xe8] sm:$0xf]
        %v1228 = vld [vmem:[%s6 + $0xec] sm:$0xf]
        %v1229 = vld [vmem:[%s6 + $0xf0] sm:$0xf]
        %v1230 = vld [vmem:[%s6 + $0xf4] sm:$0xf]
        %v1231 = vld [vmem:[%s6 + $0xf8] sm:$0xf]
        %v1232 = vld [vmem:[%s6 + $0xfc] sm:$0xf]
        %v1233 = vld [vmem:[%s7] sm:$0x1]
        %v1234 = vld [vmem:[%s7 + $0x1] sm:$0x1]
        %v1235 = vld [vmem:[%s7 + $0x2] sm:$0x1]
        %v1236 = vld [vmem:[%s7 + $0x3] sm:$0x1]
        %v1241 = vperm.slane %v1233, 0
        %v1242 = vperm.slane %v1234, 0
        %v1243 = vperm.slane %v1235, 0
        %v1244 = vperm.slane %v1236, 0
        %v1265 = vunpack.c.l.b16 %v1169
        %v1266 = vunpack.c.l.b16 %v1170
        %v1267 = vunpack.c.l.b16 %v1171
        %v1268 = vunpack.c.l.b16 %v1172
        %v1269 = vunpack.c.l.b16 %v1173
        %v1270 = vunpack.c.l.b16 %v1174
        %v1271 = vunpack.c.l.b16 %v1175
        %v1272 = vunpack.c.l.b16 %v1176
        %v1273 = vunpack.c.l.b16 %v1177
        %v1274 = vunpack.c.l.b16 %v1178
        %v1275 = vunpack.c.l.b16 %v1179
        %v1276 = vunpack.c.l.b16 %v1180
        %v1277 = vunpack.c.l.b16 %v1181
        %v1278 = vunpack.c.l.b16 %v1182
        %v1279 = vunpack.c.l.b16 %v1183
        %v1280 = vunpack.c.l.b16 %v1184
        %v1281 = vpack.c.b16 %v1266, %v1265
        %v1282 = vpack.c.b16 %v1268, %v1267
        %v1283 = vpack.c.b16 %v1270, %v1269
        %v1284 = vpack.c.b16 %v1272, %v1271
        %v1285 = vpack.c.b16 %v1274, %v1273
        %v1286 = vpack.c.b16 %v1276, %v1275
        %v1287 = vpack.c.b16 %v1278, %v1277
        %v1288 = vpack.c.b16 %v1280, %v1279
        %1297 = vmatpush.bf16.msra.mxu0 %v1288
        %1298 = vmatpush.bf16.msra.mxu0 %v1287
        %1299 = vmatpush.bf16.msra.mxu0 %v1286
        %1300 = vmatpush.bf16.msra.mxu0 %v1285
        %1301 = vmatpush.bf16.msra.mxu0 %v1284
        %1302 = vmatpush.bf16.msra.mxu0 %v1283
        %1303 = vmatpush.bf16.msra.mxu0 %v1282
        %1304 = vmatpush.bf16.msra.mxu0 %v1281
        %1305 = vmatmul.bf16.gmra.mxu0 %v844
        %v1306 = vpop.f32.mrf.mxu0
        %v1307 = vadd.f32 %v1241, %v1306
        %v1308 = vpop.f32.mrf.mxu0
        %1309 = vdwg.mxu0
        %v1326 = vunpack.c.l.b16 %v1185
        %v1327 = vunpack.c.l.b16 %v1186
        %v1328 = vunpack.c.l.b16 %v1187
        %v1329 = vunpack.c.l.b16 %v1188
        %v1330 = vunpack.c.l.b16 %v1189
        %v1331 = vunpack.c.l.b16 %v1190
        %v1332 = vunpack.c.l.b16 %v1191
        %v1333 = vunpack.c.l.b16 %v1192
        %v1334 = vunpack.c.l.b16 %v1193
        %v1335 = vunpack.c.l.b16 %v1194
        %v1336 = vunpack.c.l.b16 %v1195
        %v1337 = vunpack.c.l.b16 %v1196
        %v1338 = vunpack.c.l.b16 %v1197
        %v1339 = vunpack.c.l.b16 %v1198
        %v1340 = vunpack.c.l.b16 %v1199
        %v1341 = vunpack.c.l.b16 %v1200
        %v1342 = vpack.c.b16 %v1327, %v1326
        %v1343 = vpack.c.b16 %v1329, %v1328
        %v1344 = vpack.c.b16 %v1331, %v1330
        %v1345 = vpack.c.b16 %v1333, %v1332
        %v1346 = vpack.c.b16 %v1335, %v1334
        %v1347 = vpack.c.b16 %v1337, %v1336
        %v1348 = vpack.c.b16 %v1339, %v1338
        %v1349 = vpack.c.b16 %v1341, %v1340
        %1358 = vmatpush.bf16.msra.mxu0 %v1349
        %1359 = vmatpush.bf16.msra.mxu0 %v1348
        %1360 = vmatpush.bf16.msra.mxu0 %v1347
        %1361 = vmatpush.bf16.msra.mxu0 %v1346
        %1362 = vmatpush.bf16.msra.mxu0 %v1345
        %1363 = vmatpush.bf16.msra.mxu0 %v1344
        %1364 = vmatpush.bf16.msra.mxu0 %v1343
        %1365 = vmatpush.bf16.msra.mxu0 %v1342
        %1366 = vmatmul.bf16.gmra.mxu0 %v844
        %v1367 = vpop.f32.mrf.mxu0
        %v1368 = vadd.f32 %v1242, %v1367
        %v1369 = vpop.f32.mrf.mxu0
        %1370 = vdwg.mxu0
        %v1387 = vunpack.c.l.b16 %v1201
        %v1388 = vunpack.c.l.b16 %v1202
        %v1389 = vunpack.c.l.b16 %v1203
        %v1390 = vunpack.c.l.b16 %v1204
        %v1391 = vunpack.c.l.b16 %v1205
        %v1392 = vunpack.c.l.b16 %v1206
        %v1393 = vunpack.c.l.b16 %v1207
        %v1394 = vunpack.c.l.b16 %v1208
        %v1395 = vunpack.c.l.b16 %v1209
        %v1396 = vunpack.c.l.b16 %v1210
        %v1397 = vunpack.c.l.b16 %v1211
        %v1398 = vunpack.c.l.b16 %v1212
        %v1399 = vunpack.c.l.b16 %v1213
        %v1400 = vunpack.c.l.b16 %v1214
        %v1401 = vunpack.c.l.b16 %v1215
        %v1402 = vunpack.c.l.b16 %v1216
        %v1403 = vpack.c.b16 %v1388, %v1387
        %v1404 = vpack.c.b16 %v1390, %v1389
        %v1405 = vpack.c.b16 %v1392, %v1391
        %v1406 = vpack.c.b16 %v1394, %v1393
        %v1407 = vpack.c.b16 %v1396, %v1395
        %v1408 = vpack.c.b16 %v1398, %v1397
        %v1409 = vpack.c.b16 %v1400, %v1399
        %v1410 = vpack.c.b16 %v1402, %v1401
        %1419 = vmatpush.bf16.msra.mxu0 %v1410
        %1420 = vmatpush.bf16.msra.mxu0 %v1409
        %1421 = vmatpush.bf16.msra.mxu0 %v1408
        %1422 = vmatpush.bf16.msra.mxu0 %v1407
        %1423 = vmatpush.bf16.msra.mxu0 %v1406
        %1424 = vmatpush.bf16.msra.mxu0 %v1405
        %1425 = vmatpush.bf16.msra.mxu0 %v1404
        %1426 = vmatpush.bf16.msra.mxu0 %v1403
        %1427 = vmatmul.bf16.gmra.mxu0 %v844
        %v1428 = vpop.f32.mrf.mxu0
        %v1429 = vadd.f32 %v1243, %v1428
        %v1430 = vpop.f32.mrf.mxu0
        %1431 = vdwg.mxu0
        %v1448 = vunpack.c.l.b16 %v1217
        %v1449 = vunpack.c.l.b16 %v1218
        %v1450 = vunpack.c.l.b16 %v1219
        %v1451 = vunpack.c.l.b16 %v1220
        %v1452 = vunpack.c.l.b16 %v1221
        %v1453 = vunpack.c.l.b16 %v1222
        %v1454 = vunpack.c.l.b16 %v1223
        %v1455 = vunpack.c.l.b16 %v1224
        %v1456 = vunpack.c.l.b16 %v1225
        %v1457 = vunpack.c.l.b16 %v1226
        %v1458 = vunpack.c.l.b16 %v1227
        %v1459 = vunpack.c.l.b16 %v1228
        %v1460 = vunpack.c.l.b16 %v1229
        %v1461 = vunpack.c.l.b16 %v1230
        %v1462 = vunpack.c.l.b16 %v1231
        %v1463 = vunpack.c.l.b16 %v1232
        %v1464 = vpack.c.b16 %v1449, %v1448
        %v1465 = vpack.c.b16 %v1451, %v1450
        %v1466 = vpack.c.b16 %v1453, %v1452
        %v1467 = vpack.c.b16 %v1455, %v1454
        %v1468 = vpack.c.b16 %v1457, %v1456
        %v1469 = vpack.c.b16 %v1459, %v1458
        %v1470 = vpack.c.b16 %v1461, %v1460
        %v1471 = vpack.c.b16 %v1463, %v1462
        %1480 = vmatpush.bf16.msra.mxu0 %v1471
        %1481 = vmatpush.bf16.msra.mxu0 %v1470
        %1482 = vmatpush.bf16.msra.mxu0 %v1469
        %1483 = vmatpush.bf16.msra.mxu0 %v1468
        %1484 = vmatpush.bf16.msra.mxu0 %v1467
        %1485 = vmatpush.bf16.msra.mxu0 %v1466
        %1486 = vmatpush.bf16.msra.mxu0 %v1465
        %1487 = vmatpush.bf16.msra.mxu0 %v1464
        %1488 = vmatmul.bf16.gmra.mxu0 %v844
        %v1489 = vpop.f32.mrf.mxu0
        %v1490 = vadd.f32 %v1244, %v1489
        %v1491 = vpop.f32.mrf.mxu0
        %1492 = vdwg.mxu0
        %v1493 = vld [vmem:[%s8] sm:$0xf]
        %v1494 = vld [vmem:[%s8 + $0x4] sm:$0xf]
        %v1495 = vld [vmem:[%s8 + $0x8] sm:$0xf]
        %v1496 = vld [vmem:[%s8 + $0xc] sm:$0xf]
        %v1497 = vld [vmem:[%s8 + $0x10] sm:$0xf]
        %v1498 = vld [vmem:[%s8 + $0x14] sm:$0xf]
        %v1499 = vld [vmem:[%s8 + $0x18] sm:$0xf]
        %v1500 = vld [vmem:[%s8 + $0x1c] sm:$0xf]
        %v1501 = vld [vmem:[%s8 + $0x20] sm:$0xf]
        %v1502 = vld [vmem:[%s8 + $0x24] sm:$0xf]
        %v1503 = vld [vmem:[%s8 + $0x28] sm:$0xf]
        %v1504 = vld [vmem:[%s8 + $0x2c] sm:$0xf]
        %v1505 = vld [vmem:[%s8 + $0x30] sm:$0xf]
        %v1506 = vld [vmem:[%s8 + $0x34] sm:$0xf]
        %v1507 = vld [vmem:[%s8 + $0x38] sm:$0xf]
        %v1508 = vld [vmem:[%s8 + $0x3c] sm:$0xf]
        %v1509 = vld [vmem:[%s8 + $0x40] sm:$0xf]
        %v1510 = vld [vmem:[%s8 + $0x44] sm:$0xf]
        %v1511 = vld [vmem:[%s8 + $0x48] sm:$0xf]
        %v1512 = vld [vmem:[%s8 + $0x4c] sm:$0xf]
        %v1513 = vld [vmem:[%s8 + $0x50] sm:$0xf]
        %v1514 = vld [vmem:[%s8 + $0x54] sm:$0xf]
        %v1515 = vld [vmem:[%s8 + $0x58] sm:$0xf]
        %v1516 = vld [vmem:[%s8 + $0x5c] sm:$0xf]
        %v1517 = vld [vmem:[%s8 + $0x60] sm:$0xf]
        %v1518 = vld [vmem:[%s8 + $0x64] sm:$0xf]
        %v1519 = vld [vmem:[%s8 + $0x68] sm:$0xf]
        %v1520 = vld [vmem:[%s8 + $0x6c] sm:$0xf]
        %v1521 = vld [vmem:[%s8 + $0x70] sm:$0xf]
        %v1522 = vld [vmem:[%s8 + $0x74] sm:$0xf]
        %v1523 = vld [vmem:[%s8 + $0x78] sm:$0xf]
        %v1524 = vld [vmem:[%s8 + $0x7c] sm:$0xf]
        %v1525 = vld [vmem:[%s8 + $0x80] sm:$0xf]
        %v1526 = vld [vmem:[%s8 + $0x84] sm:$0xf]
        %v1527 = vld [vmem:[%s8 + $0x88] sm:$0xf]
        %v1528 = vld [vmem:[%s8 + $0x8c] sm:$0xf]
        %v1529 = vld [vmem:[%s8 + $0x90] sm:$0xf]
        %v1530 = vld [vmem:[%s8 + $0x94] sm:$0xf]
        %v1531 = vld [vmem:[%s8 + $0x98] sm:$0xf]
        %v1532 = vld [vmem:[%s8 + $0x9c] sm:$0xf]
        %v1533 = vld [vmem:[%s8 + $0xa0] sm:$0xf]
        %v1534 = vld [vmem:[%s8 + $0xa4] sm:$0xf]
        %v1535 = vld [vmem:[%s8 + $0xa8] sm:$0xf]
        %v1536 = vld [vmem:[%s8 + $0xac] sm:$0xf]
        %v1537 = vld [vmem:[%s8 + $0xb0] sm:$0xf]
        %v1538 = vld [vmem:[%s8 + $0xb4] sm:$0xf]
        %v1539 = vld [vmem:[%s8 + $0xb8] sm:$0xf]
        %v1540 = vld [vmem:[%s8 + $0xbc] sm:$0xf]
        %v1541 = vld [vmem:[%s8 + $0xc0] sm:$0xf]
        %v1542 = vld [vmem:[%s8 + $0xc4] sm:$0xf]
        %v1543 = vld [vmem:[%s8 + $0xc8] sm:$0xf]
        %v1544 = vld [vmem:[%s8 + $0xcc] sm:$0xf]
        %v1545 = vld [vmem:[%s8 + $0xd0] sm:$0xf]
        %v1546 = vld [vmem:[%s8 + $0xd4] sm:$0xf]
        %v1547 = vld [vmem:[%s8 + $0xd8] sm:$0xf]
        %v1548 = vld [vmem:[%s8 + $0xdc] sm:$0xf]
        %v1549 = vld [vmem:[%s8 + $0xe0] sm:$0xf]
        %v1550 = vld [vmem:[%s8 + $0xe4] sm:$0xf]
        %v1551 = vld [vmem:[%s8 + $0xe8] sm:$0xf]
        %v1552 = vld [vmem:[%s8 + $0xec] sm:$0xf]
        %v1553 = vld [vmem:[%s8 + $0xf0] sm:$0xf]
        %v1554 = vld [vmem:[%s8 + $0xf4] sm:$0xf]
        %v1555 = vld [vmem:[%s8 + $0xf8] sm:$0xf]
        %v1556 = vld [vmem:[%s8 + $0xfc] sm:$0xf]
        %v1557 = vld [vmem:[%s9] sm:$0x1]
        %v1558 = vld [vmem:[%s9 + $0x1] sm:$0x1]
        %v1559 = vld [vmem:[%s9 + $0x2] sm:$0x1]
        %v1560 = vld [vmem:[%s9 + $0x3] sm:$0x1]
        %v1565 = vperm.slane %v1557, 0
        %v1566 = vperm.slane %v1558, 0
        %v1567 = vperm.slane %v1559, 0
        %v1568 = vperm.slane %v1560, 0
        %v1589 = vunpack.c.l.b16 %v1493
        %v1590 = vunpack.c.l.b16 %v1494
        %v1591 = vunpack.c.l.b16 %v1495
        %v1592 = vunpack.c.l.b16 %v1496
        %v1593 = vunpack.c.l.b16 %v1497
        %v1594 = vunpack.c.l.b16 %v1498
        %v1595 = vunpack.c.l.b16 %v1499
        %v1596 = vunpack.c.l.b16 %v1500
        %v1597 = vunpack.c.l.b16 %v1501
        %v1598 = vunpack.c.l.b16 %v1502
        %v1599 = vunpack.c.l.b16 %v1503
        %v1600 = vunpack.c.l.b16 %v1504
        %v1601 = vunpack.c.l.b16 %v1505
        %v1602 = vunpack.c.l.b16 %v1506
        %v1603 = vunpack.c.l.b16 %v1507
        %v1604 = vunpack.c.l.b16 %v1508
        %v1605 = vpack.c.b16 %v1590, %v1589
        %v1606 = vpack.c.b16 %v1592, %v1591
        %v1607 = vpack.c.b16 %v1594, %v1593
        %v1608 = vpack.c.b16 %v1596, %v1595
        %v1609 = vpack.c.b16 %v1598, %v1597
        %v1610 = vpack.c.b16 %v1600, %v1599
        %v1611 = vpack.c.b16 %v1602, %v1601
        %v1612 = vpack.c.b16 %v1604, %v1603
        %1621 = vmatpush.bf16.msra.mxu0 %v1612
        %1622 = vmatpush.bf16.msra.mxu0 %v1611
        %1623 = vmatpush.bf16.msra.mxu0 %v1610
        %1624 = vmatpush.bf16.msra.mxu0 %v1609
        %1625 = vmatpush.bf16.msra.mxu0 %v1608
        %1626 = vmatpush.bf16.msra.mxu0 %v1607
        %1627 = vmatpush.bf16.msra.mxu0 %v1606
        %1628 = vmatpush.bf16.msra.mxu0 %v1605
        %1629 = vmatmul.bf16.gmra.mxu0 %v844
        %v1630 = vpop.f32.mrf.mxu0
        %v1631 = vadd.f32 %v1565, %v1630
        %v1632 = vpop.f32.mrf.mxu0
        %1633 = vdwg.mxu0
        %v1650 = vunpack.c.l.b16 %v1509
        %v1651 = vunpack.c.l.b16 %v1510
        %v1652 = vunpack.c.l.b16 %v1511
        %v1653 = vunpack.c.l.b16 %v1512
        %v1654 = vunpack.c.l.b16 %v1513
        %v1655 = vunpack.c.l.b16 %v1514
        %v1656 = vunpack.c.l.b16 %v1515
        %v1657 = vunpack.c.l.b16 %v1516
        %v1658 = vunpack.c.l.b16 %v1517
        %v1659 = vunpack.c.l.b16 %v1518
        %v1660 = vunpack.c.l.b16 %v1519
        %v1661 = vunpack.c.l.b16 %v1520
        %v1662 = vunpack.c.l.b16 %v1521
        %v1663 = vunpack.c.l.b16 %v1522
        %v1664 = vunpack.c.l.b16 %v1523
        %v1665 = vunpack.c.l.b16 %v1524
        %v1666 = vpack.c.b16 %v1651, %v1650
        %v1667 = vpack.c.b16 %v1653, %v1652
        %v1668 = vpack.c.b16 %v1655, %v1654
        %v1669 = vpack.c.b16 %v1657, %v1656
        %v1670 = vpack.c.b16 %v1659, %v1658
        %v1671 = vpack.c.b16 %v1661, %v1660
        %v1672 = vpack.c.b16 %v1663, %v1662
        %v1673 = vpack.c.b16 %v1665, %v1664
        %1682 = vmatpush.bf16.msra.mxu0 %v1673
        %1683 = vmatpush.bf16.msra.mxu0 %v1672
        %1684 = vmatpush.bf16.msra.mxu0 %v1671
        %1685 = vmatpush.bf16.msra.mxu0 %v1670
        %1686 = vmatpush.bf16.msra.mxu0 %v1669
        %1687 = vmatpush.bf16.msra.mxu0 %v1668
        %1688 = vmatpush.bf16.msra.mxu0 %v1667
        %1689 = vmatpush.bf16.msra.mxu0 %v1666
        %1690 = vmatmul.bf16.gmra.mxu0 %v844
        %v1691 = vpop.f32.mrf.mxu0
        %v1692 = vadd.f32 %v1566, %v1691
        %v1693 = vpop.f32.mrf.mxu0
        %1694 = vdwg.mxu0
        %v1711 = vunpack.c.l.b16 %v1525
        %v1712 = vunpack.c.l.b16 %v1526
        %v1713 = vunpack.c.l.b16 %v1527
        %v1714 = vunpack.c.l.b16 %v1528
        %v1715 = vunpack.c.l.b16 %v1529
        %v1716 = vunpack.c.l.b16 %v1530
        %v1717 = vunpack.c.l.b16 %v1531
        %v1718 = vunpack.c.l.b16 %v1532
        %v1719 = vunpack.c.l.b16 %v1533
        %v1720 = vunpack.c.l.b16 %v1534
        %v1721 = vunpack.c.l.b16 %v1535
        %v1722 = vunpack.c.l.b16 %v1536
        %v1723 = vunpack.c.l.b16 %v1537
        %v1724 = vunpack.c.l.b16 %v1538
        %v1725 = vunpack.c.l.b16 %v1539
        %v1726 = vunpack.c.l.b16 %v1540
        %v1727 = vpack.c.b16 %v1712, %v1711
        %v1728 = vpack.c.b16 %v1714, %v1713
        %v1729 = vpack.c.b16 %v1716, %v1715
        %v1730 = vpack.c.b16 %v1718, %v1717
        %v1731 = vpack.c.b16 %v1720, %v1719
        %v1732 = vpack.c.b16 %v1722, %v1721
        %v1733 = vpack.c.b16 %v1724, %v1723
        %v1734 = vpack.c.b16 %v1726, %v1725
        %1743 = vmatpush.bf16.msra.mxu0 %v1734
        %1744 = vmatpush.bf16.msra.mxu0 %v1733
        %1745 = vmatpush.bf16.msra.mxu0 %v1732
        %1746 = vmatpush.bf16.msra.mxu0 %v1731
        %1747 = vmatpush.bf16.msra.mxu0 %v1730
        %1748 = vmatpush.bf16.msra.mxu0 %v1729
        %1749 = vmatpush.bf16.msra.mxu0 %v1728
        %1750 = vmatpush.bf16.msra.mxu0 %v1727
        %1751 = vmatmul.bf16.gmra.mxu0 %v844
        %v1752 = vpop.f32.mrf.mxu0
        %v1753 = vadd.f32 %v1567, %v1752
        %v1754 = vpop.f32.mrf.mxu0
        %1755 = vdwg.mxu0
        %v1772 = vunpack.c.l.b16 %v1541
        %v1773 = vunpack.c.l.b16 %v1542
        %v1774 = vunpack.c.l.b16 %v1543
        %v1775 = vunpack.c.l.b16 %v1544
        %v1776 = vunpack.c.l.b16 %v1545
        %v1777 = vunpack.c.l.b16 %v1546
        %v1778 = vunpack.c.l.b16 %v1547
        %v1779 = vunpack.c.l.b16 %v1548
        %v1780 = vunpack.c.l.b16 %v1549
        %v1781 = vunpack.c.l.b16 %v1550
        %v1782 = vunpack.c.l.b16 %v1551
        %v1783 = vunpack.c.l.b16 %v1552
        %v1784 = vunpack.c.l.b16 %v1553
        %v1785 = vunpack.c.l.b16 %v1554
        %v1786 = vunpack.c.l.b16 %v1555
        %v1787 = vunpack.c.l.b16 %v1556
        %v1788 = vpack.c.b16 %v1773, %v1772
        %v1789 = vpack.c.b16 %v1775, %v1774
        %v1790 = vpack.c.b16 %v1777, %v1776
        %v1791 = vpack.c.b16 %v1779, %v1778
        %v1792 = vpack.c.b16 %v1781, %v1780
        %v1793 = vpack.c.b16 %v1783, %v1782
        %v1794 = vpack.c.b16 %v1785, %v1784
        %v1795 = vpack.c.b16 %v1787, %v1786
        %1804 = vmatpush.bf16.msra.mxu0 %v1795
        %1805 = vmatpush.bf16.msra.mxu0 %v1794
        %1806 = vmatpush.bf16.msra.mxu0 %v1793
        %1807 = vmatpush.bf16.msra.mxu0 %v1792
        %1808 = vmatpush.bf16.msra.mxu0 %v1791
        %1809 = vmatpush.bf16.msra.mxu0 %v1790
        %1810 = vmatpush.bf16.msra.mxu0 %v1789
        %1811 = vmatpush.bf16.msra.mxu0 %v1788
        %1812 = vmatmul.bf16.gmra.mxu0 %v844
        %v1813 = vpop.f32.mrf.mxu0
        %v1814 = vadd.f32 %v1568, %v1813
        %v1815 = vpop.f32.mrf.mxu0
        %1816 = vdwg.mxu0
        %v1817 = vpack.c.bf16 %v983, %v983
        %v1818 = vpack.c.bf16 %v1044, %v1044
        %v1819 = vpack.c.bf16 %v1105, %v1105
        %v1820 = vpack.c.bf16 %v1166, %v1166
        %v1821 = vpack.c.bf16 %v1307, %v1307
        %v1822 = vpack.c.bf16 %v1368, %v1368
        %v1823 = vpack.c.bf16 %v1429, %v1429
        %v1824 = vpack.c.bf16 %v1490, %v1490
        %vm1825 = vcmask 261120
        %v1827 = vsel %vm1825, %v1817, 0
        %v1830 = vsel %vm1825, %v1821, 0
        %1832 = vmatpush.bf16.xpose.msra.mxu0 0
        %1833 = vmatpush.bf16.xpose.msra.mxu0 0
        %1834 = vmatpush.bf16.xpose.msra.mxu0 0
        %1835 = vmatpush.bf16.xpose.msra.mxu0 0
        %1836 = vmatpush.bf16.xpose.msra.mxu0 0
        %1837 = vmatpush.bf16.xpose.msra.mxu0 0
        %1838 = vmatpush.bf16.xpose.msra.mxu0 0
        %1839 = vmatpush.bf16.xpose.msra.mxu0 %v1830
        %1840 = vmatmul.bf16.gmra.mxu0 %v1827
        %v1841 = vpop.f32.mrf.mxu0
        %v1842 = vadd.f32 0.0, %v1841
        %v1843 = vpop.f32.mrf.mxu0
        %1844 = vdwg.mxu0
        %v1846 = vsel %vm1825, %v1818, 0
        %v1849 = vsel %vm1825, %v1822, 0
        %1851 = vmatpush.bf16.xpose.msra.mxu0 0
        %1852 = vmatpush.bf16.xpose.msra.mxu0 0
        %1853 = vmatpush.bf16.xpose.msra.mxu0 0
        %1854 = vmatpush.bf16.xpose.msra.mxu0 0
        %1855 = vmatpush.bf16.xpose.msra.mxu0 0
        %1856 = vmatpush.bf16.xpose.msra.mxu0 0
        %1857 = vmatpush.bf16.xpose.msra.mxu0 0
        %1858 = vmatpush.bf16.xpose.msra.mxu0 %v1849
        %1859 = vmatmul.bf16.gmra.mxu0 %v1846
        %v1860 = vpop.f32.mrf.mxu0
        %v1861 = vadd.f32 0.0, %v1860
        %v1862 = vpop.f32.mrf.mxu0
        %1863 = vdwg.mxu0
        %v1865 = vsel %vm1825, %v1819, 0
        %v1868 = vsel %vm1825, %v1823, 0
        %1870 = vmatpush.bf16.xpose.msra.mxu0 0
        %1871 = vmatpush.bf16.xpose.msra.mxu0 0
        %1872 = vmatpush.bf16.xpose.msra.mxu0 0
        %1873 = vmatpush.bf16.xpose.msra.mxu0 0
        %1874 = vmatpush.bf16.xpose.msra.mxu0 0
        %1875 = vmatpush.bf16.xpose.msra.mxu0 0
        %1876 = vmatpush.bf16.xpose.msra.mxu0 0
        %1877 = vmatpush.bf16.xpose.msra.mxu0 %v1868
        %1878 = vmatmul.bf16.gmra.mxu0 %v1865
        %v1879 = vpop.f32.mrf.mxu0
        %v1880 = vadd.f32 0.0, %v1879
        %v1881 = vpop.f32.mrf.mxu0
        %1882 = vdwg.mxu0
        %v1884 = vsel %vm1825, %v1820, 0
        %v1887 = vsel %vm1825, %v1824, 0
        %1889 = vmatpush.bf16.xpose.msra.mxu0 0
        %1890 = vmatpush.bf16.xpose.msra.mxu0 0
        %1891 = vmatpush.bf16.xpose.msra.mxu0 0
        %1892 = vmatpush.bf16.xpose.msra.mxu0 0
        %1893 = vmatpush.bf16.xpose.msra.mxu0 0
        %1894 = vmatpush.bf16.xpose.msra.mxu0 0
        %1895 = vmatpush.bf16.xpose.msra.mxu0 0
        %1896 = vmatpush.bf16.xpose.msra.mxu0 %v1887
        %1897 = vmatmul.bf16.gmra.mxu0 %v1884
        %v1898 = vpop.f32.mrf.mxu0
        %v1899 = vadd.f32 0.0, %v1898
        %v1900 = vpop.f32.mrf.mxu0
        %1901 = vdwg.mxu0
        %v1902 = vmul.f32 %v1842, 0.17677669
        %v1903 = vmul.f32 %v1861, 0.17677669
        %v1904 = vmul.f32 %v1880, 0.17677669
        %v1905 = vmul.f32 %v1899, 0.17677669
        %v1906 = vadd.f32 %v1902, %v789
        %v1907 = vadd.f32 %v1903, %v789
        %v1908 = vadd.f32 %v1904, %v789
        %v1909 = vadd.f32 %v1905, %v789
        %vm1910 = vcmask 64512
        %v1911 = vsel %vm1910, %v1906, -inf
        %1912 = vmax.xlane.f32.xlu0 %v1911
        %v1913 = vpop.xlane.xlu0 %1912
        %v1914 = vsel %vm1910, %v1907, -inf
        %1915 = vmax.xlane.f32.xlu0 %v1914
        %v1916 = vpop.xlane.xlu0 %1915
        %v1917 = vsel %vm1910, %v1908, -inf
        %1918 = vmax.xlane.f32.xlu0 %v1917
        %v1919 = vpop.xlane.xlu0 %1918
        %v1920 = vsel %vm1910, %v1909, -inf
        %1921 = vmax.xlane.f32.xlu0 %v1920
        %v1922 = vpop.xlane.xlu0 %1921
        %v1923 = vsub.f32 %v1906, %v1913
        %v1924 = vsub.f32 %v1907, %v1916
        %v1925 = vsub.f32 %v1908, %v1919
        %v1926 = vsub.f32 %v1909, %v1922
        %v1927 = vmul.f32 %v1923, 1.442695
        %v1928 = vpow.pop %v1927
        %v1929 = vmul.f32 %v1924, 1.442695
        %v1930 = vpow.pop %v1929
        %v1931 = vmul.f32 %v1925, 1.442695
        %v1932 = vpow.pop %v1931
        %v1933 = vmul.f32 %v1926, 1.442695
        %v1934 = vpow.pop %v1933
        %v1935 = vsel %vm1910, %v1928, 0.0
        %1936 = vadd.xlane.f32.xlu0 %v1935
        %v1937 = vpop.xlane.xlu0 %1936
        %v1938 = vsel %vm1910, %v1930, 0.0
        %1939 = vadd.xlane.f32.xlu0 %v1938
        %v1940 = vpop.xlane.xlu0 %1939
        %v1941 = vsel %vm1910, %v1932, 0.0
        %1942 = vadd.xlane.f32.xlu0 %v1941
        %v1943 = vpop.xlane.xlu0 %1942
        %v1944 = vsel %vm1910, %v1934, 0.0
        %1945 = vadd.xlane.f32.xlu0 %v1944
        %v1946 = vpop.xlane.xlu0 %1945
        %v1947 = vrcp.pop %v1937
        %v1948 = vrcp.pop %v1940
        %v1949 = vrcp.pop %v1943
        %v1950 = vrcp.pop %v1946
        %v1951 = vmul.f32 %v1928, %v1947
        %v1952 = vmul.f32 %v1930, %v1948
        %v1953 = vmul.f32 %v1932, %v1949
        %v1954 = vmul.f32 %v1934, %v1950
        %v1955 = vpack.c.bf16 %v1951, %v1951
        %v1956 = vpack.c.bf16 %v1952, %v1952
        %v1957 = vpack.c.bf16 %v1953, %v1953
        %v1958 = vpack.c.bf16 %v1954, %v1954
        %v1959 = vpack.c.bf16 %v1631, %v1631
        %v1960 = vpack.c.bf16 %v1692, %v1692
        %v1961 = vpack.c.bf16 %v1753, %v1753
        %v1962 = vpack.c.bf16 %v1814, %v1814
        %v1964 = vsel %vm1910, %v1955, 0
        %vm1966 = vcmask 1043456
        %v1968 = vsel %vm1966, %v1959, 0
        %1970 = vmatpush.bf16.msra.mxu0 0
        %1971 = vmatpush.bf16.msra.mxu0 0
        %1972 = vmatpush.bf16.msra.mxu0 0
        %1973 = vmatpush.bf16.msra.mxu0 0
        %1974 = vmatpush.bf16.msra.mxu0 0
        %1975 = vmatpush.bf16.msra.mxu0 0
        %1976 = vmatpush.bf16.msra.mxu0 0
        %1977 = vmatpush.bf16.msra.mxu0 %v1968
        %1978 = vmatmul.bf16.gmra.mxu0 %v1964
        %v1979 = vpop.f32.mrf.mxu0
        %v1980 = vadd.f32 0.0, %v1979
        %v1981 = vpop.f32.mrf.mxu0
        %1982 = vdwg.mxu0
        %v1984 = vsel %vm1910, %v1956, 0
        %v1987 = vsel %vm1966, %v1960, 0
        %1989 = vmatpush.bf16.msra.mxu0 0
        %1990 = vmatpush.bf16.msra.mxu0 0
        %1991 = vmatpush.bf16.msra.mxu0 0
        %1992 = vmatpush.bf16.msra.mxu0 0
        %1993 = vmatpush.bf16.msra.mxu0 0
        %1994 = vmatpush.bf16.msra.mxu0 0
        %1995 = vmatpush.bf16.msra.mxu0 0
        %1996 = vmatpush.bf16.msra.mxu0 %v1987
        %1997 = vmatmul.bf16.gmra.mxu0 %v1984
        %v1998 = vpop.f32.mrf.mxu0
        %v1999 = vadd.f32 0.0, %v1998
        %v2000 = vpop.f32.mrf.mxu0
        %2001 = vdwg.mxu0
        %v2003 = vsel %vm1910, %v1957, 0
        %v2006 = vsel %vm1966, %v1961, 0
        %2008 = vmatpush.bf16.msra.mxu0 0
        %2009 = vmatpush.bf16.msra.mxu0 0
        %2010 = vmatpush.bf16.msra.mxu0 0
        %2011 = vmatpush.bf16.msra.mxu0 0
        %2012 = vmatpush.bf16.msra.mxu0 0
        %2013 = vmatpush.bf16.msra.mxu0 0
        %2014 = vmatpush.bf16.msra.mxu0 0
        %2015 = vmatpush.bf16.msra.mxu0 %v2006
        %2016 = vmatmul.bf16.gmra.mxu0 %v2003
        %v2017 = vpop.f32.mrf.mxu0
        %v2018 = vadd.f32 0.0, %v2017
        %v2019 = vpop.f32.mrf.mxu0
        %2020 = vdwg.mxu0
        %v2022 = vsel %vm1910, %v1958, 0
        %v2025 = vsel %vm1966, %v1962, 0
        %2027 = vmatpush.bf16.msra.mxu0 0
        %2028 = vmatpush.bf16.msra.mxu0 0
        %2029 = vmatpush.bf16.msra.mxu0 0
        %2030 = vmatpush.bf16.msra.mxu0 0
        %2031 = vmatpush.bf16.msra.mxu0 0
        %2032 = vmatpush.bf16.msra.mxu0 0
        %2033 = vmatpush.bf16.msra.mxu0 0
        %2034 = vmatpush.bf16.msra.mxu0 %v2025
        %2035 = vmatmul.bf16.gmra.mxu0 %v2022
        %v2036 = vpop.f32.mrf.mxu0
        %v2037 = vadd.f32 0.0, %v2036
        %v2038 = vpop.f32.mrf.mxu0
        %2039 = vdwg.mxu0
        %v2040 = vpack.c.bf16 %v1980, %v1980
        %v2041 = vpack.c.bf16 %v1999, %v1999
        %v2042 = vpack.c.bf16 %v2018, %v2018
        %v2043 = vpack.c.bf16 %v2037, %v2037
        %v2044 = vld [vmem:[%s10] sm:$0xf]
        %v2045 = vld [vmem:[%s10 + $0x4] sm:$0xf]
        %v2046 = vld [vmem:[%s10 + $0x8] sm:$0xf]
        %v2047 = vld [vmem:[%s10 + $0xc] sm:$0xf]
        %v2048 = vld [vmem:[%s10 + $0x10] sm:$0xf]
        %v2049 = vld [vmem:[%s10 + $0x14] sm:$0xf]
        %v2050 = vld [vmem:[%s10 + $0x18] sm:$0xf]
        %v2051 = vld [vmem:[%s10 + $0x1c] sm:$0xf]
        %v2052 = vld [vmem:[%s10 + $0x20] sm:$0xf]
        %v2053 = vld [vmem:[%s10 + $0x24] sm:$0xf]
        %v2054 = vld [vmem:[%s10 + $0x28] sm:$0xf]
        %v2055 = vld [vmem:[%s10 + $0x2c] sm:$0xf]
        %v2056 = vld [vmem:[%s10 + $0x30] sm:$0xf]
        %v2057 = vld [vmem:[%s10 + $0x34] sm:$0xf]
        %v2058 = vld [vmem:[%s10 + $0x38] sm:$0xf]
        %v2059 = vld [vmem:[%s10 + $0x3c] sm:$0xf]
        %v2064 = vunpack.c.l.b16 %v2044
        %v2065 = vunpack.c.l.b16 %v2045
        %v2066 = vunpack.c.l.b16 %v2046
        %v2067 = vunpack.c.l.b16 %v2047
        %v2068 = vpack.c.b16 %v2065, %v2064
        %v2069 = vpack.c.b16 %v2067, %v2066
        %v2073 = vsel %vm1825, %v2040, 0
        %2075 = vmatpush.bf16.msra.mxu0 0
        %2076 = vmatpush.bf16.msra.mxu0 0
        %2077 = vmatpush.bf16.msra.mxu0 0
        %2078 = vmatpush.bf16.msra.mxu0 0
        %2079 = vmatpush.bf16.msra.mxu0 0
        %2080 = vmatpush.bf16.msra.mxu0 0
        %2081 = vmatpush.bf16.msra.mxu0 %v2069
        %2082 = vmatpush.bf16.msra.mxu0 %v2068
        %2083 = vmatmul.bf16.gmra.mxu0 %v2073
        %v2084 = vpop.f32.mrf.mxu0
        %v2085 = vadd.f32 0.0, %v2084
        %v2086 = vpop.f32.mrf.mxu0
        %2087 = vdwg.mxu0
        %v2092 = vunpack.c.l.b16 %v2048
        %v2093 = vunpack.c.l.b16 %v2049
        %v2094 = vunpack.c.l.b16 %v2050
        %v2095 = vunpack.c.l.b16 %v2051
        %v2096 = vpack.c.b16 %v2093, %v2092
        %v2097 = vpack.c.b16 %v2095, %v2094
        %v2101 = vsel %vm1825, %v2041, 0
        %2103 = vmatpush.bf16.msra.mxu0 0
        %2104 = vmatpush.bf16.msra.mxu0 0
        %2105 = vmatpush.bf16.msra.mxu0 0
        %2106 = vmatpush.bf16.msra.mxu0 0
        %2107 = vmatpush.bf16.msra.mxu0 0
        %2108 = vmatpush.bf16.msra.mxu0 0
        %2109 = vmatpush.bf16.msra.mxu0 %v2097
        %2110 = vmatpush.bf16.msra.mxu0 %v2096
        %2111 = vmatmul.bf16.gmra.mxu0 %v2101
        %v2112 = vpop.f32.mrf.mxu0
        %v2113 = vadd.f32 0.0, %v2112
        %v2114 = vpop.f32.mrf.mxu0
        %2115 = vdwg.mxu0
        %v2120 = vunpack.c.l.b16 %v2052
        %v2121 = vunpack.c.l.b16 %v2053
        %v2122 = vunpack.c.l.b16 %v2054
        %v2123 = vunpack.c.l.b16 %v2055
        %v2124 = vpack.c.b16 %v2121, %v2120
        %v2125 = vpack.c.b16 %v2123, %v2122
        %v2129 = vsel %vm1825, %v2042, 0
        %2131 = vmatpush.bf16.msra.mxu0 0
        %2132 = vmatpush.bf16.msra.mxu0 0
        %2133 = vmatpush.bf16.msra.mxu0 0
        %2134 = vmatpush.bf16.msra.mxu0 0
        %2135 = vmatpush.bf16.msra.mxu0 0
        %2136 = vmatpush.bf16.msra.mxu0 0
        %2137 = vmatpush.bf16.msra.mxu0 %v2125
        %2138 = vmatpush.bf16.msra.mxu0 %v2124
        %2139 = vmatmul.bf16.gmra.mxu0 %v2129
        %v2140 = vpop.f32.mrf.mxu0
        %v2141 = vadd.f32 0.0, %v2140
        %v2142 = vpop.f32.mrf.mxu0
        %2143 = vdwg.mxu0
        %v2148 = vunpack.c.l.b16 %v2056
        %v2149 = vunpack.c.l.b16 %v2057
        %v2150 = vunpack.c.l.b16 %v2058
        %v2151 = vunpack.c.l.b16 %v2059
        %v2152 = vpack.c.b16 %v2149, %v2148
        %v2153 = vpack.c.b16 %v2151, %v2150
        %v2157 = vsel %vm1825, %v2043, 0
        %2159 = vmatpush.bf16.msra.mxu0 0
        %2160 = vmatpush.bf16.msra.mxu0 0
        %2161 = vmatpush.bf16.msra.mxu0 0
        %2162 = vmatpush.bf16.msra.mxu0 0
        %2163 = vmatpush.bf16.msra.mxu0 0
        %2164 = vmatpush.bf16.msra.mxu0 0
        %2165 = vmatpush.bf16.msra.mxu0 %v2153
        %2166 = vmatpush.bf16.msra.mxu0 %v2152
        %2167 = vmatmul.bf16.gmra.mxu0 %v2157
        %v2168 = vpop.f32.mrf.mxu0
        %v2169 = vadd.f32 0.0, %v2168
        %v2170 = vpop.f32.mrf.mxu0
        %2171 = vdwg.mxu0
        %v2172 = vadd.f32 %v2085, %v2113
        %v2173 = vadd.f32 %v2172, %v2141
        %v2174 = vadd.f32 %v2173, %v2169
        %v2175 = vld [vmem:[%s11] sm:$0x1]
        %v2177 = vperm.slane %v2175, 0
        %v2179 = vadd.f32 %v2174, %v2177
        %v2180 = vadd.f32 %v785, %v2179
        %2181 = vadd.xlane.f32.xlu0 %v2180
        %v2182 = vpop.xlane.xlu0 %2181
        %v2183 = vmul.f32 %v2182, %v801
        %v2184 = vsub.f32 %v2180, %v2183
        %v2185 = vmul.f32 %v2184, %v2184
        %2186 = vadd.xlane.f32.xlu0 %v2185
        %v2187 = vpop.xlane.xlu0 %2186
        %v2188 = vmul.f32 %v2187, %v813
        %v2189 = vrsqrt.pop %v2188
        %v2190 = vmul.f32 %v2189, %v2188
        %v2191 = vmul.f32 %v2190, %v2189
        %v2192 = vmul.f32 0.5, %v2191
        %v2193 = vsub.f32 1.5, %v2192
        %v2194 = vmul.f32 %v2189, %v2193
        %v2195 = vmul.f32 %v2188, %v2194
        %vm2196 = vcmp.eq.f32.partialorder %v2188, inf
        %v2197 = vsel %vm2196, %v2188, %v2195
        %vm2198 = vcmp.eq.f32.partialorder %v2188, 0.0
        %v2199 = vand.u32 %v2188, 2147483648
        %v2200 = vsel %vm2198, %v2199, %v2197
        %v2201 = vadd.f32 %v2200, 1e-06
        %v2202 = vrcp.pop %v2201
        %v2203 = vmul.f32 %v2201, %v2202
        %v2204 = vsub.f32 1.0, %v2203
        %v2205 = vmul.f32 %v2202, %v2204
        %v2206 = vadd.f32 %v2202, %v2205
        %vm2207 = vweird.f32 %v2201
        %vm2208 = vweird.f32 %v2202
        %vm2209 = vmor %vm2207, %vm2208
        %v2210 = vsel %vm2209, %v2202, %v2206
        %v2211 = vand.u32 2147483647, %v2201
        %vm2212 = vcmp.eq.f32.partialorder %v2211, 8.507059e+37
        %v2213 = vand.u32 %v2201, 2147483648
        %v2214 = vor.u32 1.1754944e-38, %v2213
        %v2215 = vsel %vm2212, %v2214, %v2210
        %v2216 = vmul.f32 %v2184, %v2215
        %v2217 = vadd.f32 %v2216, 0.0
        %v2218 = vpack.c.bf16 %v2217, %v2217
        %v2219 = vpack.c.bf16 %v786, %v786
        %v2220 = vld [vmem:[%s12] sm:$0xf]
        %v2221 = vld [vmem:[%s12 + $0x4] sm:$0xf]
        %v2222 = vld [vmem:[%s12 + $0x8] sm:$0xf]
        %v2223 = vld [vmem:[%s12 + $0xc] sm:$0xf]
        %v2224 = vld [vmem:[%s12 + $0x10] sm:$0xf]
        %v2225 = vld [vmem:[%s12 + $0x14] sm:$0xf]
        %v2226 = vld [vmem:[%s12 + $0x18] sm:$0xf]
        %v2227 = vld [vmem:[%s12 + $0x1c] sm:$0xf]
        %v2228 = vld [vmem:[%s12 + $0x20] sm:$0xf]
        %v2229 = vld [vmem:[%s12 + $0x24] sm:$0xf]
        %v2230 = vld [vmem:[%s12 + $0x28] sm:$0xf]
        %v2231 = vld [vmem:[%s12 + $0x2c] sm:$0xf]
        %v2232 = vld [vmem:[%s12 + $0x30] sm:$0xf]
        %v2233 = vld [vmem:[%s12 + $0x34] sm:$0xf]
        %v2234 = vld [vmem:[%s12 + $0x38] sm:$0xf]
        %v2235 = vld [vmem:[%s12 + $0x3c] sm:$0xf]
        %v2236 = vld [vmem:[%s12 + $0x40] sm:$0xf]
        %v2237 = vld [vmem:[%s12 + $0x44] sm:$0xf]
        %v2238 = vld [vmem:[%s12 + $0x48] sm:$0xf]
        %v2239 = vld [vmem:[%s12 + $0x4c] sm:$0xf]
        %v2240 = vld [vmem:[%s12 + $0x50] sm:$0xf]
        %v2241 = vld [vmem:[%s12 + $0x54] sm:$0xf]
        %v2242 = vld [vmem:[%s12 + $0x58] sm:$0xf]
        %v2243 = vld [vmem:[%s12 + $0x5c] sm:$0xf]
        %v2244 = vld [vmem:[%s12 + $0x60] sm:$0xf]
        %v2245 = vld [vmem:[%s12 + $0x64] sm:$0xf]
        %v2246 = vld [vmem:[%s12 + $0x68] sm:$0xf]
        %v2247 = vld [vmem:[%s12 + $0x6c] sm:$0xf]
        %v2248 = vld [vmem:[%s12 + $0x70] sm:$0xf]
        %v2249 = vld [vmem:[%s12 + $0x74] sm:$0xf]
        %v2250 = vld [vmem:[%s12 + $0x78] sm:$0xf]
        %v2251 = vld [vmem:[%s12 + $0x7c] sm:$0xf]
        %v2252 = vld [vmem:[%s12 + $0x80] sm:$0xf]
        %v2253 = vld [vmem:[%s12 + $0x84] sm:$0xf]
        %v2254 = vld [vmem:[%s12 + $0x88] sm:$0xf]
        %v2255 = vld [vmem:[%s12 + $0x8c] sm:$0xf]
        %v2256 = vld [vmem:[%s12 + $0x90] sm:$0xf]
        %v2257 = vld [vmem:[%s12 + $0x94] sm:$0xf]
        %v2258 = vld [vmem:[%s12 + $0x98] sm:$0xf]
        %v2259 = vld [vmem:[%s12 + $0x9c] sm:$0xf]
        %v2260 = vld [vmem:[%s12 + $0xa0] sm:$0xf]
        %v2261 = vld [vmem:[%s12 + $0xa4] sm:$0xf]
        %v2262 = vld [vmem:[%s12 + $0xa8] sm:$0xf]
        %v2263 = vld [vmem:[%s12 + $0xac] sm:$0xf]
        %v2264 = vld [vmem:[%s12 + $0xb0] sm:$0xf]
        %v2265 = vld [vmem:[%s12 + $0xb4] sm:$0xf]
        %v2266 = vld [vmem:[%s12 + $0xb8] sm:$0xf]
        %v2267 = vld [vmem:[%s12 + $0xbc] sm:$0xf]
        %v2268 = vld [vmem:[%s12 + $0xc0] sm:$0xf]
        %v2269 = vld [vmem:[%s12 + $0xc4] sm:$0xf]
        %v2270 = vld [vmem:[%s12 + $0xc8] sm:$0xf]
        %v2271 = vld [vmem:[%s12 + $0xcc] sm:$0xf]
        %v2272 = vld [vmem:[%s12 + $0xd0] sm:$0xf]
        %v2273 = vld [vmem:[%s12 + $0xd4] sm:$0xf]
        %v2274 = vld [vmem:[%s12 + $0xd8] sm:$0xf]
        %v2275 = vld [vmem:[%s12 + $0xdc] sm:$0xf]
        %v2276 = vld [vmem:[%s12 + $0xe0] sm:$0xf]
        %v2277 = vld [vmem:[%s12 + $0xe4] sm:$0xf]
        %v2278 = vld [vmem:[%s12 + $0xe8] sm:$0xf]
        %v2279 = vld [vmem:[%s12 + $0xec] sm:$0xf]
        %v2280 = vld [vmem:[%s12 + $0xf0] sm:$0xf]
        %v2281 = vld [vmem:[%s12 + $0xf4] sm:$0xf]
        %v2282 = vld [vmem:[%s12 + $0xf8] sm:$0xf]
        %v2283 = vld [vmem:[%s12 + $0xfc] sm:$0xf]
        %v2284 = vld [vmem:[%s13] sm:$0x1]
        %v2285 = vld [vmem:[%s13 + $0x1] sm:$0x1]
        %v2286 = vld [vmem:[%s13 + $0x2] sm:$0x1]
        %v2287 = vld [vmem:[%s13 + $0x3] sm:$0x1]
        %v2292 = vperm.slane %v2284, 0
        %v2293 = vperm.slane %v2285, 0
        %v2294 = vperm.slane %v2286, 0
        %v2295 = vperm.slane %v2287, 0
        %v2316 = vunpack.c.l.b16 %v2220
        %v2317 = vunpack.c.l.b16 %v2221
        %v2318 = vunpack.c.l.b16 %v2222
        %v2319 = vunpack.c.l.b16 %v2223
        %v2320 = vunpack.c.l.b16 %v2224
        %v2321 = vunpack.c.l.b16 %v2225
        %v2322 = vunpack.c.l.b16 %v2226
        %v2323 = vunpack.c.l.b16 %v2227
        %v2324 = vunpack.c.l.b16 %v2228
        %v2325 = vunpack.c.l.b16 %v2229
        %v2326 = vunpack.c.l.b16 %v2230
        %v2327 = vunpack.c.l.b16 %v2231
        %v2328 = vunpack.c.l.b16 %v2232
        %v2329 = vunpack.c.l.b16 %v2233
        %v2330 = vunpack.c.l.b16 %v2234
        %v2331 = vunpack.c.l.b16 %v2235
        %v2332 = vpack.c.b16 %v2317, %v2316
        %v2333 = vpack.c.b16 %v2319, %v2318
        %v2334 = vpack.c.b16 %v2321, %v2320
        %v2335 = vpack.c.b16 %v2323, %v2322
        %v2336 = vpack.c.b16 %v2325, %v2324
        %v2337 = vpack.c.b16 %v2327, %v2326
        %v2338 = vpack.c.b16 %v2329, %v2328
        %v2339 = vpack.c.b16 %v2331, %v2330
        %2348 = vmatpush.bf16.msra.mxu0 %v2339
        %2349 = vmatpush.bf16.msra.mxu0 %v2338
        %2350 = vmatpush.bf16.msra.mxu0 %v2337
        %2351 = vmatpush.bf16.msra.mxu0 %v2336
        %2352 = vmatpush.bf16.msra.mxu0 %v2335
        %2353 = vmatpush.bf16.msra.mxu0 %v2334
        %2354 = vmatpush.bf16.msra.mxu0 %v2333
        %2355 = vmatpush.bf16.msra.mxu0 %v2332
        %2356 = vmatmul.bf16.gmra.mxu0 %v2218
        %v2357 = vpop.f32.mrf.mxu0
        %v2358 = vadd.f32 %v2292, %v2357
        %v2359 = vpop.f32.mrf.mxu0
        %2360 = vdwg.mxu0
        %v2377 = vunpack.c.l.b16 %v2236
        %v2378 = vunpack.c.l.b16 %v2237
        %v2379 = vunpack.c.l.b16 %v2238
        %v2380 = vunpack.c.l.b16 %v2239
        %v2381 = vunpack.c.l.b16 %v2240
        %v2382 = vunpack.c.l.b16 %v2241
        %v2383 = vunpack.c.l.b16 %v2242
        %v2384 = vunpack.c.l.b16 %v2243
        %v2385 = vunpack.c.l.b16 %v2244
        %v2386 = vunpack.c.l.b16 %v2245
        %v2387 = vunpack.c.l.b16 %v2246
        %v2388 = vunpack.c.l.b16 %v2247
        %v2389 = vunpack.c.l.b16 %v2248
        %v2390 = vunpack.c.l.b16 %v2249
        %v2391 = vunpack.c.l.b16 %v2250
        %v2392 = vunpack.c.l.b16 %v2251
        %v2393 = vpack.c.b16 %v2378, %v2377
        %v2394 = vpack.c.b16 %v2380, %v2379
        %v2395 = vpack.c.b16 %v2382, %v2381
        %v2396 = vpack.c.b16 %v2384, %v2383
        %v2397 = vpack.c.b16 %v2386, %v2385
        %v2398 = vpack.c.b16 %v2388, %v2387
        %v2399 = vpack.c.b16 %v2390, %v2389
        %v2400 = vpack.c.b16 %v2392, %v2391
        %2409 = vmatpush.bf16.msra.mxu0 %v2400
        %2410 = vmatpush.bf16.msra.mxu0 %v2399
        %2411 = vmatpush.bf16.msra.mxu0 %v2398
        %2412 = vmatpush.bf16.msra.mxu0 %v2397
        %2413 = vmatpush.bf16.msra.mxu0 %v2396
        %2414 = vmatpush.bf16.msra.mxu0 %v2395
        %2415 = vmatpush.bf16.msra.mxu0 %v2394
        %2416 = vmatpush.bf16.msra.mxu0 %v2393
        %2417 = vmatmul.bf16.gmra.mxu0 %v2218
        %v2418 = vpop.f32.mrf.mxu0
        %v2419 = vadd.f32 %v2293, %v2418
        %v2420 = vpop.f32.mrf.mxu0
        %2421 = vdwg.mxu0
        %v2438 = vunpack.c.l.b16 %v2252
        %v2439 = vunpack.c.l.b16 %v2253
        %v2440 = vunpack.c.l.b16 %v2254
        %v2441 = vunpack.c.l.b16 %v2255
        %v2442 = vunpack.c.l.b16 %v2256
        %v2443 = vunpack.c.l.b16 %v2257
        %v2444 = vunpack.c.l.b16 %v2258
        %v2445 = vunpack.c.l.b16 %v2259
        %v2446 = vunpack.c.l.b16 %v2260
        %v2447 = vunpack.c.l.b16 %v2261
        %v2448 = vunpack.c.l.b16 %v2262
        %v2449 = vunpack.c.l.b16 %v2263
        %v2450 = vunpack.c.l.b16 %v2264
        %v2451 = vunpack.c.l.b16 %v2265
        %v2452 = vunpack.c.l.b16 %v2266
        %v2453 = vunpack.c.l.b16 %v2267
        %v2454 = vpack.c.b16 %v2439, %v2438
        %v2455 = vpack.c.b16 %v2441, %v2440
        %v2456 = vpack.c.b16 %v2443, %v2442
        %v2457 = vpack.c.b16 %v2445, %v2444
        %v2458 = vpack.c.b16 %v2447, %v2446
        %v2459 = vpack.c.b16 %v2449, %v2448
        %v2460 = vpack.c.b16 %v2451, %v2450
        %v2461 = vpack.c.b16 %v2453, %v2452
        %2470 = vmatpush.bf16.msra.mxu0 %v2461
        %2471 = vmatpush.bf16.msra.mxu0 %v2460
        %2472 = vmatpush.bf16.msra.mxu0 %v2459
        %2473 = vmatpush.bf16.msra.mxu0 %v2458
        %2474 = vmatpush.bf16.msra.mxu0 %v2457
        %2475 = vmatpush.bf16.msra.mxu0 %v2456
        %2476 = vmatpush.bf16.msra.mxu0 %v2455
        %2477 = vmatpush.bf16.msra.mxu0 %v2454
        %2478 = vmatmul.bf16.gmra.mxu0 %v2218
        %v2479 = vpop.f32.mrf.mxu0
        %v2480 = vadd.f32 %v2294, %v2479
        %v2481 = vpop.f32.mrf.mxu0
        %2482 = vdwg.mxu0
        %v2499 = vunpack.c.l.b16 %v2268
        %v2500 = vunpack.c.l.b16 %v2269
        %v2501 = vunpack.c.l.b16 %v2270
        %v2502 = vunpack.c.l.b16 %v2271
        %v2503 = vunpack.c.l.b16 %v2272
        %v2504 = vunpack.c.l.b16 %v2273
        %v2505 = vunpack.c.l.b16 %v2274
        %v2506 = vunpack.c.l.b16 %v2275
        %v2507 = vunpack.c.l.b16 %v2276
        %v2508 = vunpack.c.l.b16 %v2277
        %v2509 = vunpack.c.l.b16 %v2278
        %v2510 = vunpack.c.l.b16 %v2279
        %v2511 = vunpack.c.l.b16 %v2280
        %v2512 = vunpack.c.l.b16 %v2281
        %v2513 = vunpack.c.l.b16 %v2282
        %v2514 = vunpack.c.l.b16 %v2283
        %v2515 = vpack.c.b16 %v2500, %v2499
        %v2516 = vpack.c.b16 %v2502, %v2501
        %v2517 = vpack.c.b16 %v2504, %v2503
        %v2518 = vpack.c.b16 %v2506, %v2505
        %v2519 = vpack.c.b16 %v2508, %v2507
        %v2520 = vpack.c.b16 %v2510, %v2509
        %v2521 = vpack.c.b16 %v2512, %v2511
        %v2522 = vpack.c.b16 %v2514, %v2513
        %2531 = vmatpush.bf16.msra.mxu0 %v2522
        %2532 = vmatpush.bf16.msra.mxu0 %v2521
        %2533 = vmatpush.bf16.msra.mxu0 %v2520
        %2534 = vmatpush.bf16.msra.mxu0 %v2519
        %2535 = vmatpush.bf16.msra.mxu0 %v2518
        %2536 = vmatpush.bf16.msra.mxu0 %v2517
        %2537 = vmatpush.bf16.msra.mxu0 %v2516
        %2538 = vmatpush.bf16.msra.mxu0 %v2515
        %2539 = vmatmul.bf16.gmra.mxu0 %v2218
        %v2540 = vpop.f32.mrf.mxu0
        %v2541 = vadd.f32 %v2295, %v2540
        %v2542 = vpop.f32.mrf.mxu0
        %2543 = vdwg.mxu0
        %v2544 = vld [vmem:[%s14] sm:$0xf]
        %v2545 = vld [vmem:[%s14 + $0x4] sm:$0xf]
        %v2546 = vld [vmem:[%s14 + $0x8] sm:$0xf]
        %v2547 = vld [vmem:[%s14 + $0xc] sm:$0xf]
        %v2548 = vld [vmem:[%s14 + $0x10] sm:$0xf]
        %v2549 = vld [vmem:[%s14 + $0x14] sm:$0xf]
        %v2550 = vld [vmem:[%s14 + $0x18] sm:$0xf]
        %v2551 = vld [vmem:[%s14 + $0x1c] sm:$0xf]
        %v2552 = vld [vmem:[%s14 + $0x20] sm:$0xf]
        %v2553 = vld [vmem:[%s14 + $0x24] sm:$0xf]
        %v2554 = vld [vmem:[%s14 + $0x28] sm:$0xf]
        %v2555 = vld [vmem:[%s14 + $0x2c] sm:$0xf]
        %v2556 = vld [vmem:[%s14 + $0x30] sm:$0xf]
        %v2557 = vld [vmem:[%s14 + $0x34] sm:$0xf]
        %v2558 = vld [vmem:[%s14 + $0x38] sm:$0xf]
        %v2559 = vld [vmem:[%s14 + $0x3c] sm:$0xf]
        %v2560 = vld [vmem:[%s14 + $0x40] sm:$0xf]
        %v2561 = vld [vmem:[%s14 + $0x44] sm:$0xf]
        %v2562 = vld [vmem:[%s14 + $0x48] sm:$0xf]
        %v2563 = vld [vmem:[%s14 + $0x4c] sm:$0xf]
        %v2564 = vld [vmem:[%s14 + $0x50] sm:$0xf]
        %v2565 = vld [vmem:[%s14 + $0x54] sm:$0xf]
        %v2566 = vld [vmem:[%s14 + $0x58] sm:$0xf]
        %v2567 = vld [vmem:[%s14 + $0x5c] sm:$0xf]
        %v2568 = vld [vmem:[%s14 + $0x60] sm:$0xf]
        %v2569 = vld [vmem:[%s14 + $0x64] sm:$0xf]
        %v2570 = vld [vmem:[%s14 + $0x68] sm:$0xf]
        %v2571 = vld [vmem:[%s14 + $0x6c] sm:$0xf]
        %v2572 = vld [vmem:[%s14 + $0x70] sm:$0xf]
        %v2573 = vld [vmem:[%s14 + $0x74] sm:$0xf]
        %v2574 = vld [vmem:[%s14 + $0x78] sm:$0xf]
        %v2575 = vld [vmem:[%s14 + $0x7c] sm:$0xf]
        %v2576 = vld [vmem:[%s14 + $0x80] sm:$0xf]
        %v2577 = vld [vmem:[%s14 + $0x84] sm:$0xf]
        %v2578 = vld [vmem:[%s14 + $0x88] sm:$0xf]
        %v2579 = vld [vmem:[%s14 + $0x8c] sm:$0xf]
        %v2580 = vld [vmem:[%s14 + $0x90] sm:$0xf]
        %v2581 = vld [vmem:[%s14 + $0x94] sm:$0xf]
        %v2582 = vld [vmem:[%s14 + $0x98] sm:$0xf]
        %v2583 = vld [vmem:[%s14 + $0x9c] sm:$0xf]
        %v2584 = vld [vmem:[%s14 + $0xa0] sm:$0xf]
        %v2585 = vld [vmem:[%s14 + $0xa4] sm:$0xf]
        %v2586 = vld [vmem:[%s14 + $0xa8] sm:$0xf]
        %v2587 = vld [vmem:[%s14 + $0xac] sm:$0xf]
        %v2588 = vld [vmem:[%s14 + $0xb0] sm:$0xf]
        %v2589 = vld [vmem:[%s14 + $0xb4] sm:$0xf]
        %v2590 = vld [vmem:[%s14 + $0xb8] sm:$0xf]
        %v2591 = vld [vmem:[%s14 + $0xbc] sm:$0xf]
        %v2592 = vld [vmem:[%s14 + $0xc0] sm:$0xf]
        %v2593 = vld [vmem:[%s14 + $0xc4] sm:$0xf]
        %v2594 = vld [vmem:[%s14 + $0xc8] sm:$0xf]
        %v2595 = vld [vmem:[%s14 + $0xcc] sm:$0xf]
        %v2596 = vld [vmem:[%s14 + $0xd0] sm:$0xf]
        %v2597 = vld [vmem:[%s14 + $0xd4] sm:$0xf]
        %v2598 = vld [vmem:[%s14 + $0xd8] sm:$0xf]
        %v2599 = vld [vmem:[%s14 + $0xdc] sm:$0xf]
        %v2600 = vld [vmem:[%s14 + $0xe0] sm:$0xf]
        %v2601 = vld [vmem:[%s14 + $0xe4] sm:$0xf]
        %v2602 = vld [vmem:[%s14 + $0xe8] sm:$0xf]
        %v2603 = vld [vmem:[%s14 + $0xec] sm:$0xf]
        %v2604 = vld [vmem:[%s14 + $0xf0] sm:$0xf]
        %v2605 = vld [vmem:[%s14 + $0xf4] sm:$0xf]
        %v2606 = vld [vmem:[%s14 + $0xf8] sm:$0xf]
        %v2607 = vld [vmem:[%s14 + $0xfc] sm:$0xf]
        %v2608 = vld [vmem:[%s15] sm:$0x1]
        %v2609 = vld [vmem:[%s15 + $0x1] sm:$0x1]
        %v2610 = vld [vmem:[%s15 + $0x2] sm:$0x1]
        %v2611 = vld [vmem:[%s15 + $0x3] sm:$0x1]
        %v2616 = vperm.slane %v2608, 0
        %v2617 = vperm.slane %v2609, 0
        %v2618 = vperm.slane %v2610, 0
        %v2619 = vperm.slane %v2611, 0
        %v2640 = vunpack.c.l.b16 %v2544
        %v2641 = vunpack.c.l.b16 %v2545
        %v2642 = vunpack.c.l.b16 %v2546
        %v2643 = vunpack.c.l.b16 %v2547
        %v2644 = vunpack.c.l.b16 %v2548
        %v2645 = vunpack.c.l.b16 %v2549
        %v2646 = vunpack.c.l.b16 %v2550
        %v2647 = vunpack.c.l.b16 %v2551
        %v2648 = vunpack.c.l.b16 %v2552
        %v2649 = vunpack.c.l.b16 %v2553
        %v2650 = vunpack.c.l.b16 %v2554
        %v2651 = vunpack.c.l.b16 %v2555
        %v2652 = vunpack.c.l.b16 %v2556
        %v2653 = vunpack.c.l.b16 %v2557
        %v2654 = vunpack.c.l.b16 %v2558
        %v2655 = vunpack.c.l.b16 %v2559
        %v2656 = vpack.c.b16 %v2641, %v2640
        %v2657 = vpack.c.b16 %v2643, %v2642
        %v2658 = vpack.c.b16 %v2645, %v2644
        %v2659 = vpack.c.b16 %v2647, %v2646
        %v2660 = vpack.c.b16 %v2649, %v2648
        %v2661 = vpack.c.b16 %v2651, %v2650
        %v2662 = vpack.c.b16 %v2653, %v2652
        %v2663 = vpack.c.b16 %v2655, %v2654
        %2672 = vmatpush.bf16.msra.mxu0 %v2663
        %2673 = vmatpush.bf16.msra.mxu0 %v2662
        %2674 = vmatpush.bf16.msra.mxu0 %v2661
        %2675 = vmatpush.bf16.msra.mxu0 %v2660
        %2676 = vmatpush.bf16.msra.mxu0 %v2659
        %2677 = vmatpush.bf16.msra.mxu0 %v2658
        %2678 = vmatpush.bf16.msra.mxu0 %v2657
        %2679 = vmatpush.bf16.msra.mxu0 %v2656
        %2680 = vmatmul.bf16.gmra.mxu0 %v2219
        %v2681 = vpop.f32.mrf.mxu0
        %v2682 = vadd.f32 %v2616, %v2681
        %v2683 = vpop.f32.mrf.mxu0
        %2684 = vdwg.mxu0
        %v2701 = vunpack.c.l.b16 %v2560
        %v2702 = vunpack.c.l.b16 %v2561
        %v2703 = vunpack.c.l.b16 %v2562
        %v2704 = vunpack.c.l.b16 %v2563
        %v2705 = vunpack.c.l.b16 %v2564
        %v2706 = vunpack.c.l.b16 %v2565
        %v2707 = vunpack.c.l.b16 %v2566
        %v2708 = vunpack.c.l.b16 %v2567
        %v2709 = vunpack.c.l.b16 %v2568
        %v2710 = vunpack.c.l.b16 %v2569
        %v2711 = vunpack.c.l.b16 %v2570
        %v2712 = vunpack.c.l.b16 %v2571
        %v2713 = vunpack.c.l.b16 %v2572
        %v2714 = vunpack.c.l.b16 %v2573
        %v2715 = vunpack.c.l.b16 %v2574
        %v2716 = vunpack.c.l.b16 %v2575
        %v2717 = vpack.c.b16 %v2702, %v2701
        %v2718 = vpack.c.b16 %v2704, %v2703
        %v2719 = vpack.c.b16 %v2706, %v2705
        %v2720 = vpack.c.b16 %v2708, %v2707
        %v2721 = vpack.c.b16 %v2710, %v2709
        %v2722 = vpack.c.b16 %v2712, %v2711
        %v2723 = vpack.c.b16 %v2714, %v2713
        %v2724 = vpack.c.b16 %v2716, %v2715
        %2733 = vmatpush.bf16.msra.mxu0 %v2724
        %2734 = vmatpush.bf16.msra.mxu0 %v2723
        %2735 = vmatpush.bf16.msra.mxu0 %v2722
        %2736 = vmatpush.bf16.msra.mxu0 %v2721
        %2737 = vmatpush.bf16.msra.mxu0 %v2720
        %2738 = vmatpush.bf16.msra.mxu0 %v2719
        %2739 = vmatpush.bf16.msra.mxu0 %v2718
        %2740 = vmatpush.bf16.msra.mxu0 %v2717
        %2741 = vmatmul.bf16.gmra.mxu0 %v2219
        %v2742 = vpop.f32.mrf.mxu0
        %v2743 = vadd.f32 %v2617, %v2742
        %v2744 = vpop.f32.mrf.mxu0
        %2745 = vdwg.mxu0
        %v2762 = vunpack.c.l.b16 %v2576
        %v2763 = vunpack.c.l.b16 %v2577
        %v2764 = vunpack.c.l.b16 %v2578
        %v2765 = vunpack.c.l.b16 %v2579
        %v2766 = vunpack.c.l.b16 %v2580
        %v2767 = vunpack.c.l.b16 %v2581
        %v2768 = vunpack.c.l.b16 %v2582
        %v2769 = vunpack.c.l.b16 %v2583
        %v2770 = vunpack.c.l.b16 %v2584
        %v2771 = vunpack.c.l.b16 %v2585
        %v2772 = vunpack.c.l.b16 %v2586
        %v2773 = vunpack.c.l.b16 %v2587
        %v2774 = vunpack.c.l.b16 %v2588
        %v2775 = vunpack.c.l.b16 %v2589
        %v2776 = vunpack.c.l.b16 %v2590
        %v2777 = vunpack.c.l.b16 %v2591
        %v2778 = vpack.c.b16 %v2763, %v2762
        %v2779 = vpack.c.b16 %v2765, %v2764
        %v2780 = vpack.c.b16 %v2767, %v2766
        %v2781 = vpack.c.b16 %v2769, %v2768
        %v2782 = vpack.c.b16 %v2771, %v2770
        %v2783 = vpack.c.b16 %v2773, %v2772
        %v2784 = vpack.c.b16 %v2775, %v2774
        %v2785 = vpack.c.b16 %v2777, %v2776
        %2794 = vmatpush.bf16.msra.mxu0 %v2785
        %2795 = vmatpush.bf16.msra.mxu0 %v2784
        %2796 = vmatpush.bf16.msra.mxu0 %v2783
        %2797 = vmatpush.bf16.msra.mxu0 %v2782
        %2798 = vmatpush.bf16.msra.mxu0 %v2781
        %2799 = vmatpush.bf16.msra.mxu0 %v2780
        %2800 = vmatpush.bf16.msra.mxu0 %v2779
        %2801 = vmatpush.bf16.msra.mxu0 %v2778
        %2802 = vmatmul.bf16.gmra.mxu0 %v2219
        %v2803 = vpop.f32.mrf.mxu0
        %v2804 = vadd.f32 %v2618, %v2803
        %v2805 = vpop.f32.mrf.mxu0
        %2806 = vdwg.mxu0
        %v2823 = vunpack.c.l.b16 %v2592
        %v2824 = vunpack.c.l.b16 %v2593
        %v2825 = vunpack.c.l.b16 %v2594
        %v2826 = vunpack.c.l.b16 %v2595
        %v2827 = vunpack.c.l.b16 %v2596
        %v2828 = vunpack.c.l.b16 %v2597
        %v2829 = vunpack.c.l.b16 %v2598
        %v2830 = vunpack.c.l.b16 %v2599
        %v2831 = vunpack.c.l.b16 %v2600
        %v2832 = vunpack.c.l.b16 %v2601
        %v2833 = vunpack.c.l.b16 %v2602
        %v2834 = vunpack.c.l.b16 %v2603
        %v2835 = vunpack.c.l.b16 %v2604
        %v2836 = vunpack.c.l.b16 %v2605
        %v2837 = vunpack.c.l.b16 %v2606
        %v2838 = vunpack.c.l.b16 %v2607
        %v2839 = vpack.c.b16 %v2824, %v2823
        %v2840 = vpack.c.b16 %v2826, %v2825
        %v2841 = vpack.c.b16 %v2828, %v2827
        %v2842 = vpack.c.b16 %v2830, %v2829
        %v2843 = vpack.c.b16 %v2832, %v2831
        %v2844 = vpack.c.b16 %v2834, %v2833
        %v2845 = vpack.c.b16 %v2836, %v2835
        %v2846 = vpack.c.b16 %v2838, %v2837
        %2855 = vmatpush.bf16.msra.mxu0 %v2846
        %2856 = vmatpush.bf16.msra.mxu0 %v2845
        %2857 = vmatpush.bf16.msra.mxu0 %v2844
        %2858 = vmatpush.bf16.msra.mxu0 %v2843
        %2859 = vmatpush.bf16.msra.mxu0 %v2842
        %2860 = vmatpush.bf16.msra.mxu0 %v2841
        %2861 = vmatpush.bf16.msra.mxu0 %v2840
        %2862 = vmatpush.bf16.msra.mxu0 %v2839
        %2863 = vmatmul.bf16.gmra.mxu0 %v2219
        %v2864 = vpop.f32.mrf.mxu0
        %v2865 = vadd.f32 %v2619, %v2864
        %v2866 = vpop.f32.mrf.mxu0
        %2867 = vdwg.mxu0
        %v2868 = vld [vmem:[%s16] sm:$0xf]
        %v2869 = vld [vmem:[%s16 + $0x4] sm:$0xf]
        %v2870 = vld [vmem:[%s16 + $0x8] sm:$0xf]
        %v2871 = vld [vmem:[%s16 + $0xc] sm:$0xf]
        %v2872 = vld [vmem:[%s16 + $0x10] sm:$0xf]
        %v2873 = vld [vmem:[%s16 + $0x14] sm:$0xf]
        %v2874 = vld [vmem:[%s16 + $0x18] sm:$0xf]
        %v2875 = vld [vmem:[%s16 + $0x1c] sm:$0xf]
        %v2876 = vld [vmem:[%s16 + $0x20] sm:$0xf]
        %v2877 = vld [vmem:[%s16 + $0x24] sm:$0xf]
        %v2878 = vld [vmem:[%s16 + $0x28] sm:$0xf]
        %v2879 = vld [vmem:[%s16 + $0x2c] sm:$0xf]
        %v2880 = vld [vmem:[%s16 + $0x30] sm:$0xf]
        %v2881 = vld [vmem:[%s16 + $0x34] sm:$0xf]
        %v2882 = vld [vmem:[%s16 + $0x38] sm:$0xf]
        %v2883 = vld [vmem:[%s16 + $0x3c] sm:$0xf]
        %v2884 = vld [vmem:[%s16 + $0x40] sm:$0xf]
        %v2885 = vld [vmem:[%s16 + $0x44] sm:$0xf]
        %v2886 = vld [vmem:[%s16 + $0x48] sm:$0xf]
        %v2887 = vld [vmem:[%s16 + $0x4c] sm:$0xf]
        %v2888 = vld [vmem:[%s16 + $0x50] sm:$0xf]
        %v2889 = vld [vmem:[%s16 + $0x54] sm:$0xf]
        %v2890 = vld [vmem:[%s16 + $0x58] sm:$0xf]
        %v2891 = vld [vmem:[%s16 + $0x5c] sm:$0xf]
        %v2892 = vld [vmem:[%s16 + $0x60] sm:$0xf]
        %v2893 = vld [vmem:[%s16 + $0x64] sm:$0xf]
        %v2894 = vld [vmem:[%s16 + $0x68] sm:$0xf]
        %v2895 = vld [vmem:[%s16 + $0x6c] sm:$0xf]
        %v2896 = vld [vmem:[%s16 + $0x70] sm:$0xf]
        %v2897 = vld [vmem:[%s16 + $0x74] sm:$0xf]
        %v2898 = vld [vmem:[%s16 + $0x78] sm:$0xf]
        %v2899 = vld [vmem:[%s16 + $0x7c] sm:$0xf]
        %v2900 = vld [vmem:[%s16 + $0x80] sm:$0xf]
        %v2901 = vld [vmem:[%s16 + $0x84] sm:$0xf]
        %v2902 = vld [vmem:[%s16 + $0x88] sm:$0xf]
        %v2903 = vld [vmem:[%s16 + $0x8c] sm:$0xf]
        %v2904 = vld [vmem:[%s16 + $0x90] sm:$0xf]
        %v2905 = vld [vmem:[%s16 + $0x94] sm:$0xf]
        %v2906 = vld [vmem:[%s16 + $0x98] sm:$0xf]
        %v2907 = vld [vmem:[%s16 + $0x9c] sm:$0xf]
        %v2908 = vld [vmem:[%s16 + $0xa0] sm:$0xf]
        %v2909 = vld [vmem:[%s16 + $0xa4] sm:$0xf]
        %v2910 = vld [vmem:[%s16 + $0xa8] sm:$0xf]
        %v2911 = vld [vmem:[%s16 + $0xac] sm:$0xf]
        %v2912 = vld [vmem:[%s16 + $0xb0] sm:$0xf]
        %v2913 = vld [vmem:[%s16 + $0xb4] sm:$0xf]
        %v2914 = vld [vmem:[%s16 + $0xb8] sm:$0xf]
        %v2915 = vld [vmem:[%s16 + $0xbc] sm:$0xf]
        %v2916 = vld [vmem:[%s16 + $0xc0] sm:$0xf]
        %v2917 = vld [vmem:[%s16 + $0xc4] sm:$0xf]
        %v2918 = vld [vmem:[%s16 + $0xc8] sm:$0xf]
        %v2919 = vld [vmem:[%s16 + $0xcc] sm:$0xf]
        %v2920 = vld [vmem:[%s16 + $0xd0] sm:$0xf]
        %v2921 = vld [vmem:[%s16 + $0xd4] sm:$0xf]
        %v2922 = vld [vmem:[%s16 + $0xd8] sm:$0xf]
        %v2923 = vld [vmem:[%s16 + $0xdc] sm:$0xf]
        %v2924 = vld [vmem:[%s16 + $0xe0] sm:$0xf]
        %v2925 = vld [vmem:[%s16 + $0xe4] sm:$0xf]
        %v2926 = vld [vmem:[%s16 + $0xe8] sm:$0xf]
        %v2927 = vld [vmem:[%s16 + $0xec] sm:$0xf]
        %v2928 = vld [vmem:[%s16 + $0xf0] sm:$0xf]
        %v2929 = vld [vmem:[%s16 + $0xf4] sm:$0xf]
        %v2930 = vld [vmem:[%s16 + $0xf8] sm:$0xf]
        %v2931 = vld [vmem:[%s16 + $0xfc] sm:$0xf]
        %v2932 = vld [vmem:[%s17] sm:$0x1]
        %v2933 = vld [vmem:[%s17 + $0x1] sm:$0x1]
        %v2934 = vld [vmem:[%s17 + $0x2] sm:$0x1]
        %v2935 = vld [vmem:[%s17 + $0x3] sm:$0x1]
        %v2940 = vperm.slane %v2932, 0
        %v2941 = vperm.slane %v2933, 0
        %v2942 = vperm.slane %v2934, 0
        %v2943 = vperm.slane %v2935, 0
        %v2964 = vunpack.c.l.b16 %v2868
        %v2965 = vunpack.c.l.b16 %v2869
        %v2966 = vunpack.c.l.b16 %v2870
        %v2967 = vunpack.c.l.b16 %v2871
        %v2968 = vunpack.c.l.b16 %v2872
        %v2969 = vunpack.c.l.b16 %v2873
        %v2970 = vunpack.c.l.b16 %v2874
        %v2971 = vunpack.c.l.b16 %v2875
        %v2972 = vunpack.c.l.b16 %v2876
        %v2973 = vunpack.c.l.b16 %v2877
        %v2974 = vunpack.c.l.b16 %v2878
        %v2975 = vunpack.c.l.b16 %v2879
        %v2976 = vunpack.c.l.b16 %v2880
        %v2977 = vunpack.c.l.b16 %v2881
        %v2978 = vunpack.c.l.b16 %v2882
        %v2979 = vunpack.c.l.b16 %v2883
        %v2980 = vpack.c.b16 %v2965, %v2964
        %v2981 = vpack.c.b16 %v2967, %v2966
        %v2982 = vpack.c.b16 %v2969, %v2968
        %v2983 = vpack.c.b16 %v2971, %v2970
        %v2984 = vpack.c.b16 %v2973, %v2972
        %v2985 = vpack.c.b16 %v2975, %v2974
        %v2986 = vpack.c.b16 %v2977, %v2976
        %v2987 = vpack.c.b16 %v2979, %v2978
        %2996 = vmatpush.bf16.msra.mxu0 %v2987
        %2997 = vmatpush.bf16.msra.mxu0 %v2986
        %2998 = vmatpush.bf16.msra.mxu0 %v2985
        %2999 = vmatpush.bf16.msra.mxu0 %v2984
        %3000 = vmatpush.bf16.msra.mxu0 %v2983
        %3001 = vmatpush.bf16.msra.mxu0 %v2982
        %3002 = vmatpush.bf16.msra.mxu0 %v2981
        %3003 = vmatpush.bf16.msra.mxu0 %v2980
        %3004 = vmatmul.bf16.gmra.mxu0 %v2219
        %v3005 = vpop.f32.mrf.mxu0
        %v3006 = vadd.f32 %v2940, %v3005
        %v3007 = vpop.f32.mrf.mxu0
        %3008 = vdwg.mxu0
        %v3025 = vunpack.c.l.b16 %v2884
        %v3026 = vunpack.c.l.b16 %v2885
        %v3027 = vunpack.c.l.b16 %v2886
        %v3028 = vunpack.c.l.b16 %v2887
        %v3029 = vunpack.c.l.b16 %v2888
        %v3030 = vunpack.c.l.b16 %v2889
        %v3031 = vunpack.c.l.b16 %v2890
        %v3032 = vunpack.c.l.b16 %v2891
        %v3033 = vunpack.c.l.b16 %v2892
        %v3034 = vunpack.c.l.b16 %v2893
        %v3035 = vunpack.c.l.b16 %v2894
        %v3036 = vunpack.c.l.b16 %v2895
        %v3037 = vunpack.c.l.b16 %v2896
        %v3038 = vunpack.c.l.b16 %v2897
        %v3039 = vunpack.c.l.b16 %v2898
        %v3040 = vunpack.c.l.b16 %v2899
        %v3041 = vpack.c.b16 %v3026, %v3025
        %v3042 = vpack.c.b16 %v3028, %v3027
        %v3043 = vpack.c.b16 %v3030, %v3029
        %v3044 = vpack.c.b16 %v3032, %v3031
        %v3045 = vpack.c.b16 %v3034, %v3033
        %v3046 = vpack.c.b16 %v3036, %v3035
        %v3047 = vpack.c.b16 %v3038, %v3037
        %v3048 = vpack.c.b16 %v3040, %v3039
        %3057 = vmatpush.bf16.msra.mxu0 %v3048
        %3058 = vmatpush.bf16.msra.mxu0 %v3047
        %3059 = vmatpush.bf16.msra.mxu0 %v3046
        %3060 = vmatpush.bf16.msra.mxu0 %v3045
        %3061 = vmatpush.bf16.msra.mxu0 %v3044
        %3062 = vmatpush.bf16.msra.mxu0 %v3043
        %3063 = vmatpush.bf16.msra.mxu0 %v3042
        %3064 = vmatpush.bf16.msra.mxu0 %v3041
        %3065 = vmatmul.bf16.gmra.mxu0 %v2219
        %v3066 = vpop.f32.mrf.mxu0
        %v3067 = vadd.f32 %v2941, %v3066
        %v3068 = vpop.f32.mrf.mxu0
        %3069 = vdwg.mxu0
        %v3086 = vunpack.c.l.b16 %v2900
        %v3087 = vunpack.c.l.b16 %v2901
        %v3088 = vunpack.c.l.b16 %v2902
        %v3089 = vunpack.c.l.b16 %v2903
        %v3090 = vunpack.c.l.b16 %v2904
        %v3091 = vunpack.c.l.b16 %v2905
        %v3092 = vunpack.c.l.b16 %v2906
        %v3093 = vunpack.c.l.b16 %v2907
        %v3094 = vunpack.c.l.b16 %v2908
        %v3095 = vunpack.c.l.b16 %v2909
        %v3096 = vunpack.c.l.b16 %v2910
        %v3097 = vunpack.c.l.b16 %v2911
        %v3098 = vunpack.c.l.b16 %v2912
        %v3099 = vunpack.c.l.b16 %v2913
        %v3100 = vunpack.c.l.b16 %v2914
        %v3101 = vunpack.c.l.b16 %v2915
        %v3102 = vpack.c.b16 %v3087, %v3086
        %v3103 = vpack.c.b16 %v3089, %v3088
        %v3104 = vpack.c.b16 %v3091, %v3090
        %v3105 = vpack.c.b16 %v3093, %v3092
        %v3106 = vpack.c.b16 %v3095, %v3094
        %v3107 = vpack.c.b16 %v3097, %v3096
        %v3108 = vpack.c.b16 %v3099, %v3098
        %v3109 = vpack.c.b16 %v3101, %v3100
        %3118 = vmatpush.bf16.msra.mxu0 %v3109
        %3119 = vmatpush.bf16.msra.mxu0 %v3108
        %3120 = vmatpush.bf16.msra.mxu0 %v3107
        %3121 = vmatpush.bf16.msra.mxu0 %v3106
        %3122 = vmatpush.bf16.msra.mxu0 %v3105
        %3123 = vmatpush.bf16.msra.mxu0 %v3104
        %3124 = vmatpush.bf16.msra.mxu0 %v3103
        %3125 = vmatpush.bf16.msra.mxu0 %v3102
        %3126 = vmatmul.bf16.gmra.mxu0 %v2219
        %v3127 = vpop.f32.mrf.mxu0
        %v3128 = vadd.f32 %v2942, %v3127
        %v3129 = vpop.f32.mrf.mxu0
        %3130 = vdwg.mxu0
        %v3147 = vunpack.c.l.b16 %v2916
        %v3148 = vunpack.c.l.b16 %v2917
        %v3149 = vunpack.c.l.b16 %v2918
        %v3150 = vunpack.c.l.b16 %v2919
        %v3151 = vunpack.c.l.b16 %v2920
        %v3152 = vunpack.c.l.b16 %v2921
        %v3153 = vunpack.c.l.b16 %v2922
        %v3154 = vunpack.c.l.b16 %v2923
        %v3155 = vunpack.c.l.b16 %v2924
        %v3156 = vunpack.c.l.b16 %v2925
        %v3157 = vunpack.c.l.b16 %v2926
        %v3158 = vunpack.c.l.b16 %v2927
        %v3159 = vunpack.c.l.b16 %v2928
        %v3160 = vunpack.c.l.b16 %v2929
        %v3161 = vunpack.c.l.b16 %v2930
        %v3162 = vunpack.c.l.b16 %v2931
        %v3163 = vpack.c.b16 %v3148, %v3147
        %v3164 = vpack.c.b16 %v3150, %v3149
        %v3165 = vpack.c.b16 %v3152, %v3151
        %v3166 = vpack.c.b16 %v3154, %v3153
        %v3167 = vpack.c.b16 %v3156, %v3155
        %v3168 = vpack.c.b16 %v3158, %v3157
        %v3169 = vpack.c.b16 %v3160, %v3159
        %v3170 = vpack.c.b16 %v3162, %v3161
        %3179 = vmatpush.bf16.msra.mxu0 %v3170
        %3180 = vmatpush.bf16.msra.mxu0 %v3169
        %3181 = vmatpush.bf16.msra.mxu0 %v3168
        %3182 = vmatpush.bf16.msra.mxu0 %v3167
        %3183 = vmatpush.bf16.msra.mxu0 %v3166
        %3184 = vmatpush.bf16.msra.mxu0 %v3165
        %3185 = vmatpush.bf16.msra.mxu0 %v3164
        %3186 = vmatpush.bf16.msra.mxu0 %v3163
        %3187 = vmatmul.bf16.gmra.mxu0 %v2219
        %v3188 = vpop.f32.mrf.mxu0
        %v3189 = vadd.f32 %v2943, %v3188
        %v3190 = vpop.f32.mrf.mxu0
        %3191 = vdwg.mxu0
        %v3192 = vpack.c.bf16 %v2358, %v2358
        %v3193 = vpack.c.bf16 %v2419, %v2419
        %v3194 = vpack.c.bf16 %v2480, %v2480
        %v3195 = vpack.c.bf16 %v2541, %v2541
        %v3196 = vpack.c.bf16 %v2682, %v2682
        %v3197 = vpack.c.bf16 %v2743, %v2743
        %v3198 = vpack.c.bf16 %v2804, %v2804
        %v3199 = vpack.c.bf16 %v2865, %v2865
        %v3201 = vsel %vm1825, %v3192, 0
        %v3204 = vsel %vm1825, %v3196, 0
        %3206 = vmatpush.bf16.xpose.msra.mxu0 0
        %3207 = vmatpush.bf16.xpose.msra.mxu0 0
        %3208 = vmatpush.bf16.xpose.msra.mxu0 0
        %3209 = vmatpush.bf16.xpose.msra.mxu0 0
        %3210 = vmatpush.bf16.xpose.msra.mxu0 0
        %3211 = vmatpush.bf16.xpose.msra.mxu0 0
        %3212 = vmatpush.bf16.xpose.msra.mxu0 0
        %3213 = vmatpush.bf16.xpose.msra.mxu0 %v3204
        %3214 = vmatmul.bf16.gmra.mxu0 %v3201
        %v3215 = vpop.f32.mrf.mxu0
        %v3216 = vadd.f32 0.0, %v3215
        %v3217 = vpop.f32.mrf.mxu0
        %3218 = vdwg.mxu0
        %v3220 = vsel %vm1825, %v3193, 0
        %v3223 = vsel %vm1825, %v3197, 0
        %3225 = vmatpush.bf16.xpose.msra.mxu0 0
        %3226 = vmatpush.bf16.xpose.msra.mxu0 0
        %3227 = vmatpush.bf16.xpose.msra.mxu0 0
        %3228 = vmatpush.bf16.xpose.msra.mxu0 0
        %3229 = vmatpush.bf16.xpose.msra.mxu0 0
        %3230 = vmatpush.bf16.xpose.msra.mxu0 0
        %3231 = vmatpush.bf16.xpose.msra.mxu0 0
        %3232 = vmatpush.bf16.xpose.msra.mxu0 %v3223
        %3233 = vmatmul.bf16.gmra.mxu0 %v3220
        %v3234 = vpop.f32.mrf.mxu0
        %v3235 = vadd.f32 0.0, %v3234
        %v3236 = vpop.f32.mrf.mxu0
        %3237 = vdwg.mxu0
        %v3239 = vsel %vm1825, %v3194, 0
        %v3242 = vsel %vm1825, %v3198, 0
        %3244 = vmatpush.bf16.xpose.msra.mxu0 0
        %3245 = vmatpush.bf16.xpose.msra.mxu0 0
        %3246 = vmatpush.bf16.xpose.msra.mxu0 0
        %3247 = vmatpush.bf16.xpose.msra.mxu0 0
        %3248 = vmatpush.bf16.xpose.msra.mxu0 0
        %3249 = vmatpush.bf16.xpose.msra.mxu0 0
        %3250 = vmatpush.bf16.xpose.msra.mxu0 0
        %3251 = vmatpush.bf16.xpose.msra.mxu0 %v3242
        %3252 = vmatmul.bf16.gmra.mxu0 %v3239
        %v3253 = vpop.f32.mrf.mxu0
        %v3254 = vadd.f32 0.0, %v3253
        %v3255 = vpop.f32.mrf.mxu0
        %3256 = vdwg.mxu0
        %v3258 = vsel %vm1825, %v3195, 0
        %v3261 = vsel %vm1825, %v3199, 0
        %3263 = vmatpush.bf16.xpose.msra.mxu0 0
        %3264 = vmatpush.bf16.xpose.msra.mxu0 0
        %3265 = vmatpush.bf16.xpose.msra.mxu0 0
        %3266 = vmatpush.bf16.xpose.msra.mxu0 0
        %3267 = vmatpush.bf16.xpose.msra.mxu0 0
        %3268 = vmatpush.bf16.xpose.msra.mxu0 0
        %3269 = vmatpush.bf16.xpose.msra.mxu0 0
        %3270 = vmatpush.bf16.xpose.msra.mxu0 %v3261
        %3271 = vmatmul.bf16.gmra.mxu0 %v3258
        %v3272 = vpop.f32.mrf.mxu0
        %v3273 = vadd.f32 0.0, %v3272
        %v3274 = vpop.f32.mrf.mxu0
        %3275 = vdwg.mxu0
        %v3276 = vmul.f32 %v3216, 0.17677669
        %v3277 = vmul.f32 %v3235, 0.17677669
        %v3278 = vmul.f32 %v3254, 0.17677669
        %v3279 = vmul.f32 %v3273, 0.17677669
        %v3280 = vadd.f32 %v3276, %v792
        %v3281 = vadd.f32 %v3277, %v792
        %v3282 = vadd.f32 %v3278, %v792
        %v3283 = vadd.f32 %v3279, %v792
        %v3284 = vsel %vm1910, %v3280, -inf
        %3285 = vmax.xlane.f32.xlu0 %v3284
        %v3286 = vpop.xlane.xlu0 %3285
        %v3287 = vsel %vm1910, %v3281, -inf
        %3288 = vmax.xlane.f32.xlu0 %v3287
        %v3289 = vpop.xlane.xlu0 %3288
        %v3290 = vsel %vm1910, %v3282, -inf
        %3291 = vmax.xlane.f32.xlu0 %v3290
        %v3292 = vpop.xlane.xlu0 %3291
        %v3293 = vsel %vm1910, %v3283, -inf
        %3294 = vmax.xlane.f32.xlu0 %v3293
        %v3295 = vpop.xlane.xlu0 %3294
        %v3296 = vsub.f32 %v3280, %v3286
        %v3297 = vsub.f32 %v3281, %v3289
        %v3298 = vsub.f32 %v3282, %v3292
        %v3299 = vsub.f32 %v3283, %v3295
        %v3300 = vmul.f32 %v3296, 1.442695
        %v3301 = vpow.pop %v3300
        %v3302 = vmul.f32 %v3297, 1.442695
        %v3303 = vpow.pop %v3302
        %v3304 = vmul.f32 %v3298, 1.442695
        %v3305 = vpow.pop %v3304
        %v3306 = vmul.f32 %v3299, 1.442695
        %v3307 = vpow.pop %v3306
        %v3308 = vsel %vm1910, %v3301, 0.0
        %3309 = vadd.xlane.f32.xlu0 %v3308
        %v3310 = vpop.xlane.xlu0 %3309
        %v3311 = vsel %vm1910, %v3303, 0.0
        %3312 = vadd.xlane.f32.xlu0 %v3311
        %v3313 = vpop.xlane.xlu0 %3312
        %v3314 = vsel %vm1910, %v3305, 0.0
        %3315 = vadd.xlane.f32.xlu0 %v3314
        %v3316 = vpop.xlane.xlu0 %3315
        %v3317 = vsel %vm1910, %v3307, 0.0
        %3318 = vadd.xlane.f32.xlu0 %v3317
        %v3319 = vpop.xlane.xlu0 %3318
        %v3320 = vrcp.pop %v3310
        %v3321 = vrcp.pop %v3313
        %v3322 = vrcp.pop %v3316
        %v3323 = vrcp.pop %v3319
        %v3324 = vmul.f32 %v3301, %v3320
        %v3325 = vmul.f32 %v3303, %v3321
        %v3326 = vmul.f32 %v3305, %v3322
        %v3327 = vmul.f32 %v3307, %v3323
        %v3328 = vpack.c.bf16 %v3324, %v3324
        %v3329 = vpack.c.bf16 %v3325, %v3325
        %v3330 = vpack.c.bf16 %v3326, %v3326
        %v3331 = vpack.c.bf16 %v3327, %v3327
        %v3332 = vpack.c.bf16 %v3006, %v3006
        %v3333 = vpack.c.bf16 %v3067, %v3067
        %v3334 = vpack.c.bf16 %v3128, %v3128
        %v3335 = vpack.c.bf16 %v3189, %v3189
        %v3337 = vsel %vm1910, %v3328, 0
        %v3340 = vsel %vm1966, %v3332, 0
        %3342 = vmatpush.bf16.msra.mxu0 0
        %3343 = vmatpush.bf16.msra.mxu0 0
        %3344 = vmatpush.bf16.msra.mxu0 0
        %3345 = vmatpush.bf16.msra.mxu0 0
        %3346 = vmatpush.bf16.msra.mxu0 0
        %3347 = vmatpush.bf16.msra.mxu0 0
        %3348 = vmatpush.bf16.msra.mxu0 0
        %3349 = vmatpush.bf16.msra.mxu0 %v3340
        %3350 = vmatmul.bf16.gmra.mxu0 %v3337
        %v3351 = vpop.f32.mrf.mxu0
        %v3352 = vadd.f32 0.0, %v3351
        %v3353 = vpop.f32.mrf.mxu0
        %3354 = vdwg.mxu0
        %v3356 = vsel %vm1910, %v3329, 0
        %v3359 = vsel %vm1966, %v3333, 0
        %3361 = vmatpush.bf16.msra.mxu0 0
        %3362 = vmatpush.bf16.msra.mxu0 0
        %3363 = vmatpush.bf16.msra.mxu0 0
        %3364 = vmatpush.bf16.msra.mxu0 0
        %3365 = vmatpush.bf16.msra.mxu0 0
        %3366 = vmatpush.bf16.msra.mxu0 0
        %3367 = vmatpush.bf16.msra.mxu0 0
        %3368 = vmatpush.bf16.msra.mxu0 %v3359
        %3369 = vmatmul.bf16.gmra.mxu0 %v3356
        %v3370 = vpop.f32.mrf.mxu0
        %v3371 = vadd.f32 0.0, %v3370
        %v3372 = vpop.f32.mrf.mxu0
        %3373 = vdwg.mxu0
        %v3375 = vsel %vm1910, %v3330, 0
        %v3378 = vsel %vm1966, %v3334, 0
        %3380 = vmatpush.bf16.msra.mxu0 0
        %3381 = vmatpush.bf16.msra.mxu0 0
        %3382 = vmatpush.bf16.msra.mxu0 0
        %3383 = vmatpush.bf16.msra.mxu0 0
        %3384 = vmatpush.bf16.msra.mxu0 0
        %3385 = vmatpush.bf16.msra.mxu0 0
        %3386 = vmatpush.bf16.msra.mxu0 0
        %3387 = vmatpush.bf16.msra.mxu0 %v3378
        %3388 = vmatmul.bf16.gmra.mxu0 %v3375
        %v3389 = vpop.f32.mrf.mxu0
        %v3390 = vadd.f32 0.0, %v3389
        %v3391 = vpop.f32.mrf.mxu0
        %3392 = vdwg.mxu0
        %v3394 = vsel %vm1910, %v3331, 0
        %v3397 = vsel %vm1966, %v3335, 0
        %3399 = vmatpush.bf16.msra.mxu0 0
        %3400 = vmatpush.bf16.msra.mxu0 0
        %3401 = vmatpush.bf16.msra.mxu0 0
        %3402 = vmatpush.bf16.msra.mxu0 0
        %3403 = vmatpush.bf16.msra.mxu0 0
        %3404 = vmatpush.bf16.msra.mxu0 0
        %3405 = vmatpush.bf16.msra.mxu0 0
        %3406 = vmatpush.bf16.msra.mxu0 %v3397
        %3407 = vmatmul.bf16.gmra.mxu0 %v3394
        %v3408 = vpop.f32.mrf.mxu0
        %v3409 = vadd.f32 0.0, %v3408
        %v3410 = vpop.f32.mrf.mxu0
        %3411 = vdwg.mxu0
        %v3412 = vpack.c.bf16 %v3352, %v3352
        %v3413 = vpack.c.bf16 %v3371, %v3371
        %v3414 = vpack.c.bf16 %v3390, %v3390
        %v3415 = vpack.c.bf16 %v3409, %v3409
        %v3416 = vld [vmem:[%s18] sm:$0xf]
        %v3417 = vld [vmem:[%s18 + $0x4] sm:$0xf]
        %v3418 = vld [vmem:[%s18 + $0x8] sm:$0xf]
        %v3419 = vld [vmem:[%s18 + $0xc] sm:$0xf]
        %v3420 = vld [vmem:[%s18 + $0x10] sm:$0xf]
        %v3421 = vld [vmem:[%s18 + $0x14] sm:$0xf]
        %v3422 = vld [vmem:[%s18 + $0x18] sm:$0xf]
        %v3423 = vld [vmem:[%s18 + $0x1c] sm:$0xf]
        %v3424 = vld [vmem:[%s18 + $0x20] sm:$0xf]
        %v3425 = vld [vmem:[%s18 + $0x24] sm:$0xf]
        %v3426 = vld [vmem:[%s18 + $0x28] sm:$0xf]
        %v3427 = vld [vmem:[%s18 + $0x2c] sm:$0xf]
        %v3428 = vld [vmem:[%s18 + $0x30] sm:$0xf]
        %v3429 = vld [vmem:[%s18 + $0x34] sm:$0xf]
        %v3430 = vld [vmem:[%s18 + $0x38] sm:$0xf]
        %v3431 = vld [vmem:[%s18 + $0x3c] sm:$0xf]
        %v3436 = vunpack.c.l.b16 %v3416
        %v3437 = vunpack.c.l.b16 %v3417
        %v3438 = vunpack.c.l.b16 %v3418
        %v3439 = vunpack.c.l.b16 %v3419
        %v3440 = vpack.c.b16 %v3437, %v3436
        %v3441 = vpack.c.b16 %v3439, %v3438
        %v3445 = vsel %vm1825, %v3412, 0
        %3447 = vmatpush.bf16.msra.mxu0 0
        %3448 = vmatpush.bf16.msra.mxu0 0
        %3449 = vmatpush.bf16.msra.mxu0 0
        %3450 = vmatpush.bf16.msra.mxu0 0
        %3451 = vmatpush.bf16.msra.mxu0 0
        %3452 = vmatpush.bf16.msra.mxu0 0
        %3453 = vmatpush.bf16.msra.mxu0 %v3441
        %3454 = vmatpush.bf16.msra.mxu0 %v3440
        %3455 = vmatmul.bf16.gmra.mxu0 %v3445
        %v3456 = vpop.f32.mrf.mxu0
        %v3457 = vadd.f32 0.0, %v3456
        %v3458 = vpop.f32.mrf.mxu0
        %3459 = vdwg.mxu0
        %v3464 = vunpack.c.l.b16 %v3420
        %v3465 = vunpack.c.l.b16 %v3421
        %v3466 = vunpack.c.l.b16 %v3422
        %v3467 = vunpack.c.l.b16 %v3423
        %v3468 = vpack.c.b16 %v3465, %v3464
        %v3469 = vpack.c.b16 %v3467, %v3466
        %v3473 = vsel %vm1825, %v3413, 0
        %3475 = vmatpush.bf16.msra.mxu0 0
        %3476 = vmatpush.bf16.msra.mxu0 0
        %3477 = vmatpush.bf16.msra.mxu0 0
        %3478 = vmatpush.bf16.msra.mxu0 0
        %3479 = vmatpush.bf16.msra.mxu0 0
        %3480 = vmatpush.bf16.msra.mxu0 0
        %3481 = vmatpush.bf16.msra.mxu0 %v3469
        %3482 = vmatpush.bf16.msra.mxu0 %v3468
        %3483 = vmatmul.bf16.gmra.mxu0 %v3473
        %v3484 = vpop.f32.mrf.mxu0
        %v3485 = vadd.f32 0.0, %v3484
        %v3486 = vpop.f32.mrf.mxu0
        %3487 = vdwg.mxu0
        %v3492 = vunpack.c.l.b16 %v3424
        %v3493 = vunpack.c.l.b16 %v3425
        %v3494 = vunpack.c.l.b16 %v3426
        %v3495 = vunpack.c.l.b16 %v3427
        %v3496 = vpack.c.b16 %v3493, %v3492
        %v3497 = vpack.c.b16 %v3495, %v3494
        %v3501 = vsel %vm1825, %v3414, 0
        %3503 = vmatpush.bf16.msra.mxu0 0
        %3504 = vmatpush.bf16.msra.mxu0 0
        %3505 = vmatpush.bf16.msra.mxu0 0
        %3506 = vmatpush.bf16.msra.mxu0 0
        %3507 = vmatpush.bf16.msra.mxu0 0
        %3508 = vmatpush.bf16.msra.mxu0 0
        %3509 = vmatpush.bf16.msra.mxu0 %v3497
        %3510 = vmatpush.bf16.msra.mxu0 %v3496
        %3511 = vmatmul.bf16.gmra.mxu0 %v3501
        %v3512 = vpop.f32.mrf.mxu0
        %v3513 = vadd.f32 0.0, %v3512
        %v3514 = vpop.f32.mrf.mxu0
        %3515 = vdwg.mxu0
        %v3520 = vunpack.c.l.b16 %v3428
        %v3521 = vunpack.c.l.b16 %v3429
        %v3522 = vunpack.c.l.b16 %v3430
        %v3523 = vunpack.c.l.b16 %v3431
        %v3524 = vpack.c.b16 %v3521, %v3520
        %v3525 = vpack.c.b16 %v3523, %v3522
        %v3529 = vsel %vm1825, %v3415, 0
        %3531 = vmatpush.bf16.msra.mxu0 0
        %3532 = vmatpush.bf16.msra.mxu0 0
        %3533 = vmatpush.bf16.msra.mxu0 0
        %3534 = vmatpush.bf16.msra.mxu0 0
        %3535 = vmatpush.bf16.msra.mxu0 0
        %3536 = vmatpush.bf16.msra.mxu0 0
        %3537 = vmatpush.bf16.msra.mxu0 %v3525
        %3538 = vmatpush.bf16.msra.mxu0 %v3524
        %3539 = vmatmul.bf16.gmra.mxu0 %v3529
        %v3540 = vpop.f32.mrf.mxu0
        %v3541 = vadd.f32 0.0, %v3540
        %v3542 = vpop.f32.mrf.mxu0
        %3543 = vdwg.mxu0
        %v3544 = vadd.f32 %v3457, %v3485
        %v3545 = vadd.f32 %v3544, %v3513
        %v3546 = vadd.f32 %v3545, %v3541
        %v3547 = vld [vmem:[%s19] sm:$0x1]
        %v3549 = vperm.slane %v3547, 0
        %v3551 = vadd.f32 %v3546, %v3549
        %v3552 = vadd.f32 %v2180, %v3551
        %3553 = vadd.xlane.f32.xlu0 %v3552
        %v3554 = vpop.xlane.xlu0 %3553
        %v3555 = vmul.f32 %v3554, %v801
        %v3556 = vsub.f32 %v3552, %v3555
        %v3557 = vmul.f32 %v3556, %v3556
        %3558 = vadd.xlane.f32.xlu0 %v3557
        %v3559 = vpop.xlane.xlu0 %3558
        %v3560 = vmul.f32 %v3559, %v813
        %v3561 = vrsqrt.pop %v3560
        %v3562 = vmul.f32 %v3561, %v3560
        %v3563 = vmul.f32 %v3562, %v3561
        %v3564 = vmul.f32 0.5, %v3563
        %v3565 = vsub.f32 1.5, %v3564
        %v3566 = vmul.f32 %v3561, %v3565
        %v3567 = vmul.f32 %v3560, %v3566
        %vm3568 = vcmp.eq.f32.partialorder %v3560, inf
        %v3569 = vsel %vm3568, %v3560, %v3567
        %vm3570 = vcmp.eq.f32.partialorder %v3560, 0.0
        %v3571 = vand.u32 %v3560, 2147483648
        %v3572 = vsel %vm3570, %v3571, %v3569
        %v3573 = vadd.f32 %v3572, 1e-06
        %v3574 = vrcp.pop %v3573
        %v3575 = vmul.f32 %v3573, %v3574
        %v3576 = vsub.f32 1.0, %v3575
        %v3577 = vmul.f32 %v3574, %v3576
        %v3578 = vadd.f32 %v3574, %v3577
        %vm3579 = vweird.f32 %v3573
        %vm3580 = vweird.f32 %v3574
        %vm3581 = vmor %vm3579, %vm3580
        %v3582 = vsel %vm3581, %v3574, %v3578
        %v3583 = vand.u32 2147483647, %v3573
        %vm3584 = vcmp.eq.f32.partialorder %v3583, 8.507059e+37
        %v3585 = vand.u32 %v3573, 2147483648
        %v3586 = vor.u32 1.1754944e-38, %v3585
        %v3587 = vsel %vm3584, %v3586, %v3582
        %v3588 = vmul.f32 %v3556, %v3587
        %v3589 = vadd.f32 %v3588, 0.0
        %v3590 = vpack.c.bf16 %v3589, %v3589
        %v3591 = vld [vmem:[%s20] sm:$0xff]
        %v3592 = vld [vmem:[%s20 + $0x8] sm:$0xff]
        %v3593 = vld [vmem:[%s20 + $0x10] sm:$0xff]
        %v3594 = vld [vmem:[%s20 + $0x18] sm:$0xff]
        %v3595 = vld [vmem:[%s20 + $0x20] sm:$0xff]
        %v3596 = vld [vmem:[%s20 + $0x28] sm:$0xff]
        %v3597 = vld [vmem:[%s20 + $0x30] sm:$0xff]
        %v3598 = vld [vmem:[%s20 + $0x38] sm:$0xff]
        %v3599 = vld [vmem:[%s20 + $0x40] sm:$0xff]
        %v3600 = vld [vmem:[%s20 + $0x48] sm:$0xff]
        %v3601 = vld [vmem:[%s20 + $0x50] sm:$0xff]
        %v3602 = vld [vmem:[%s20 + $0x58] sm:$0xff]
        %v3603 = vld [vmem:[%s20 + $0x60] sm:$0xff]
        %v3604 = vld [vmem:[%s20 + $0x68] sm:$0xff]
        %v3605 = vld [vmem:[%s20 + $0x70] sm:$0xff]
        %v3606 = vld [vmem:[%s20 + $0x78] sm:$0xff]
        %v3607 = vld [vmem:[%s21] sm:$0x3]
        %v3609 = vperm.slane %v3607, 0
        %v3610 = vperm.slane %v3607, 1
        %v3629 = vunpack.c.l.b16 %v3591
        %v3630 = vunpack.c.h.b16 %v3591
        %v3631 = vunpack.c.l.b16 %v3592
        %v3632 = vunpack.c.h.b16 %v3592
        %v3633 = vunpack.c.l.b16 %v3593
        %v3634 = vunpack.c.h.b16 %v3593
        %v3635 = vunpack.c.l.b16 %v3594
        %v3636 = vunpack.c.h.b16 %v3594
        %v3637 = vunpack.c.l.b16 %v3595
        %v3638 = vunpack.c.h.b16 %v3595
        %v3639 = vunpack.c.l.b16 %v3596
        %v3640 = vunpack.c.h.b16 %v3596
        %v3641 = vunpack.c.l.b16 %v3597
        %v3642 = vunpack.c.h.b16 %v3597
        %v3643 = vunpack.c.l.b16 %v3598
        %v3644 = vunpack.c.h.b16 %v3598
        %v3645 = vunpack.c.l.b16 %v3599
        %v3646 = vunpack.c.h.b16 %v3599
        %v3647 = vunpack.c.l.b16 %v3600
        %v3648 = vunpack.c.h.b16 %v3600
        %v3649 = vunpack.c.l.b16 %v3601
        %v3650 = vunpack.c.h.b16 %v3601
        %v3651 = vunpack.c.l.b16 %v3602
        %v3652 = vunpack.c.h.b16 %v3602
        %v3653 = vunpack.c.l.b16 %v3603
        %v3654 = vunpack.c.h.b16 %v3603
        %v3655 = vunpack.c.l.b16 %v3604
        %v3656 = vunpack.c.h.b16 %v3604
        %v3657 = vunpack.c.l.b16 %v3605
        %v3658 = vunpack.c.h.b16 %v3605
        %v3659 = vunpack.c.l.b16 %v3606
        %v3660 = vunpack.c.h.b16 %v3606
        %v3661 = vpack.c.b16 %v3631, %v3629
        %v3662 = vpack.c.b16 %v3632, %v3630
        %v3663 = vpack.c.b16 %v3635, %v3633
        %v3664 = vpack.c.b16 %v3636, %v3634
        %v3665 = vpack.c.b16 %v3639, %v3637
        %v3666 = vpack.c.b16 %v3640, %v3638
        %v3667 = vpack.c.b16 %v3643, %v3641
        %v3668 = vpack.c.b16 %v3644, %v3642
        %v3669 = vpack.c.b16 %v3647, %v3645
        %v3670 = vpack.c.b16 %v3648, %v3646
        %v3671 = vpack.c.b16 %v3651, %v3649
        %v3672 = vpack.c.b16 %v3652, %v3650
        %v3673 = vpack.c.b16 %v3655, %v3653
        %v3674 = vpack.c.b16 %v3656, %v3654
        %v3675 = vpack.c.b16 %v3659, %v3657
        %v3676 = vpack.c.b16 %v3660, %v3658
        %3693 = vmatpush.bf16.msra.mxu0 %v3675
        %3694 = vmatpush.bf16.msra.mxu0 %v3673
        %3695 = vmatpush.bf16.msra.mxu0 %v3671
        %3696 = vmatpush.bf16.msra.mxu0 %v3669
        %3697 = vmatpush.bf16.msra.mxu0 %v3667
        %3698 = vmatpush.bf16.msra.mxu0 %v3665
        %3699 = vmatpush.bf16.msra.mxu0 %v3663
        %3700 = vmatpush.bf16.msra.mxu0 %v3661
        %3701 = vmatmul.bf16.gmra.mxu0 %v3590
        %v3702 = vpop.f32.mrf.mxu0
        %v3703 = vadd.f32 %v3609, %v3702
        %v3704 = vpop.f32.mrf.mxu0
        %3705 = vdwg.mxu0
        %3706 = vmatpush.bf16.msra.mxu0 %v3676
        %3707 = vmatpush.bf16.msra.mxu0 %v3674
        %3708 = vmatpush.bf16.msra.mxu0 %v3672
        %3709 = vmatpush.bf16.msra.mxu0 %v3670
        %3710 = vmatpush.bf16.msra.mxu0 %v3668
        %3711 = vmatpush.bf16.msra.mxu0 %v3666
        %3712 = vmatpush.bf16.msra.mxu0 %v3664
        %3713 = vmatpush.bf16.msra.mxu0 %v3662
        %3714 = vmatmul.bf16.gmra.mxu0 %v3590
        %v3715 = vpop.f32.mrf.mxu0
        %v3716 = vadd.f32 %v3610, %v3715
        %v3717 = vpop.f32.mrf.mxu0
        %3718 = vdwg.mxu0
        %v3719 = vmax.f32 %v3703, 0.0
        %v3720 = vmax.f32 %v3716, 0.0
        %v3721 = vpack.c.bf16 %v3719, %v3719
        %v3722 = vpack.c.bf16 %v3720, %v3720
        %v3723 = vld [vmem:[%s22] sm:$0xf]
        %v3724 = vld [vmem:[%s22 + $0x4] sm:$0xf]
        %v3725 = vld [vmem:[%s22 + $0x8] sm:$0xf]
        %v3726 = vld [vmem:[%s22 + $0xc] sm:$0xf]
        %v3727 = vld [vmem:[%s22 + $0x10] sm:$0xf]
        %v3728 = vld [vmem:[%s22 + $0x14] sm:$0xf]
        %v3729 = vld [vmem:[%s22 + $0x18] sm:$0xf]
        %v3730 = vld [vmem:[%s22 + $0x1c] sm:$0xf]
        %v3731 = vld [vmem:[%s22 + $0x20] sm:$0xf]
        %v3732 = vld [vmem:[%s22 + $0x24] sm:$0xf]
        %v3733 = vld [vmem:[%s22 + $0x28] sm:$0xf]
        %v3734 = vld [vmem:[%s22 + $0x2c] sm:$0xf]
        %v3735 = vld [vmem:[%s22 + $0x30] sm:$0xf]
        %v3736 = vld [vmem:[%s22 + $0x34] sm:$0xf]
        %v3737 = vld [vmem:[%s22 + $0x38] sm:$0xf]
        %v3738 = vld [vmem:[%s22 + $0x3c] sm:$0xf]
        %v3739 = vld [vmem:[%s22 + $0x40] sm:$0xf]
        %v3740 = vld [vmem:[%s22 + $0x44] sm:$0xf]
        %v3741 = vld [vmem:[%s22 + $0x48] sm:$0xf]
        %v3742 = vld [vmem:[%s22 + $0x4c] sm:$0xf]
        %v3743 = vld [vmem:[%s22 + $0x50] sm:$0xf]
        %v3744 = vld [vmem:[%s22 + $0x54] sm:$0xf]
        %v3745 = vld [vmem:[%s22 + $0x58] sm:$0xf]
        %v3746 = vld [vmem:[%s22 + $0x5c] sm:$0xf]
        %v3747 = vld [vmem:[%s22 + $0x60] sm:$0xf]
        %v3748 = vld [vmem:[%s22 + $0x64] sm:$0xf]
        %v3749 = vld [vmem:[%s22 + $0x68] sm:$0xf]
        %v3750 = vld [vmem:[%s22 + $0x6c] sm:$0xf]
        %v3751 = vld [vmem:[%s22 + $0x70] sm:$0xf]
        %v3752 = vld [vmem:[%s22 + $0x74] sm:$0xf]
        %v3753 = vld [vmem:[%s22 + $0x78] sm:$0xf]
        %v3754 = vld [vmem:[%s22 + $0x7c] sm:$0xf]
        %v3787 = vunpack.c.l.b16 %v3723
        %v3788 = vunpack.c.l.b16 %v3724
        %v3789 = vunpack.c.l.b16 %v3725
        %v3790 = vunpack.c.l.b16 %v3726
        %v3791 = vunpack.c.l.b16 %v3727
        %v3792 = vunpack.c.l.b16 %v3728
        %v3793 = vunpack.c.l.b16 %v3729
        %v3794 = vunpack.c.l.b16 %v3730
        %v3795 = vunpack.c.l.b16 %v3731
        %v3796 = vunpack.c.l.b16 %v3732
        %v3797 = vunpack.c.l.b16 %v3733
        %v3798 = vunpack.c.l.b16 %v3734
        %v3799 = vunpack.c.l.b16 %v3735
        %v3800 = vunpack.c.l.b16 %v3736
        %v3801 = vunpack.c.l.b16 %v3737
        %v3802 = vunpack.c.l.b16 %v3738
        %v3803 = vunpack.c.l.b16 %v3739
        %v3804 = vunpack.c.l.b16 %v3740
        %v3805 = vunpack.c.l.b16 %v3741
        %v3806 = vunpack.c.l.b16 %v3742
        %v3807 = vunpack.c.l.b16 %v3743
        %v3808 = vunpack.c.l.b16 %v3744
        %v3809 = vunpack.c.l.b16 %v3745
        %v3810 = vunpack.c.l.b16 %v3746
        %v3811 = vunpack.c.l.b16 %v3747
        %v3812 = vunpack.c.l.b16 %v3748
        %v3813 = vunpack.c.l.b16 %v3749
        %v3814 = vunpack.c.l.b16 %v3750
        %v3815 = vunpack.c.l.b16 %v3751
        %v3816 = vunpack.c.l.b16 %v3752
        %v3817 = vunpack.c.l.b16 %v3753
        %v3818 = vunpack.c.l.b16 %v3754
        %v3819 = vpack.c.b16 %v3788, %v3787
        %v3820 = vpack.c.b16 %v3790, %v3789
        %v3821 = vpack.c.b16 %v3792, %v3791
        %v3822 = vpack.c.b16 %v3794, %v3793
        %v3823 = vpack.c.b16 %v3796, %v3795
        %v3824 = vpack.c.b16 %v3798, %v3797
        %v3825 = vpack.c.b16 %v3800, %v3799
        %v3826 = vpack.c.b16 %v3802, %v3801
        %v3827 = vpack.c.b16 %v3804, %v3803
        %v3828 = vpack.c.b16 %v3806, %v3805
        %v3829 = vpack.c.b16 %v3808, %v3807
        %v3830 = vpack.c.b16 %v3810, %v3809
        %v3831 = vpack.c.b16 %v3812, %v3811
        %v3832 = vpack.c.b16 %v3814, %v3813
        %v3833 = vpack.c.b16 %v3816, %v3815
        %v3834 = vpack.c.b16 %v3818, %v3817
        %3851 = vmatpush.bf16.msra.mxu0 %v3826
        %3852 = vmatpush.bf16.msra.mxu0 %v3825
        %3853 = vmatpush.bf16.msra.mxu0 %v3824
        %3854 = vmatpush.bf16.msra.mxu0 %v3823
        %3855 = vmatpush.bf16.msra.mxu0 %v3822
        %3856 = vmatpush.bf16.msra.mxu0 %v3821
        %3857 = vmatpush.bf16.msra.mxu0 %v3820
        %3858 = vmatpush.bf16.msra.mxu0 %v3819
        %3859 = vmatmul.bf16.gmra.mxu0 %v3721
        %v3860 = vpop.f32.mrf.mxu0
        %v3861 = vadd.f32 0.0, %v3860
        %v3862 = vpop.f32.mrf.mxu0
        %3863 = vdwg.mxu0
        %3864 = vmatpush.bf16.msra.mxu0 %v3834
        %3865 = vmatpush.bf16.msra.mxu0 %v3833
        %3866 = vmatpush.bf16.msra.mxu0 %v3832
        %3867 = vmatpush.bf16.msra.mxu0 %v3831
        %3868 = vmatpush.bf16.msra.mxu0 %v3830
        %3869 = vmatpush.bf16.msra.mxu0 %v3829
        %3870 = vmatpush.bf16.msra.mxu0 %v3828
        %3871 = vmatpush.bf16.msra.mxu0 %v3827
        %3872 = vmatmul.bf16.gmra.mxu0 %v3722
        %v3873 = vpop.f32.mrf.mxu0
        %v3874 = vadd.f32 %v3861, %v3873
        %v3875 = vpop.f32.mrf.mxu0
        %3876 = vdwg.mxu0
        %v3877 = vadd.f32 %v3552, %v3874
        %v3878 = vld [vmem:[%s23] sm:$0x1]
        %v3880 = vperm.slane %v3878, 0
        %v3882 = vadd.f32 %v3877, %v3880
        %3883 = vst [vmem:[%s767] sm:$0xff] %v3882
        %s3884 = sand.u32 %s570, 1
        %s3885 = scalar_lea.sflag [#allocation3], %s3884
        %s3886 = sand.u32 %s570, 1
        %s3887 = smul.addr %s3886, 8
        %s3888 = scalar_lea.vmem [#allocation2], %s3887
        // Predicated region
        $region117: #{tpu_custom_call.1} parent=115 // pred_check
          %p3889 = pneg %p580
        $region118: #{tpu_custom_call.1} parent=115 // pred_check_branch
          %3891 = sbr.rel (%p3889) target = $region120
        $region119: #{tpu_custom_call.1} parent=115 // pred_region
          %3893 = vsyncadd %s3885, 0
          %s3894 = smul.addr %s38, 8
          %s3895 = scalar_lea.hbm %s24, %s3894
          %s3897 = sshll.u32 %s3888, 4
          %s3898 = int_to_ptr.vmem [resolvable:$true] %s3897
          %s3899 = sshll.u32 %s3895, 4
          %s3900 = int_to_ptr.hbm [resolvable:$true] %s3899
          %3902 = dma.vmem_to_hbm [thread:$0]  %s3898, 128, %s3900, %s3885
        $region120: #{tpu_custom_call.1} parent=115 // pred_fallthru
          _
      $region116: #{tpu_custom_call.1} parent=5 // pred_fallthru
        _
      %p3903 = scmp.le.s32.totalorder 2, %s33
      // Predicated region
      $region121: #{tpu_custom_call.1} parent=5 // pred_check
        %p3904 = pneg %p3903
      $region122: #{tpu_custom_call.1} parent=5 // pred_check_branch
        %3906 = sbr.rel (%p3904) target = $region124
      $region123: #{tpu_custom_call.1} parent=5 // pred_region
        %s3907 = ssub.s32 %s33, 2
        // Predicated region
        $region125: #{tpu_custom_call.1} parent=123 // pred_check
          %p3908 = pneg %p586
        $region126: #{tpu_custom_call.1} parent=123 // pred_check_branch
          %3910 = sbr.rel (%p3908) target = $region128
        $region127: #{tpu_custom_call.1} parent=123 // pred_region
          %s3911 = sand.u32 %s571, 1
          %s3912 = scalar_lea.sflag [#allocation3], %s3911
          %s3913 = sand.u32 %s571, 1
          %s3914 = smul.addr %s3913, 8
          %s3915 = scalar_lea.vmem [#allocation2], %s3914
          %3917 = dma.done %s3912, 128
        $region128: #{tpu_custom_call.1} parent=123 // pred_fallthru
          _
      $region124: #{tpu_custom_call.1} parent=5 // pred_fallthru
        _
    $region6: #{tpu_custom_call.1} parent=1 // loop_footer
      %s37 = sadd.s32 1, %s33
    $region7: #{tpu_custom_call.1} parent=1 // loop_footer_branch
      %32 = sbr.rel target = $region3
    $region8: #{tpu_custom_call.1} parent=1 // loop_exit
      _
    %3918 = vsyncpa [#allocation3], 1
    %s3919 = scalar_lea.sflag [#allocation3], 1
    %3920 = vsyncpa %s3919, 1

</llo_original>
